<compile_context>
chip_gen: v5e
topology: v5e:2x2
jax: 0.10.0
libtpu: 0.0.40
codegen_flags: <defaults>
</compile_context>

<pallas_src>
import jax
import jax.numpy as jnp
from jax.experimental import pallas as pl
from jax.experimental.pallas import tpu as pltpu

_NEG_BIG = -1.0e30  # padded-class logit bias (drives exp() to exactly 0 in f32)


# --------------------------------------------------------------------------
# Kernels
# --------------------------------------------------------------------------
def _xw_kernel(x_ref, w_ref, out_ref):
    """out_tile = x_tile @ W   (bf16 in, f32 accumulate, bf16 out)."""
    out_ref[...] = jnp.dot(
        x_ref[...], w_ref[...], preferred_element_type=jnp.float32
    ).astype(out_ref.dtype)


def _agg_next_kernel(adj_ref, xw_ref, b_ref, w_next_ref, out_ref):
    """h_tile = relu(adj_tile @ xw + b);  out_tile = h_tile @ W_next (bf16)."""
    agg = jnp.dot(adj_ref[...], xw_ref[...], preferred_element_type=jnp.float32)
    h = jnp.maximum(agg + b_ref[...], 0.0)                       # f32 epilogue
    out_ref[...] = jnp.dot(
        h.astype(w_next_ref.dtype), w_next_ref[...],
        preferred_element_type=jnp.float32,
    ).astype(out_ref.dtype)


def _agg_fc_logsoftmax_kernel(adj_ref, hw_ref, b_ref, wfc_ref, bfc_ref, out_ref):
    """h2 = relu(adj_tile @ (h1@W2) + b2); logits = h2@Wfc + bfc; log_softmax."""
    agg = jnp.dot(adj_ref[...], hw_ref[...], preferred_element_type=jnp.float32)
    h2 = jnp.maximum(agg + b_ref[...], 0.0)
    logits = jnp.dot(
        h2.astype(wfc_ref.dtype), wfc_ref[...],
        preferred_element_type=jnp.float32,
    ) + bfc_ref[...]                                             # [tile, Cp] f32
    m = jnp.max(logits, axis=-1, keepdims=True)
    z = logits - m
    lse = jnp.log(jnp.sum(jnp.exp(z), axis=-1, keepdims=True))
    out_ref[...] = z - lse


# --------------------------------------------------------------------------
# Wrapper
# --------------------------------------------------------------------------
def _round_up(x, m):
    return ((x + m - 1) // m) * m


def supervised_graphsage(feature, adj1, adj2, params):
    """Fused GraphSAGE forward via three row-tiled Pallas calls."""
    n, f = feature.shape
    h = params["w1"].shape[1]
    c = params["wfc"].shape[1]
    hp = max(128, _round_up(h, 128))   # lane-dense hidden width
    cp = max(128, _round_up(c, 128))   # lane-dense class width

    # ---- row tile & node-count padding (256 fills the v6e/v7x MXU) ----
    tile = 256 if n >= 256 else 128
    np_ = _round_up(n, tile)
    grid = (np_ // tile,)

    # ---- lane-dense padding of the narrow dims; bf16 for all MXU operands ----
    w1 = jnp.pad(params["w1"], ((0, 0), (0, hp - h))).astype(jnp.bfloat16)
    b1 = jnp.pad(params["b1"], ((0, 0), (0, hp - h))).astype(jnp.float32)
    w2 = jnp.pad(params["w2"], ((0, hp - h), (0, hp - h))).astype(jnp.bfloat16)
    b2 = jnp.pad(params["b2"], ((0, 0), (0, hp - h))).astype(jnp.float32)
    wfc = jnp.pad(params["wfc"], ((0, hp - h), (0, cp - c))).astype(jnp.bfloat16)
    bfc = jnp.pad(params["bfc"], ((0, 0), (0, cp - c)),
                  constant_values=_NEG_BIG).astype(jnp.float32)

    feat_b = jnp.pad(feature, ((0, np_ - n), (0, 0))).astype(jnp.bfloat16)
    adj1_b = jnp.pad(adj1, ((0, np_ - n), (0, np_ - n))).astype(jnp.bfloat16)
    adj2_b = jnp.pad(adj2, ((0, np_ - n), (0, np_ - n))).astype(jnp.bfloat16)

    cparams = pltpu.CompilerParams(
        dimension_semantics=("parallel",),
        vmem_limit_bytes=32 * 1024 * 1024,
    )

    # ---- call 1: xw1 = x @ W1  (reassociated layer-1 projection) ----
    xw1 = pl.pallas_call(
        _xw_kernel,
        out_shape=jax.ShapeDtypeStruct((np_, hp), jnp.bfloat16),
        grid=grid,
        in_specs=[
            pl.BlockSpec((tile, f), lambda i: (i, 0)),    # feature row slab
            pl.BlockSpec((f, hp), lambda i: (0, 0)),      # W1 (resident)
        ],
        out_specs=pl.BlockSpec((tile, hp), lambda i: (i, 0)),
        compiler_params=cparams,
        cost_estimate=pl.CostEstimate(
            flops=2 * np_ * f * hp,
            transcendentals=0,
            bytes_accessed=2 * np_ * f + 2 * f * hp + 2 * np_ * hp,
        ),
    )(feat_b, w1)

    # ---- call 2: h1 = relu(adj1 @ xw1 + b1);  out = h1 @ W2 ----
    h1w2 = pl.pallas_call(
        _agg_next_kernel,
        out_shape=jax.ShapeDtypeStruct((np_, hp), jnp.bfloat16),
        grid=grid,
        in_specs=[
            pl.BlockSpec((tile, np_), lambda i: (i, 0)),  # adj1 row slab (streamed)
            pl.BlockSpec((np_, hp), lambda i: (0, 0)),    # xw1 (resident)
            pl.BlockSpec((1, hp), lambda i: (0, 0)),      # b1
            pl.BlockSpec((hp, hp), lambda i: (0, 0)),     # W2 (resident)
        ],
        out_specs=pl.BlockSpec((tile, hp), lambda i: (i, 0)),
        compiler_params=cparams,
        cost_estimate=pl.CostEstimate(
            flops=2 * np_ * np_ * hp + 2 * np_ * hp * hp,
            transcendentals=0,
            bytes_accessed=2 * np_ * np_ + 2 * np_ * hp + 2 * hp * hp + 2 * np_ * hp,
        ),
    )(adj1_b, xw1, b1, w2)

    # ---- call 3: h2 = relu(adj2 @ h1w2 + b2); logits + log_softmax ----
    out_pad = pl.pallas_call(
        _agg_fc_logsoftmax_kernel,
        out_shape=jax.ShapeDtypeStruct((np_, cp), jnp.float32),
        grid=grid,
        in_specs=[
            pl.BlockSpec((tile, np_), lambda i: (i, 0)),  # adj2 row slab (streamed)
            pl.BlockSpec((np_, hp), lambda i: (0, 0)),    # h1 @ W2 (resident)
            pl.BlockSpec((1, hp), lambda i: (0, 0)),      # b2
            pl.BlockSpec((hp, cp), lambda i: (0, 0)),     # Wfc (resident)
            pl.BlockSpec((1, cp), lambda i: (0, 0)),      # bfc (padded with -1e30)
        ],
        out_specs=pl.BlockSpec((tile, cp), lambda i: (i, 0)),
        compiler_params=cparams,
        cost_estimate=pl.CostEstimate(
            flops=2 * np_ * np_ * hp + 2 * np_ * hp * cp + 6 * np_ * cp,
            transcendentals=np_ * cp,
            bytes_accessed=2 * np_ * np_ + 2 * np_ * hp + 2 * hp * cp + 4 * np_ * cp,
        ),
    )(adj2_b, h1w2, b2, wfc, bfc)

    # Slice the lane-dense log-softmax slab back to the real node/class counts.
    return out_pad[:n, :c]


def init_params(key, n_feature, n_hidden, n_class):
    ks = jax.random.split(key, 6)
    scale = 0.1
    return {
        # weights stored [in, out] (transposed relative to torch.nn.Linear)
        "w1": scale * jax.random.normal(ks[0], (n_feature, n_hidden), jnp.float32),
        "b1": scale * jax.random.normal(ks[1], (1, n_hidden), jnp.float32),
        "w2": scale * jax.random.normal(ks[2], (n_hidden, n_hidden), jnp.float32),
        "b2": scale * jax.random.normal(ks[3], (1, n_hidden), jnp.float32),
        "wfc": scale * jax.random.normal(ks[4], (n_hidden, n_class), jnp.float32),
        "bfc": scale * jax.random.normal(ks[5], (1, n_class), jnp.float32),
    }


def reference_forward(feature, adj1, adj2, p):
    """Pure-JAX f32 reference with the original module's semantics."""
    h1 = jax.nn.relu((adj1 @ feature) @ p["w1"] + p["b1"])
    h2 = jax.nn.relu((adj2 @ h1) @ p["w2"] + p["b2"])
    logits = h2 @ p["wfc"] + p["bfc"]
    return jax.nn.log_softmax(logits, axis=1)


if __name__ == "__main__":
    key = jax.random.PRNGKey(0)
    k_feat, k_adj1, k_adj2, k_params = jax.random.split(key, 4)

    N = 512          # number of nodes (2 grid steps of 256 rows)
    n_feature = 64
    n_hidden = 32
    n_class = 8

    feature = jax.random.normal(k_feat, (N, n_feature), jnp.float32)

    # Row-normalized dense adjacency matrices (with self-loops).
    def make_adj(k):
        raw = (jax.random.uniform(k, (N, N)) < 0.05).astype(jnp.float32)
        raw = raw + jnp.eye(N, dtype=jnp.float32)
        return raw / jnp.sum(raw, axis=1, keepdims=True)

    adj1 = make_adj(k_adj1)
    adj2 = make_adj(k_adj2)

    params = init_params(k_params, n_feature, n_hidden, n_class)

    fwd = jax.jit(supervised_graphsage)
    out = fwd(feature, adj1, adj2, params)
    out = jax.block_until_ready(out)

    # Sanity checks.
    assert out.shape == (N, n_class)
    row_sums = jnp.sum(jnp.exp(out), axis=1)
    assert bool(jnp.all(jnp.abs(row_sums - 1.0) < 1e-3)), "rows not normalized"

    ref = reference_forward(feature, adj1, adj2, params)
    max_err = float(jnp.max(jnp.abs(out - ref)))
    assert max_err < 0.2, f"mismatch vs f32 reference: {max_err}"

    print("KERNEL_OK")
</pallas_src>

<mosaic_0001>
module attributes {stable_mosaic.version = 11 : i64} {
  func.func @_xw_kernel(%arg0: i32, %arg1: memref<256x64xbf16, #tpu.memory_space<vmem>>, %arg2: memref<64x128xbf16, #tpu.memory_space<vmem>>, %arg3: memref<256x128xbf16, #tpu.memory_space<vmem>>) attributes {dimension_semantics = [#tpu.dimension_semantics<parallel>], iteration_bounds = array<i64: 2>, scalar_prefetch = 0 : i64, scratch_operands = 0 : i64, tpu.core_type = #tpu.core_type<tc>, window_params = [{transform_indices = @transform_0, window_bounds = array<i64: 256, 64>}, {pipeline_mode = #tpu.pipeline_mode<synchronous>, transform_indices = @transform_1, window_bounds = array<i64: 64, 128>}, {transform_indices = @transform_2, window_bounds = array<i64: 256, 128>}]} {
    %c0 = arith.constant 0 : index
    %c0_0 = arith.constant 0 : index
    %0 = vector.load %arg1[%c0, %c0_0] : memref<256x64xbf16, #tpu.memory_space<vmem>>, vector<256x64xbf16>
    %c0_1 = arith.constant 0 : index
    %c0_2 = arith.constant 0 : index
    %1 = vector.load %arg2[%c0_1, %c0_2] : memref<64x128xbf16, #tpu.memory_space<vmem>>, vector<64x128xbf16>
    %cst = arith.constant dense<0.000000e+00> : vector<256x128xf32>
    %2 = tpu.matmul %0, %1, %cst {dimension_numbers = #tpu.dot_dimension_numbers<[1], [0], [0], [1], [0, 0, 1, 1], [], []>} : vector<256x64xbf16>, vector<64x128xbf16>, vector<256x128xf32> -> vector<256x128xf32>
    %3 = arith.truncf %2 : vector<256x128xf32> to vector<256x128xbf16>
    %c0_3 = arith.constant 0 : index
    %c0_4 = arith.constant 0 : index
    %4 = vector.load %arg3[%c0_3, %c0_4] : memref<256x128xbf16, #tpu.memory_space<vmem>>, vector<256x128xbf16>
    tpu.vector_store %arg3[%c0_3, %c0_4], %3 {strides = array<i32>} : memref<256x128xbf16, #tpu.memory_space<vmem>>, vector<256x128xbf16>,
    return
  }
  func.func @transform_0(%arg0: i32) -> (i32, i32) {
    %c0_i32 = arith.constant 0 : i32
    %c0_i32_0 = arith.constant 0 : i32
    return %arg0, %c0_i32 : i32, i32
  }
  func.func @transform_1(%arg0: i32) -> (i32, i32) {
    %c0_i32 = arith.constant 0 : i32
    %c0_i32_0 = arith.constant 0 : i32
    %c0_i32_1 = arith.constant 0 : i32
    return %c0_i32, %c0_i32_0 : i32, i32
  }
  func.func @transform_2(%arg0: i32) -> (i32, i32) {
    %c0_i32 = arith.constant 0 : i32
    %c0_i32_0 = arith.constant 0 : i32
    return %arg0, %c0_i32 : i32, i32
  }
}

module attributes {stable_mosaic.version = 11 : i64} {
  func.func @_agg_next_kernel(%arg0: i32, %arg1: memref<256x512xbf16, #tpu.memory_space<vmem>>, %arg2: memref<512x128xbf16, #tpu.memory_space<vmem>>, %arg3: memref<1x128xf32, #tpu.memory_space<vmem>>, %arg4: memref<128x128xbf16, #tpu.memory_space<vmem>>, %arg5: memref<256x128xbf16, #tpu.memory_space<vmem>>) attributes {dimension_semantics = [#tpu.dimension_semantics<parallel>], iteration_bounds = array<i64: 2>, scalar_prefetch = 0 : i64, scratch_operands = 0 : i64, tpu.core_type = #tpu.core_type<tc>, window_params = [{transform_indices = @transform_0, window_bounds = array<i64: 256, 512>}, {pipeline_mode = #tpu.pipeline_mode<synchronous>, transform_indices = @transform_1, window_bounds = array<i64: 512, 128>}, {pipeline_mode = #tpu.pipeline_mode<synchronous>, transform_indices = @transform_2, window_bounds = array<i64: 1, 128>}, {pipeline_mode = #tpu.pipeline_mode<synchronous>, transform_indices = @transform_3, window_bounds = array<i64: 128, 128>}, {transform_indices = @transform_4, window_bounds = array<i64: 256, 128>}]} {
    %c0 = arith.constant 0 : index
    %c0_0 = arith.constant 0 : index
    %0 = vector.load %arg1[%c0, %c0_0] : memref<256x512xbf16, #tpu.memory_space<vmem>>, vector<256x512xbf16>
    %c0_1 = arith.constant 0 : index
    %c0_2 = arith.constant 0 : index
    %1 = vector.load %arg2[%c0_1, %c0_2] : memref<512x128xbf16, #tpu.memory_space<vmem>>, vector<512x128xbf16>
    %cst = arith.constant dense<0.000000e+00> : vector<256x128xf32>
    %2 = tpu.matmul %0, %1, %cst {dimension_numbers = #tpu.dot_dimension_numbers<[1], [0], [0], [1], [0, 0, 1, 1], [], []>} : vector<256x512xbf16>, vector<512x128xbf16>, vector<256x128xf32> -> vector<256x128xf32>
    %c0_3 = arith.constant 0 : index
    %c0_4 = arith.constant 0 : index
    %3 = vector.load %arg3[%c0_3, %c0_4] : memref<1x128xf32, #tpu.memory_space<vmem>>, vector<1x128xf32>
    %4 = vector.broadcast %3 : vector<1x128xf32> to vector<256x128xf32>
    %5 = arith.addf %2, %4 : vector<256x128xf32>
    %cst_5 = arith.constant 0.000000e+00 : f32
    %6 = vector.broadcast %cst_5 : f32 to vector<256x128xf32>
    %7 = arith.maximumf %5, %6 : vector<256x128xf32>
    %8 = arith.truncf %7 : vector<256x128xf32> to vector<256x128xbf16>
    %c0_6 = arith.constant 0 : index
    %c0_7 = arith.constant 0 : index
    %9 = vector.load %arg4[%c0_6, %c0_7] : memref<128x128xbf16, #tpu.memory_space<vmem>>, vector<128x128xbf16>
    %cst_8 = arith.constant dense<0.000000e+00> : vector<256x128xf32>
    %10 = tpu.matmul %8, %9, %cst_8 {dimension_numbers = #tpu.dot_dimension_numbers<[1], [0], [0], [1], [0, 0, 1, 1], [], []>} : vector<256x128xbf16>, vector<128x128xbf16>, vector<256x128xf32> -> vector<256x128xf32>
    %11 = arith.truncf %10 : vector<256x128xf32> to vector<256x128xbf16>
    %c0_9 = arith.constant 0 : index
    %c0_10 = arith.constant 0 : index
    %12 = vector.load %arg5[%c0_9, %c0_10] : memref<256x128xbf16, #tpu.memory_space<vmem>>, vector<256x128xbf16>
    tpu.vector_store %arg5[%c0_9, %c0_10], %11 {strides = array<i32>} : memref<256x128xbf16, #tpu.memory_space<vmem>>, vector<256x128xbf16>,
    return
  }
  func.func @transform_0(%arg0: i32) -> (i32, i32) {
    %c0_i32 = arith.constant 0 : i32
    %c0_i32_0 = arith.constant 0 : i32
    return %arg0, %c0_i32 : i32, i32
  }
  func.func @transform_1(%arg0: i32) -> (i32, i32) {
    %c0_i32 = arith.constant 0 : i32
    %c0_i32_0 = arith.constant 0 : i32
    %c0_i32_1 = arith.constant 0 : i32
    return %c0_i32, %c0_i32_0 : i32, i32
  }
  func.func @transform_2(%arg0: i32) -> (i32, i32) {
    %c0_i32 = arith.constant 0 : i32
    %c0_i32_0 = arith.constant 0 : i32
    %c0_i32_1 = arith.constant 0 : i32
    return %c0_i32, %c0_i32_0 : i32, i32
  }
  func.func @transform_3(%arg0: i32) -> (i32, i32) {
    %c0_i32 = arith.constant 0 : i32
    %c0_i32_0 = arith.constant 0 : i32
    %c0_i32_1 = arith.constant 0 : i32
    return %c0_i32, %c0_i32_0 : i32, i32
  }
  func.func @transform_4(%arg0: i32) -> (i32, i32) {
    %c0_i32 = arith.constant 0 : i32
    %c0_i32_0 = arith.constant 0 : i32
    return %arg0, %c0_i32 : i32, i32
  }
}

module attributes {stable_mosaic.version = 11 : i64} {
  func.func @_agg_fc_logsoftmax_kernel(%arg0: i32, %arg1: memref<256x512xbf16, #tpu.memory_space<vmem>>, %arg2: memref<512x128xbf16, #tpu.memory_space<vmem>>, %arg3: memref<1x128xf32, #tpu.memory_space<vmem>>, %arg4: memref<128x128xbf16, #tpu.memory_space<vmem>>, %arg5: memref<1x128xf32, #tpu.memory_space<vmem>>, %arg6: memref<256x128xf32, #tpu.memory_space<vmem>>) attributes {dimension_semantics = [#tpu.dimension_semantics<parallel>], iteration_bounds = array<i64: 2>, scalar_prefetch = 0 : i64, scratch_operands = 0 : i64, tpu.core_type = #tpu.core_type<tc>, window_params = [{transform_indices = @transform_0, window_bounds = array<i64: 256, 512>}, {pipeline_mode = #tpu.pipeline_mode<synchronous>, transform_indices = @transform_1, window_bounds = array<i64: 512, 128>}, {pipeline_mode = #tpu.pipeline_mode<synchronous>, transform_indices = @transform_2, window_bounds = array<i64: 1, 128>}, {pipeline_mode = #tpu.pipeline_mode<synchronous>, transform_indices = @transform_3, window_bounds = array<i64: 128, 128>}, {pipeline_mode = #tpu.pipeline_mode<synchronous>, transform_indices = @transform_4, window_bounds = array<i64: 1, 128>}, {transform_indices = @transform_5, window_bounds = array<i64: 256, 128>}]} {
    %c0 = arith.constant 0 : index
    %c0_0 = arith.constant 0 : index
    %0 = vector.load %arg1[%c0, %c0_0] : memref<256x512xbf16, #tpu.memory_space<vmem>>, vector<256x512xbf16>
    %c0_1 = arith.constant 0 : index
    %c0_2 = arith.constant 0 : index
    %1 = vector.load %arg2[%c0_1, %c0_2] : memref<512x128xbf16, #tpu.memory_space<vmem>>, vector<512x128xbf16>
    %cst = arith.constant dense<0.000000e+00> : vector<256x128xf32>
    %2 = tpu.matmul %0, %1, %cst {dimension_numbers = #tpu.dot_dimension_numbers<[1], [0], [0], [1], [0, 0, 1, 1], [], []>} : vector<256x512xbf16>, vector<512x128xbf16>, vector<256x128xf32> -> vector<256x128xf32>
    %c0_3 = arith.constant 0 : index
    %c0_4 = arith.constant 0 : index
    %3 = vector.load %arg3[%c0_3, %c0_4] : memref<1x128xf32, #tpu.memory_space<vmem>>, vector<1x128xf32>
    %4 = vector.broadcast %3 : vector<1x128xf32> to vector<256x128xf32>
    %5 = arith.addf %2, %4 : vector<256x128xf32>
    %cst_5 = arith.constant 0.000000e+00 : f32
    %6 = vector.broadcast %cst_5 : f32 to vector<256x128xf32>
    %7 = arith.maximumf %5, %6 : vector<256x128xf32>
    %8 = arith.truncf %7 : vector<256x128xf32> to vector<256x128xbf16>
    %c0_6 = arith.constant 0 : index
    %c0_7 = arith.constant 0 : index
    %9 = vector.load %arg4[%c0_6, %c0_7] : memref<128x128xbf16, #tpu.memory_space<vmem>>, vector<128x128xbf16>
    %cst_8 = arith.constant dense<0.000000e+00> : vector<256x128xf32>
    %10 = tpu.matmul %8, %9, %cst_8 {dimension_numbers = #tpu.dot_dimension_numbers<[1], [0], [0], [1], [0, 0, 1, 1], [], []>} : vector<256x128xbf16>, vector<128x128xbf16>, vector<256x128xf32> -> vector<256x128xf32>
    %c0_9 = arith.constant 0 : index
    %c0_10 = arith.constant 0 : index
    %11 = vector.load %arg5[%c0_9, %c0_10] : memref<1x128xf32, #tpu.memory_space<vmem>>, vector<1x128xf32>
    %12 = vector.broadcast %11 : vector<1x128xf32> to vector<256x128xf32>
    %13 = arith.addf %10, %12 : vector<256x128xf32>
    %cst_11 = arith.constant dense<0xFF800000> : vector<256xf32>
    %14 = vector.multi_reduction <maximumf>, %13, %cst_11 [1] : vector<256x128xf32> to vector<256xf32>
    %15 = vector.shape_cast %14 : vector<256xf32> to vector<256x1xf32>
    %16 = vector.broadcast %15 : vector<256x1xf32> to vector<256x128xf32>
    %17 = arith.subf %13, %16 : vector<256x128xf32>
    %18 = math.exp %17 : vector<256x128xf32>
    %cst_12 = arith.constant dense<0.000000e+00> : vector<256xf32>
    %19 = vector.multi_reduction <add>, %18, %cst_12 [1] : vector<256x128xf32> to vector<256xf32>
    %20 = vector.shape_cast %19 : vector<256xf32> to vector<256x1xf32>
    %21 = math.log %20 : vector<256x1xf32>
    %22 = vector.broadcast %21 : vector<256x1xf32> to vector<256x128xf32>
    %23 = arith.subf %17, %22 : vector<256x128xf32>
    %c0_13 = arith.constant 0 : index
    %c0_14 = arith.constant 0 : index
    %24 = vector.load %arg6[%c0_13, %c0_14] : memref<256x128xf32, #tpu.memory_space<vmem>>, vector<256x128xf32>
    tpu.vector_store %arg6[%c0_13, %c0_14], %23 {strides = array<i32>} : memref<256x128xf32, #tpu.memory_space<vmem>>, vector<256x128xf32>,
    return
  }
  func.func @transform_0(%arg0: i32) -> (i32, i32) {
    %c0_i32 = arith.constant 0 : i32
    %c0_i32_0 = arith.constant 0 : i32
    return %arg0, %c0_i32 : i32, i32
  }
  func.func @transform_1(%arg0: i32) -> (i32, i32) {
    %c0_i32 = arith.constant 0 : i32
    %c0_i32_0 = arith.constant 0 : i32
    %c0_i32_1 = arith.constant 0 : i32
    return %c0_i32, %c0_i32_0 : i32, i32
  }
  func.func @transform_2(%arg0: i32) -> (i32, i32) {
    %c0_i32 = arith.constant 0 : i32
    %c0_i32_0 = arith.constant 0 : i32
    %c0_i32_1 = arith.constant 0 : i32
    return %c0_i32, %c0_i32_0 : i32, i32
  }
  func.func @transform_3(%arg0: i32) -> (i32, i32) {
    %c0_i32 = arith.constant 0 : i32
    %c0_i32_0 = arith.constant 0 : i32
    %c0_i32_1 = arith.constant 0 : i32
    return %c0_i32, %c0_i32_0 : i32, i32
  }
  func.func @transform_4(%arg0: i32) -> (i32, i32) {
    %c0_i32 = arith.constant 0 : i32
    %c0_i32_0 = arith.constant 0 : i32
    %c0_i32_1 = arith.constant 0 : i32
    return %c0_i32, %c0_i32_0 : i32, i32
  }
  func.func @transform_5(%arg0: i32) -> (i32, i32) {
    %c0_i32 = arith.constant 0 : i32
    %c0_i32_0 = arith.constant 0 : i32
    return %arg0, %c0_i32 : i32, i32
  }
}

</mosaic_0001>

<llo_original>
// kernel: supervised_graphsage.3
$region0: #{supervised_graphsage.3}
  #allocation0 [shape = 'u32[]', space=smem, size = 0x4, offset = 0x4, fixed_abs, tag = 'smem constant byte address 0x4 - core index']
  #allocation1 [shape = 'u32[72,128]{1,0:T(1,128)}', space=vmem, size = 0x9000, scoped, tag = 'internal scratch']
  %s0 = inlined_call_operand.vmem [shape: bf16[512,64], index: 0, kind: input, shape index: {}]
  %s1 = inlined_call_operand.vmem [shape: bf16[64,128], index: 1, kind: input, shape index: {}]
  %s2 = inlined_call_operand.vmem [shape: bf16[512,128], index: 2, kind: output, shape index: {}]
  %s3 = sld [smem:[#allocation0]]
  $region41: #{supervised_graphsage.3} parent=0
    _
  %s5 = ssub.s32 1, %s3
  %s6 = scalar_select 0, %s5, %s3
  loop: start=0, step=1, limit=4
  $region2: #{supervised_graphsage.3} parent=0 // loop_pre_header
    _
  $region3: #{supervised_graphsage.3} parent=0 // loop_header
    %s8 = sphi 0, %s12
    %p9 = scmp.ge.s32.totalorder %s8, 4
    %s18 = sphi 0, %s20
    %s21 = sphi 0, %s18
    %s22 = sphi 0, %s21
    %s38 = sphi 0, %s22
    %s42 = sphi 0, %s42
    %s44 = sphi 0, %s42
    %s45 = sphi 0, %s44
    %s59 = sphi 0, %s45
    %s65 = sphi 0, %s67
    %s68 = sphi 0, %s65
    %s69 = sphi 0, %s68
    %s85 = sphi 0, %s69
  $region4: #{supervised_graphsage.3} parent=0 // loop_header_branch
    %11 = sbr.rel (%p9) target = $region8
  $region5: #{supervised_graphsage.3} parent=0 // loop_body
    %s13 = ssub.s32 %s8, 1
    %s14 = ssub.s32 %s8, 2
    %s15 = sadd.s32 %s8, 1
    %s16 = ssub.s32 %s8, %s15
    %p17 = scmp.eq.s32.totalorder %s16, 0
    %s19 = sadd.s32 %s18, 1
    %s20 = scalar_select %p17, %s18, %s19
    %p23 = pneg %p17
    %p24 = scmp.eq.s32.totalorder %s8, 1
    %p25 = por %p23, %p24
    %p26 = scmp.ne.s32.totalorder %s18, %s21
    %p27 = scmp.eq.s32.totalorder %s8, 0
    %p28 = por %p26, %p27
    %p29 = scmp.ne.s32.totalorder %s18, %s21
    %p30 = scmp.eq.s32.totalorder %s13, 1
    %p31 = por %p29, %p30
    %p32 = scmp.ne.s32.totalorder %s21, %s22
    %p33 = scmp.eq.s32.totalorder %s13, 0
    %p34 = por %p32, %p33
    %p35 = scmp.ne.s32.totalorder %s21, %s22
    %p36 = scmp.eq.s32.totalorder %s14, 1
    %p37 = por %p35, %p36
    %p39 = scmp.ne.s32.totalorder %s22, %s38
    %p40 = scmp.eq.s32.totalorder %s14, 0
    %p41 = por %p39, %p40
    %s43 = sadd.s32 %s42, 1
    %p46 = scmp.eq.s32.totalorder %s8, 1
    %p47 = scmp.ne.s32.totalorder %s42, %s44
    %p48 = scmp.eq.s32.totalorder %s8, 0
    %p49 = por %p47, %p48
    %p50 = scmp.ne.s32.totalorder %s42, %s44
    %p51 = scmp.eq.s32.totalorder %s13, 1
    %p52 = por %p50, %p51
    %p53 = scmp.ne.s32.totalorder %s44, %s45
    %p54 = scmp.eq.s32.totalorder %s13, 0
    %p55 = por %p53, %p54
    %p56 = scmp.ne.s32.totalorder %s44, %s45
    %p57 = scmp.eq.s32.totalorder %s14, 1
    %p58 = por %p56, %p57
    %p60 = scmp.ne.s32.totalorder %s45, %s59
    %p61 = scmp.eq.s32.totalorder %s14, 0
    %p62 = por %p60, %p61
    %s63 = ssub.s32 %s8, %s15
    %p64 = scmp.eq.s32.totalorder %s63, 0
    %s66 = sadd.s32 %s65, 1
    %s67 = scalar_select %p64, %s65, %s66
    %p70 = pneg %p64
    %p71 = scmp.eq.s32.totalorder %s8, 1
    %p72 = por %p70, %p71
    %p73 = scmp.ne.s32.totalorder %s65, %s68
    %p74 = scmp.eq.s32.totalorder %s8, 0
    %p75 = por %p73, %p74
    %p76 = scmp.ne.s32.totalorder %s65, %s68
    %p77 = scmp.eq.s32.totalorder %s13, 1
    %p78 = por %p76, %p77
    %p79 = scmp.ne.s32.totalorder %s68, %s69
    %p80 = scmp.eq.s32.totalorder %s13, 0
    %p81 = por %p79, %p80
    %p82 = scmp.ne.s32.totalorder %s68, %s69
    %p83 = scmp.eq.s32.totalorder %s14, 1
    %p84 = por %p82, %p83
    %p86 = scmp.ne.s32.totalorder %s69, %s85
    %p87 = scmp.eq.s32.totalorder %s14, 0
    %p88 = por %p86, %p87
    %p89 = scmp.le.s32.totalorder 1, %s8
    %p90 = scmp.lt.s32.totalorder %s8, 3
    %p91 = pnand %p89, %p90
    %p92 = pneg %p91
    // Predicated region
    $region9: #{supervised_graphsage.3} parent=5 // pred_check
      _
    $region10: #{supervised_graphsage.3} parent=5 // pred_check_branch
      %94 = sbr.rel (%p91) target = $region12
    $region11: #{supervised_graphsage.3} parent=5 // pred_region
      %s95 = ssub.s32 %s8, 1
      // Predicated region
      $region13: #{supervised_graphsage.3} parent=11 // pred_check
        %p96 = pneg %p55
      $region14: #{supervised_graphsage.3} parent=11 // pred_check_branch
        %98 = sbr.rel (%p96) target = $region16
      $region15: #{supervised_graphsage.3} parent=11 // pred_region
        _
      $region16: #{supervised_graphsage.3} parent=11 // pred_fallthru
        _
    $region12: #{supervised_graphsage.3} parent=5 // pred_fallthru
      _
    %p99 = scmp.lt.s32.totalorder %s8, 2
    // Predicated region
    $region17: #{supervised_graphsage.3} parent=5 // pred_check
      %p100 = pneg %p99
    $region18: #{supervised_graphsage.3} parent=5 // pred_check_branch
      %102 = sbr.rel (%p100) target = $region20
    $region19: #{supervised_graphsage.3} parent=5 // pred_region
      // Predicated region
      $region21: #{supervised_graphsage.3} parent=19 // pred_check
        %p103 = pneg %p28
      $region22: #{supervised_graphsage.3} parent=19 // pred_check_branch
        %105 = sbr.rel (%p103) target = $region24
      $region23: #{supervised_graphsage.3} parent=19 // pred_region
        %s106 = smul.u32 32, %s8
        %p107 = scmp.lt.s32.totalorder %s106, 63
        %s108 = scalar_select %p107, %s106, 63
        %s109 = smul.addr %s108, 4
        %s110 = scalar_lea.vmem %s0, %s109
        %s111 = smul.u32 32, %s8
      $region24: #{supervised_graphsage.3} parent=19 // pred_fallthru
        _
    $region20: #{supervised_graphsage.3} parent=5 // pred_fallthru
      _
    %p112 = scmp.le.s32.totalorder 1, %s8
    %p113 = scmp.lt.s32.totalorder %s8, 3
    %p114 = pnand %p112, %p113
    %p115 = pneg %p114
    // Predicated region
    $region25: #{supervised_graphsage.3} parent=5 // pred_check
      _
    $region26: #{supervised_graphsage.3} parent=5 // pred_check_branch
      %117 = sbr.rel (%p114) target = $region28
    $region27: #{supervised_graphsage.3} parent=5 // pred_region
      %s118 = ssub.s32 %s8, 1
      %s119 = smul.u32 32, %s13
      %p120 = scmp.lt.s32.totalorder %s119, 63
      %s121 = scalar_select %p120, %s119, 63
      %s122 = smul.addr %s121, 4
      %s123 = scalar_lea.vmem %s0, %s122
      %p124 = pneg %p34
      %p125 = pneg %p31
      %p126 = pneg %p55
      %p127 = pneg %p52
      %p128 = pneg %p81
      %p129 = pneg %p78
      %s130 = smul.u32 32, %s13
      %p131 = scmp.lt.s32.totalorder %s130, 63
      %s132 = scalar_select %p131, %s130, 63
      %s133 = smul.addr %s132, 4
      %s134 = scalar_lea.vmem %s2, %s133
      %s135 = smul.u32 32, %s13
      %p136 = scmp.lt.s32.totalorder %s135, 63
      %s137 = scalar_select %p136, %s135, 63
      %s138 = smul.addr %s137, 4
      %s139 = scalar_lea.vmem %s0, %s138
      %s140 = smul.u32 32, %s13
      %s141 = smul.u32 32, %s13
      %p142 = scmp.lt.s32.totalorder %s141, 63
      %s143 = scalar_select %p142, %s141, 63
      %s144 = smul.addr %s143, 4
      %s145 = scalar_lea.vmem %s2, %s144
      %s146 = smul.u32 32, %s13
      %v148 = vld [vmem:[%s139] sm:$0xf]
      %v149 = vld [vmem:[%s139 + $0x4] sm:$0xf]
      %v150 = vld [vmem:[%s139 + $0x8] sm:$0xf]
      %v151 = vld [vmem:[%s139 + $0xc] sm:$0xf]
      %v152 = vld [vmem:[%s139 + $0x10] sm:$0xf]
      %v153 = vld [vmem:[%s139 + $0x14] sm:$0xf]
      %v154 = vld [vmem:[%s139 + $0x18] sm:$0xf]
      %v155 = vld [vmem:[%s139 + $0x1c] sm:$0xf]
      %v156 = vld [vmem:[%s139 + $0x20] sm:$0xf]
      %v157 = vld [vmem:[%s139 + $0x24] sm:$0xf]
      %v158 = vld [vmem:[%s139 + $0x28] sm:$0xf]
      %v159 = vld [vmem:[%s139 + $0x2c] sm:$0xf]
      %v160 = vld [vmem:[%s139 + $0x30] sm:$0xf]
      %v161 = vld [vmem:[%s139 + $0x34] sm:$0xf]
      %v162 = vld [vmem:[%s139 + $0x38] sm:$0xf]
      %v163 = vld [vmem:[%s139 + $0x3c] sm:$0xf]
      %v164 = vld [vmem:[%s139 + $0x40] sm:$0xf]
      %v165 = vld [vmem:[%s139 + $0x44] sm:$0xf]
      %v166 = vld [vmem:[%s139 + $0x48] sm:$0xf]
      %v167 = vld [vmem:[%s139 + $0x4c] sm:$0xf]
      %v168 = vld [vmem:[%s139 + $0x50] sm:$0xf]
      %v169 = vld [vmem:[%s139 + $0x54] sm:$0xf]
      %v170 = vld [vmem:[%s139 + $0x58] sm:$0xf]
      %v171 = vld [vmem:[%s139 + $0x5c] sm:$0xf]
      %v172 = vld [vmem:[%s139 + $0x60] sm:$0xf]
      %v173 = vld [vmem:[%s139 + $0x64] sm:$0xf]
      %v174 = vld [vmem:[%s139 + $0x68] sm:$0xf]
      %v175 = vld [vmem:[%s139 + $0x6c] sm:$0xf]
      %v176 = vld [vmem:[%s139 + $0x70] sm:$0xf]
      %v177 = vld [vmem:[%s139 + $0x74] sm:$0xf]
      %v178 = vld [vmem:[%s139 + $0x78] sm:$0xf]
      %v179 = vld [vmem:[%s139 + $0x7c] sm:$0xf]
      %v180 = vld [vmem:[%s1] sm:$0xf]
      %v181 = vld [vmem:[%s1 + $0x4] sm:$0xf]
      %v182 = vld [vmem:[%s1 + $0x8] sm:$0xf]
      %v183 = vld [vmem:[%s1 + $0xc] sm:$0xf]
      %v184 = vld [vmem:[%s1 + $0x10] sm:$0xf]
      %v185 = vld [vmem:[%s1 + $0x14] sm:$0xf]
      %v186 = vld [vmem:[%s1 + $0x18] sm:$0xf]
      %v187 = vld [vmem:[%s1 + $0x1c] sm:$0xf]
      %v220 = vunpack.c.l.b16 %v148
      %v221 = vunpack.c.l.b16 %v149
      %v222 = vunpack.c.l.b16 %v150
      %v223 = vunpack.c.l.b16 %v151
      %v224 = vunpack.c.l.b16 %v152
      %v225 = vunpack.c.l.b16 %v153
      %v226 = vunpack.c.l.b16 %v154
      %v227 = vunpack.c.l.b16 %v155
      %v228 = vunpack.c.l.b16 %v156
      %v229 = vunpack.c.l.b16 %v157
      %v230 = vunpack.c.l.b16 %v158
      %v231 = vunpack.c.l.b16 %v159
      %v232 = vunpack.c.l.b16 %v160
      %v233 = vunpack.c.l.b16 %v161
      %v234 = vunpack.c.l.b16 %v162
      %v235 = vunpack.c.l.b16 %v163
      %v236 = vunpack.c.l.b16 %v164
      %v237 = vunpack.c.l.b16 %v165
      %v238 = vunpack.c.l.b16 %v166
      %v239 = vunpack.c.l.b16 %v167
      %v240 = vunpack.c.l.b16 %v168
      %v241 = vunpack.c.l.b16 %v169
      %v242 = vunpack.c.l.b16 %v170
      %v243 = vunpack.c.l.b16 %v171
      %v244 = vunpack.c.l.b16 %v172
      %v245 = vunpack.c.l.b16 %v173
      %v246 = vunpack.c.l.b16 %v174
      %v247 = vunpack.c.l.b16 %v175
      %v248 = vunpack.c.l.b16 %v176
      %v249 = vunpack.c.l.b16 %v177
      %v250 = vunpack.c.l.b16 %v178
      %v251 = vunpack.c.l.b16 %v179
      %v252 = vpack.c.b16 %v221, %v220
      %v253 = vpack.c.b16 %v223, %v222
      %v254 = vpack.c.b16 %v225, %v224
      %v255 = vpack.c.b16 %v227, %v226
      %v256 = vpack.c.b16 %v229, %v228
      %v257 = vpack.c.b16 %v231, %v230
      %v258 = vpack.c.b16 %v233, %v232
      %v259 = vpack.c.b16 %v235, %v234
      %v260 = vpack.c.b16 %v237, %v236
      %v261 = vpack.c.b16 %v239, %v238
      %v262 = vpack.c.b16 %v241, %v240
      %v263 = vpack.c.b16 %v243, %v242
      %v264 = vpack.c.b16 %v245, %v244
      %v265 = vpack.c.b16 %v247, %v246
      %v266 = vpack.c.b16 %v249, %v248
      %v267 = vpack.c.b16 %v251, %v250
      %v276 = vunpack.c.l.b16 %v180
      %v277 = vunpack.c.l.b16 %v181
      %v278 = vunpack.c.l.b16 %v182
      %v279 = vunpack.c.l.b16 %v183
      %v280 = vunpack.c.l.b16 %v184
      %v281 = vunpack.c.l.b16 %v185
      %v282 = vunpack.c.l.b16 %v186
      %v283 = vunpack.c.l.b16 %v187
      %v284 = vpack.c.b16 %v277, %v276
      %v285 = vpack.c.b16 %v279, %v278
      %v286 = vpack.c.b16 %v281, %v280
      %v287 = vpack.c.b16 %v283, %v282
      %vm292 = vcmask 523264
      %v294 = vsel %vm292, %v252, 0
      %v297 = vsel %vm292, %v253, 0
      %v300 = vsel %vm292, %v254, 0
      %v303 = vsel %vm292, %v255, 0
      %v306 = vsel %vm292, %v256, 0
      %v309 = vsel %vm292, %v257, 0
      %v312 = vsel %vm292, %v258, 0
      %v315 = vsel %vm292, %v259, 0
      %v318 = vsel %vm292, %v260, 0
      %v321 = vsel %vm292, %v261, 0
      %v324 = vsel %vm292, %v262, 0
      %v327 = vsel %vm292, %v263, 0
      %v330 = vsel %vm292, %v264, 0
      %v333 = vsel %vm292, %v265, 0
      %v336 = vsel %vm292, %v266, 0
      %v339 = vsel %vm292, %v267, 0
      %341 = vmatpush.bf16.msra.mxu0 0
      %342 = vmatpush.bf16.msra.mxu0 0
      %343 = vmatpush.bf16.msra.mxu0 0
      %344 = vmatpush.bf16.msra.mxu0 0
      %345 = vmatpush.bf16.msra.mxu0 %v287
      %346 = vmatpush.bf16.msra.mxu0 %v286
      %347 = vmatpush.bf16.msra.mxu0 %v285
      %348 = vmatpush.bf16.msra.mxu0 %v284
      %349 = vmatmul.bf16.gmra.mxu0 %v294
      %v350 = vpop.f32.mrf.mxu0
      %v351 = vadd.f32 0.0, %v350
      %v352 = vpop.f32.mrf.mxu0
      %v353 = vadd.f32 0.0, %v352
      %354 = vmatmul.bf16.gmra.mxu0 %v297
      %v355 = vpop.f32.mrf.mxu0
      %v356 = vadd.f32 0.0, %v355
      %v357 = vpop.f32.mrf.mxu0
      %v358 = vadd.f32 0.0, %v357
      %359 = vmatmul.bf16.gmra.mxu0 %v300
      %v360 = vpop.f32.mrf.mxu0
      %v361 = vadd.f32 0.0, %v360
      %v362 = vpop.f32.mrf.mxu0
      %v363 = vadd.f32 0.0, %v362
      %364 = vmatmul.bf16.gmra.mxu0 %v303
      %v365 = vpop.f32.mrf.mxu0
      %v366 = vadd.f32 0.0, %v365
      %v367 = vpop.f32.mrf.mxu0
      %v368 = vadd.f32 0.0, %v367
      %369 = vmatmul.bf16.gmra.mxu0 %v306
      %v370 = vpop.f32.mrf.mxu0
      %v371 = vadd.f32 0.0, %v370
      %v372 = vpop.f32.mrf.mxu0
      %v373 = vadd.f32 0.0, %v372
      %374 = vmatmul.bf16.gmra.mxu0 %v309
      %v375 = vpop.f32.mrf.mxu0
      %v376 = vadd.f32 0.0, %v375
      %v377 = vpop.f32.mrf.mxu0
      %v378 = vadd.f32 0.0, %v377
      %379 = vmatmul.bf16.gmra.mxu0 %v312
      %v380 = vpop.f32.mrf.mxu0
      %v381 = vadd.f32 0.0, %v380
      %v382 = vpop.f32.mrf.mxu0
      %v383 = vadd.f32 0.0, %v382
      %384 = vmatmul.bf16.gmra.mxu0 %v315
      %v385 = vpop.f32.mrf.mxu0
      %v386 = vadd.f32 0.0, %v385
      %v387 = vpop.f32.mrf.mxu0
      %v388 = vadd.f32 0.0, %v387
      %389 = vmatmul.bf16.gmra.mxu0 %v318
      %v390 = vpop.f32.mrf.mxu0
      %v391 = vadd.f32 0.0, %v390
      %v392 = vpop.f32.mrf.mxu0
      %v393 = vadd.f32 0.0, %v392
      %394 = vmatmul.bf16.gmra.mxu0 %v321
      %v395 = vpop.f32.mrf.mxu0
      %v396 = vadd.f32 0.0, %v395
      %v397 = vpop.f32.mrf.mxu0
      %v398 = vadd.f32 0.0, %v397
      %399 = vmatmul.bf16.gmra.mxu0 %v324
      %v400 = vpop.f32.mrf.mxu0
      %v401 = vadd.f32 0.0, %v400
      %v402 = vpop.f32.mrf.mxu0
      %v403 = vadd.f32 0.0, %v402
      %404 = vmatmul.bf16.gmra.mxu0 %v327
      %v405 = vpop.f32.mrf.mxu0
      %v406 = vadd.f32 0.0, %v405
      %v407 = vpop.f32.mrf.mxu0
      %v408 = vadd.f32 0.0, %v407
      %409 = vmatmul.bf16.gmra.mxu0 %v330
      %v410 = vpop.f32.mrf.mxu0
      %v411 = vadd.f32 0.0, %v410
      %v412 = vpop.f32.mrf.mxu0
      %v413 = vadd.f32 0.0, %v412
      %414 = vmatmul.bf16.gmra.mxu0 %v333
      %v415 = vpop.f32.mrf.mxu0
      %v416 = vadd.f32 0.0, %v415
      %v417 = vpop.f32.mrf.mxu0
      %v418 = vadd.f32 0.0, %v417
      %419 = vmatmul.bf16.gmra.mxu0 %v336
      %v420 = vpop.f32.mrf.mxu0
      %v421 = vadd.f32 0.0, %v420
      %v422 = vpop.f32.mrf.mxu0
      %v423 = vadd.f32 0.0, %v422
      %424 = vmatmul.bf16.gmra.mxu0 %v339
      %v425 = vpop.f32.mrf.mxu0
      %v426 = vadd.f32 0.0, %v425
      %v427 = vpop.f32.mrf.mxu0
      %v428 = vadd.f32 0.0, %v427
      %429 = vdwg.mxu0
      %v430 = vpack.c.bf16 %v351, %v351
      %v431 = vpack.c.bf16 %v353, %v353
      %v432 = vpack.c.bf16 %v356, %v356
      %v433 = vpack.c.bf16 %v358, %v358
      %v434 = vpack.c.bf16 %v361, %v361
      %v435 = vpack.c.bf16 %v363, %v363
      %v436 = vpack.c.bf16 %v366, %v366
      %v437 = vpack.c.bf16 %v368, %v368
      %v438 = vpack.c.bf16 %v371, %v371
      %v439 = vpack.c.bf16 %v373, %v373
      %v440 = vpack.c.bf16 %v376, %v376
      %v441 = vpack.c.bf16 %v378, %v378
      %v442 = vpack.c.bf16 %v381, %v381
      %v443 = vpack.c.bf16 %v383, %v383
      %v444 = vpack.c.bf16 %v386, %v386
      %v445 = vpack.c.bf16 %v388, %v388
      %v446 = vpack.c.bf16 %v391, %v391
      %v447 = vpack.c.bf16 %v393, %v393
      %v448 = vpack.c.bf16 %v396, %v396
      %v449 = vpack.c.bf16 %v398, %v398
      %v450 = vpack.c.bf16 %v401, %v401
      %v451 = vpack.c.bf16 %v403, %v403
      %v452 = vpack.c.bf16 %v406, %v406
      %v453 = vpack.c.bf16 %v408, %v408
      %v454 = vpack.c.bf16 %v411, %v411
      %v455 = vpack.c.bf16 %v413, %v413
      %v456 = vpack.c.bf16 %v416, %v416
      %v457 = vpack.c.bf16 %v418, %v418
      %v458 = vpack.c.bf16 %v421, %v421
      %v459 = vpack.c.bf16 %v423, %v423
      %v460 = vpack.c.bf16 %v426, %v426
      %v461 = vpack.c.bf16 %v428, %v428
      %462 = vst [vmem:[%s145] sm:$0xf] %v430
      %463 = vst [vmem:[%s145 + $0x4] sm:$0xf] %v431
      %464 = vst [vmem:[%s145 + $0x8] sm:$0xf] %v432
      %465 = vst [vmem:[%s145 + $0xc] sm:$0xf] %v433
      %466 = vst [vmem:[%s145 + $0x10] sm:$0xf] %v434
      %467 = vst [vmem:[%s145 + $0x14] sm:$0xf] %v435
      %468 = vst [vmem:[%s145 + $0x18] sm:$0xf] %v436
      %469 = vst [vmem:[%s145 + $0x1c] sm:$0xf] %v437
      %470 = vst [vmem:[%s145 + $0x20] sm:$0xf] %v438
      %471 = vst [vmem:[%s145 + $0x24] sm:$0xf] %v439
      %472 = vst [vmem:[%s145 + $0x28] sm:$0xf] %v440
      %473 = vst [vmem:[%s145 + $0x2c] sm:$0xf] %v441
      %474 = vst [vmem:[%s145 + $0x30] sm:$0xf] %v442
      %475 = vst [vmem:[%s145 + $0x34] sm:$0xf] %v443
      %476 = vst [vmem:[%s145 + $0x38] sm:$0xf] %v444
      %477 = vst [vmem:[%s145 + $0x3c] sm:$0xf] %v445
      %478 = vst [vmem:[%s145 + $0x40] sm:$0xf] %v446
      %479 = vst [vmem:[%s145 + $0x44] sm:$0xf] %v447
      %480 = vst [vmem:[%s145 + $0x48] sm:$0xf] %v448
      %481 = vst [vmem:[%s145 + $0x4c] sm:$0xf] %v449
      %482 = vst [vmem:[%s145 + $0x50] sm:$0xf] %v450
      %483 = vst [vmem:[%s145 + $0x54] sm:$0xf] %v451
      %484 = vst [vmem:[%s145 + $0x58] sm:$0xf] %v452
      %485 = vst [vmem:[%s145 + $0x5c] sm:$0xf] %v453
      %486 = vst [vmem:[%s145 + $0x60] sm:$0xf] %v454
      %487 = vst [vmem:[%s145 + $0x64] sm:$0xf] %v455
      %488 = vst [vmem:[%s145 + $0x68] sm:$0xf] %v456
      %489 = vst [vmem:[%s145 + $0x6c] sm:$0xf] %v457
      %490 = vst [vmem:[%s145 + $0x70] sm:$0xf] %v458
      %491 = vst [vmem:[%s145 + $0x74] sm:$0xf] %v459
      %492 = vst [vmem:[%s145 + $0x78] sm:$0xf] %v460
      %493 = vst [vmem:[%s145 + $0x7c] sm:$0xf] %v461
      %s494 = smul.u32 32, %s13
      %p495 = scmp.lt.s32.totalorder %s494, 63
      %s496 = scalar_select %p495, %s494, 63
      %s497 = smul.addr %s496, 4
      %s498 = scalar_lea.vmem %s2, %s497
      // Predicated region
      $region29: #{supervised_graphsage.3} parent=27 // pred_check
        %p499 = pneg %p78
      $region30: #{supervised_graphsage.3} parent=27 // pred_check_branch
        %501 = sbr.rel (%p499) target = $region32
      $region31: #{supervised_graphsage.3} parent=27 // pred_region
        %s502 = smul.u32 32, %s13
      $region32: #{supervised_graphsage.3} parent=27 // pred_fallthru
        _
    $region28: #{supervised_graphsage.3} parent=5 // pred_fallthru
      _
    %p503 = scmp.le.s32.totalorder 2, %s8
    // Predicated region
    $region33: #{supervised_graphsage.3} parent=5 // pred_check
      %p504 = pneg %p503
    $region34: #{supervised_graphsage.3} parent=5 // pred_check_branch
      %506 = sbr.rel (%p504) target = $region36
    $region35: #{supervised_graphsage.3} parent=5 // pred_region
      %s507 = ssub.s32 %s8, 2
      // Predicated region
      $region37: #{supervised_graphsage.3} parent=35 // pred_check
        %p508 = pneg %p84
      $region38: #{supervised_graphsage.3} parent=35 // pred_check_branch
        %510 = sbr.rel (%p508) target = $region40
      $region39: #{supervised_graphsage.3} parent=35 // pred_region
        %s511 = smul.u32 32, %s14
        %p512 = scmp.lt.s32.totalorder %s511, 63
        %s513 = scalar_select %p512, %s511, 63
        %s514 = smul.addr %s513, 4
        %s515 = scalar_lea.vmem %s2, %s514
      $region40: #{supervised_graphsage.3} parent=35 // pred_fallthru
        _
    $region36: #{supervised_graphsage.3} parent=5 // pred_fallthru
      _
  $region6: #{supervised_graphsage.3} parent=0 // loop_footer
    %s12 = sadd.s32 1, %s8
  $region7: #{supervised_graphsage.3} parent=0 // loop_footer_branch
    %7 = sbr.rel target = $region3
  $region8: #{supervised_graphsage.3} parent=0 // loop_exit
    _

// kernel: supervised_graphsage.4
$region0: #{supervised_graphsage.4}
  #allocation0 [shape = 'u32[]', space=smem, size = 0x4, offset = 0x4, fixed_abs, tag = 'smem constant byte address 0x4 - core index']
  #allocation1 [shape = 'u32[72,128]{1,0:T(1,128)}', space=vmem, size = 0x9000, scoped, tag = 'internal scratch']
  %s0 = inlined_call_operand.vmem [shape: bf16[512,512], index: 0, kind: input, shape index: {}]
  %s1 = inlined_call_operand.vmem [shape: bf16[512,128], index: 1, kind: input, shape index: {}]
  %s2 = inlined_call_operand.vmem [shape: f32[1,128], index: 2, kind: input, shape index: {}]
  %s3 = inlined_call_operand.vmem [shape: bf16[128,128], index: 3, kind: input, shape index: {}]
  %s4 = inlined_call_operand.vmem [shape: bf16[512,128], index: 4, kind: output, shape index: {}]
  %s5 = sld [smem:[#allocation0]]
  $region49: #{supervised_graphsage.4} parent=0
    _
  %s7 = ssub.s32 1, %s5
  %s8 = scalar_select 0, %s7, %s5
  loop: start=0, step=1, limit=4
  $region2: #{supervised_graphsage.4} parent=0 // loop_pre_header
    _
  $region3: #{supervised_graphsage.4} parent=0 // loop_header
    %s10 = sphi 0, %s14
    %p11 = scmp.ge.s32.totalorder %s10, 4
    %s20 = sphi 0, %s22
    %s23 = sphi 0, %s20
    %s24 = sphi 0, %s23
    %s40 = sphi 0, %s24
    %s44 = sphi 0, %s44
    %s46 = sphi 0, %s44
    %s47 = sphi 0, %s46
    %s61 = sphi 0, %s47
    %s65 = sphi 0, %s65
    %s67 = sphi 0, %s65
    %s68 = sphi 0, %s67
    %s82 = sphi 0, %s68
    %s86 = sphi 0, %s86
    %s88 = sphi 0, %s86
    %s89 = sphi 0, %s88
    %s103 = sphi 0, %s89
    %s109 = sphi 0, %s111
    %s112 = sphi 0, %s109
    %s113 = sphi 0, %s112
    %s129 = sphi 0, %s113
  $region4: #{supervised_graphsage.4} parent=0 // loop_header_branch
    %13 = sbr.rel (%p11) target = $region8
  $region5: #{supervised_graphsage.4} parent=0 // loop_body
    %s15 = ssub.s32 %s10, 1
    %s16 = ssub.s32 %s10, 2
    %s17 = sadd.s32 %s10, 1
    %s18 = ssub.s32 %s10, %s17
    %p19 = scmp.eq.s32.totalorder %s18, 0
    %s21 = sadd.s32 %s20, 1
    %s22 = scalar_select %p19, %s20, %s21
    %p25 = pneg %p19
    %p26 = scmp.eq.s32.totalorder %s10, 1
    %p27 = por %p25, %p26
    %p28 = scmp.ne.s32.totalorder %s20, %s23
    %p29 = scmp.eq.s32.totalorder %s10, 0
    %p30 = por %p28, %p29
    %p31 = scmp.ne.s32.totalorder %s20, %s23
    %p32 = scmp.eq.s32.totalorder %s15, 1
    %p33 = por %p31, %p32
    %p34 = scmp.ne.s32.totalorder %s23, %s24
    %p35 = scmp.eq.s32.totalorder %s15, 0
    %p36 = por %p34, %p35
    %p37 = scmp.ne.s32.totalorder %s23, %s24
    %p38 = scmp.eq.s32.totalorder %s16, 1
    %p39 = por %p37, %p38
    %p41 = scmp.ne.s32.totalorder %s24, %s40
    %p42 = scmp.eq.s32.totalorder %s16, 0
    %p43 = por %p41, %p42
    %s45 = sadd.s32 %s44, 1
    %p48 = scmp.eq.s32.totalorder %s10, 1
    %p49 = scmp.ne.s32.totalorder %s44, %s46
    %p50 = scmp.eq.s32.totalorder %s10, 0
    %p51 = por %p49, %p50
    %p52 = scmp.ne.s32.totalorder %s44, %s46
    %p53 = scmp.eq.s32.totalorder %s15, 1
    %p54 = por %p52, %p53
    %p55 = scmp.ne.s32.totalorder %s46, %s47
    %p56 = scmp.eq.s32.totalorder %s15, 0
    %p57 = por %p55, %p56
    %p58 = scmp.ne.s32.totalorder %s46, %s47
    %p59 = scmp.eq.s32.totalorder %s16, 1
    %p60 = por %p58, %p59
    %p62 = scmp.ne.s32.totalorder %s47, %s61
    %p63 = scmp.eq.s32.totalorder %s16, 0
    %p64 = por %p62, %p63
    %s66 = sadd.s32 %s65, 1
    %p69 = scmp.eq.s32.totalorder %s10, 1
    %p70 = scmp.ne.s32.totalorder %s65, %s67
    %p71 = scmp.eq.s32.totalorder %s10, 0
    %p72 = por %p70, %p71
    %p73 = scmp.ne.s32.totalorder %s65, %s67
    %p74 = scmp.eq.s32.totalorder %s15, 1
    %p75 = por %p73, %p74
    %p76 = scmp.ne.s32.totalorder %s67, %s68
    %p77 = scmp.eq.s32.totalorder %s15, 0
    %p78 = por %p76, %p77
    %p79 = scmp.ne.s32.totalorder %s67, %s68
    %p80 = scmp.eq.s32.totalorder %s16, 1
    %p81 = por %p79, %p80
    %p83 = scmp.ne.s32.totalorder %s68, %s82
    %p84 = scmp.eq.s32.totalorder %s16, 0
    %p85 = por %p83, %p84
    %s87 = sadd.s32 %s86, 1
    %p90 = scmp.eq.s32.totalorder %s10, 1
    %p91 = scmp.ne.s32.totalorder %s86, %s88
    %p92 = scmp.eq.s32.totalorder %s10, 0
    %p93 = por %p91, %p92
    %p94 = scmp.ne.s32.totalorder %s86, %s88
    %p95 = scmp.eq.s32.totalorder %s15, 1
    %p96 = por %p94, %p95
    %p97 = scmp.ne.s32.totalorder %s88, %s89
    %p98 = scmp.eq.s32.totalorder %s15, 0
    %p99 = por %p97, %p98
    %p100 = scmp.ne.s32.totalorder %s88, %s89
    %p101 = scmp.eq.s32.totalorder %s16, 1
    %p102 = por %p100, %p101
    %p104 = scmp.ne.s32.totalorder %s89, %s103
    %p105 = scmp.eq.s32.totalorder %s16, 0
    %p106 = por %p104, %p105
    %s107 = ssub.s32 %s10, %s17
    %p108 = scmp.eq.s32.totalorder %s107, 0
    %s110 = sadd.s32 %s109, 1
    %s111 = scalar_select %p108, %s109, %s110
    %p114 = pneg %p108
    %p115 = scmp.eq.s32.totalorder %s10, 1
    %p116 = por %p114, %p115
    %p117 = scmp.ne.s32.totalorder %s109, %s112
    %p118 = scmp.eq.s32.totalorder %s10, 0
    %p119 = por %p117, %p118
    %p120 = scmp.ne.s32.totalorder %s109, %s112
    %p121 = scmp.eq.s32.totalorder %s15, 1
    %p122 = por %p120, %p121
    %p123 = scmp.ne.s32.totalorder %s112, %s113
    %p124 = scmp.eq.s32.totalorder %s15, 0
    %p125 = por %p123, %p124
    %p126 = scmp.ne.s32.totalorder %s112, %s113
    %p127 = scmp.eq.s32.totalorder %s16, 1
    %p128 = por %p126, %p127
    %p130 = scmp.ne.s32.totalorder %s113, %s129
    %p131 = scmp.eq.s32.totalorder %s16, 0
    %p132 = por %p130, %p131
    %p133 = scmp.le.s32.totalorder 1, %s10
    %p134 = scmp.lt.s32.totalorder %s10, 3
    %p135 = pnand %p133, %p134
    %p136 = pneg %p135
    // Predicated region
    $region9: #{supervised_graphsage.4} parent=5 // pred_check
      _
    $region10: #{supervised_graphsage.4} parent=5 // pred_check_branch
      %138 = sbr.rel (%p135) target = $region12
    $region11: #{supervised_graphsage.4} parent=5 // pred_region
      %s139 = ssub.s32 %s10, 1
      // Predicated region
      $region13: #{supervised_graphsage.4} parent=11 // pred_check
        %p140 = pneg %p57
      $region14: #{supervised_graphsage.4} parent=11 // pred_check_branch
        %142 = sbr.rel (%p140) target = $region16
      $region15: #{supervised_graphsage.4} parent=11 // pred_region
        _
      $region16: #{supervised_graphsage.4} parent=11 // pred_fallthru
        _
      // Predicated region
      $region17: #{supervised_graphsage.4} parent=11 // pred_check
        %p143 = pneg %p78
      $region18: #{supervised_graphsage.4} parent=11 // pred_check_branch
        %145 = sbr.rel (%p143) target = $region20
      $region19: #{supervised_graphsage.4} parent=11 // pred_region
        _
      $region20: #{supervised_graphsage.4} parent=11 // pred_fallthru
        _
      // Predicated region
      $region21: #{supervised_graphsage.4} parent=11 // pred_check
        %p146 = pneg %p99
      $region22: #{supervised_graphsage.4} parent=11 // pred_check_branch
        %148 = sbr.rel (%p146) target = $region24
      $region23: #{supervised_graphsage.4} parent=11 // pred_region
        _
      $region24: #{supervised_graphsage.4} parent=11 // pred_fallthru
        _
    $region12: #{supervised_graphsage.4} parent=5 // pred_fallthru
      _
    %p149 = scmp.lt.s32.totalorder %s10, 2
    // Predicated region
    $region25: #{supervised_graphsage.4} parent=5 // pred_check
      %p150 = pneg %p149
    $region26: #{supervised_graphsage.4} parent=5 // pred_check_branch
      %152 = sbr.rel (%p150) target = $region28
    $region27: #{supervised_graphsage.4} parent=5 // pred_region
      // Predicated region
      $region29: #{supervised_graphsage.4} parent=27 // pred_check
        %p153 = pneg %p30
      $region30: #{supervised_graphsage.4} parent=27 // pred_check_branch
        %155 = sbr.rel (%p153) target = $region32
      $region31: #{supervised_graphsage.4} parent=27 // pred_region
        %s156 = smul.u32 32, %s10
        %p157 = scmp.lt.s32.totalorder %s156, 63
        %s158 = scalar_select %p157, %s156, 63
        %s159 = smul.addr %s158, 4
        %s160 = smul.addr %s159, 4
        %s161 = scalar_lea.vmem %s0, %s160
        %s162 = smul.u32 32, %s10
      $region32: #{supervised_graphsage.4} parent=27 // pred_fallthru
        _
    $region28: #{supervised_graphsage.4} parent=5 // pred_fallthru
      _
    %p163 = scmp.le.s32.totalorder 1, %s10
    %p164 = scmp.lt.s32.totalorder %s10, 3
    %p165 = pnand %p163, %p164
    %p166 = pneg %p165
    // Predicated region
    $region33: #{supervised_graphsage.4} parent=5 // pred_check
      _
    $region34: #{supervised_graphsage.4} parent=5 // pred_check_branch
      %168 = sbr.rel (%p165) target = $region36
    $region35: #{supervised_graphsage.4} parent=5 // pred_region
      %s169 = ssub.s32 %s10, 1
      %s170 = smul.u32 32, %s15
      %p171 = scmp.lt.s32.totalorder %s170, 63
      %s172 = scalar_select %p171, %s170, 63
      %s173 = smul.addr %s172, 4
      %s174 = smul.addr %s173, 4
      %s175 = scalar_lea.vmem %s0, %s174
      %p176 = pneg %p36
      %p177 = pneg %p33
      %p178 = pneg %p57
      %p179 = pneg %p54
      %p180 = pneg %p78
      %p181 = pneg %p75
      %p182 = pneg %p99
      %p183 = pneg %p96
      %p184 = pneg %p125
      %p185 = pneg %p122
      %s186 = smul.u32 32, %s15
      %p187 = scmp.lt.s32.totalorder %s186, 63
      %s188 = scalar_select %p187, %s186, 63
      %s189 = smul.addr %s188, 4
      %s190 = scalar_lea.vmem %s4, %s189
      %s191 = smul.u32 32, %s15
      %p192 = scmp.lt.s32.totalorder %s191, 63
      %s193 = scalar_select %p192, %s191, 63
      %s194 = smul.addr %s193, 4
      %s195 = smul.addr %s194, 4
      %s196 = scalar_lea.vmem %s0, %s195
      %s197 = smul.u32 32, %s15
      %s198 = smul.u32 32, %s15
      %p199 = scmp.lt.s32.totalorder %s198, 63
      %s200 = scalar_select %p199, %s198, 63
      %s201 = smul.addr %s200, 4
      %s202 = scalar_lea.vmem %s4, %s201
      %s203 = smul.u32 32, %s15
      %v204 = vld [vmem:[%s196] sm:$0xff]
      %v205 = vld [vmem:[%s196 + $0x8] sm:$0xff]
      %v206 = vld [vmem:[%s196 + $0x10] sm:$0xff]
      %v207 = vld [vmem:[%s196 + $0x18] sm:$0xff]
      %v208 = vld [vmem:[%s196 + $0x20] sm:$0xff]
      %v209 = vld [vmem:[%s196 + $0x28] sm:$0xff]
      %v210 = vld [vmem:[%s196 + $0x30] sm:$0xff]
      %v211 = vld [vmem:[%s196 + $0x38] sm:$0xff]
      %v212 = vld [vmem:[%s196 + $0x40] sm:$0xff]
      %v213 = vld [vmem:[%s196 + $0x48] sm:$0xff]
      %v214 = vld [vmem:[%s196 + $0x50] sm:$0xff]
      %v215 = vld [vmem:[%s196 + $0x58] sm:$0xff]
      %v216 = vld [vmem:[%s196 + $0x60] sm:$0xff]
      %v217 = vld [vmem:[%s196 + $0x68] sm:$0xff]
      %v218 = vld [vmem:[%s196 + $0x70] sm:$0xff]
      %v219 = vld [vmem:[%s196 + $0x78] sm:$0xff]
      %v220 = vld [vmem:[%s196 + $0x80] sm:$0xff]
      %v221 = vld [vmem:[%s196 + $0x88] sm:$0xff]
      %v222 = vld [vmem:[%s196 + $0x90] sm:$0xff]
      %v223 = vld [vmem:[%s196 + $0x98] sm:$0xff]
      %v224 = vld [vmem:[%s196 + $0xa0] sm:$0xff]
      %v225 = vld [vmem:[%s196 + $0xa8] sm:$0xff]
      %v226 = vld [vmem:[%s196 + $0xb0] sm:$0xff]
      %v227 = vld [vmem:[%s196 + $0xb8] sm:$0xff]
      %v228 = vld [vmem:[%s196 + $0xc0] sm:$0xff]
      %v229 = vld [vmem:[%s196 + $0xc8] sm:$0xff]
      %v230 = vld [vmem:[%s196 + $0xd0] sm:$0xff]
      %v231 = vld [vmem:[%s196 + $0xd8] sm:$0xff]
      %v232 = vld [vmem:[%s196 + $0xe0] sm:$0xff]
      %v233 = vld [vmem:[%s196 + $0xe8] sm:$0xff]
      %v234 = vld [vmem:[%s196 + $0xf0] sm:$0xff]
      %v235 = vld [vmem:[%s196 + $0xf8] sm:$0xff]
      %v236 = vld [vmem:[%s196 + $0x100] sm:$0xff]
      %v237 = vld [vmem:[%s196 + $0x108] sm:$0xff]
      %v238 = vld [vmem:[%s196 + $0x110] sm:$0xff]
      %v239 = vld [vmem:[%s196 + $0x118] sm:$0xff]
      %v240 = vld [vmem:[%s196 + $0x120] sm:$0xff]
      %v241 = vld [vmem:[%s196 + $0x128] sm:$0xff]
      %v242 = vld [vmem:[%s196 + $0x130] sm:$0xff]
      %v243 = vld [vmem:[%s196 + $0x138] sm:$0xff]
      %v244 = vld [vmem:[%s196 + $0x140] sm:$0xff]
      %v245 = vld [vmem:[%s196 + $0x148] sm:$0xff]
      %v246 = vld [vmem:[%s196 + $0x150] sm:$0xff]
      %v247 = vld [vmem:[%s196 + $0x158] sm:$0xff]
      %v248 = vld [vmem:[%s196 + $0x160] sm:$0xff]
      %v249 = vld [vmem:[%s196 + $0x168] sm:$0xff]
      %v250 = vld [vmem:[%s196 + $0x170] sm:$0xff]
      %v251 = vld [vmem:[%s196 + $0x178] sm:$0xff]
      %v252 = vld [vmem:[%s196 + $0x180] sm:$0xff]
      %v253 = vld [vmem:[%s196 + $0x188] sm:$0xff]
      %v254 = vld [vmem:[%s196 + $0x190] sm:$0xff]
      %v255 = vld [vmem:[%s196 + $0x198] sm:$0xff]
      %v256 = vld [vmem:[%s196 + $0x1a0] sm:$0xff]
      %v257 = vld [vmem:[%s196 + $0x1a8] sm:$0xff]
      %v258 = vld [vmem:[%s196 + $0x1b0] sm:$0xff]
      %v259 = vld [vmem:[%s196 + $0x1b8] sm:$0xff]
      %v260 = vld [vmem:[%s196 + $0x1c0] sm:$0xff]
      %v261 = vld [vmem:[%s196 + $0x1c8] sm:$0xff]
      %v262 = vld [vmem:[%s196 + $0x1d0] sm:$0xff]
      %v263 = vld [vmem:[%s196 + $0x1d8] sm:$0xff]
      %v264 = vld [vmem:[%s196 + $0x1e0] sm:$0xff]
      %v265 = vld [vmem:[%s196 + $0x1e8] sm:$0xff]
      %v266 = vld [vmem:[%s196 + $0x1f0] sm:$0xff]
      %v267 = vld [vmem:[%s196 + $0x1f8] sm:$0xff]
      %v268 = vld [vmem:[%s1] sm:$0xf]
      %v269 = vld [vmem:[%s1 + $0x4] sm:$0xf]
      %v270 = vld [vmem:[%s1 + $0x8] sm:$0xf]
      %v271 = vld [vmem:[%s1 + $0xc] sm:$0xf]
      %v272 = vld [vmem:[%s1 + $0x10] sm:$0xf]
      %v273 = vld [vmem:[%s1 + $0x14] sm:$0xf]
      %v274 = vld [vmem:[%s1 + $0x18] sm:$0xf]
      %v275 = vld [vmem:[%s1 + $0x1c] sm:$0xf]
      %v276 = vld [vmem:[%s1 + $0x20] sm:$0xf]
      %v277 = vld [vmem:[%s1 + $0x24] sm:$0xf]
      %v278 = vld [vmem:[%s1 + $0x28] sm:$0xf]
      %v279 = vld [vmem:[%s1 + $0x2c] sm:$0xf]
      %v280 = vld [vmem:[%s1 + $0x30] sm:$0xf]
      %v281 = vld [vmem:[%s1 + $0x34] sm:$0xf]
      %v282 = vld [vmem:[%s1 + $0x38] sm:$0xf]
      %v283 = vld [vmem:[%s1 + $0x3c] sm:$0xf]
      %v284 = vld [vmem:[%s1 + $0x40] sm:$0xf]
      %v285 = vld [vmem:[%s1 + $0x44] sm:$0xf]
      %v286 = vld [vmem:[%s1 + $0x48] sm:$0xf]
      %v287 = vld [vmem:[%s1 + $0x4c] sm:$0xf]
      %v288 = vld [vmem:[%s1 + $0x50] sm:$0xf]
      %v289 = vld [vmem:[%s1 + $0x54] sm:$0xf]
      %v290 = vld [vmem:[%s1 + $0x58] sm:$0xf]
      %v291 = vld [vmem:[%s1 + $0x5c] sm:$0xf]
      %v292 = vld [vmem:[%s1 + $0x60] sm:$0xf]
      %v293 = vld [vmem:[%s1 + $0x64] sm:$0xf]
      %v294 = vld [vmem:[%s1 + $0x68] sm:$0xf]
      %v295 = vld [vmem:[%s1 + $0x6c] sm:$0xf]
      %v296 = vld [vmem:[%s1 + $0x70] sm:$0xf]
      %v297 = vld [vmem:[%s1 + $0x74] sm:$0xf]
      %v298 = vld [vmem:[%s1 + $0x78] sm:$0xf]
      %v299 = vld [vmem:[%s1 + $0x7c] sm:$0xf]
      %v300 = vld [vmem:[%s1 + $0x80] sm:$0xf]
      %v301 = vld [vmem:[%s1 + $0x84] sm:$0xf]
      %v302 = vld [vmem:[%s1 + $0x88] sm:$0xf]
      %v303 = vld [vmem:[%s1 + $0x8c] sm:$0xf]
      %v304 = vld [vmem:[%s1 + $0x90] sm:$0xf]
      %v305 = vld [vmem:[%s1 + $0x94] sm:$0xf]
      %v306 = vld [vmem:[%s1 + $0x98] sm:$0xf]
      %v307 = vld [vmem:[%s1 + $0x9c] sm:$0xf]
      %v308 = vld [vmem:[%s1 + $0xa0] sm:$0xf]
      %v309 = vld [vmem:[%s1 + $0xa4] sm:$0xf]
      %v310 = vld [vmem:[%s1 + $0xa8] sm:$0xf]
      %v311 = vld [vmem:[%s1 + $0xac] sm:$0xf]
      %v312 = vld [vmem:[%s1 + $0xb0] sm:$0xf]
      %v313 = vld [vmem:[%s1 + $0xb4] sm:$0xf]
      %v314 = vld [vmem:[%s1 + $0xb8] sm:$0xf]
      %v315 = vld [vmem:[%s1 + $0xbc] sm:$0xf]
      %v316 = vld [vmem:[%s1 + $0xc0] sm:$0xf]
      %v317 = vld [vmem:[%s1 + $0xc4] sm:$0xf]
      %v318 = vld [vmem:[%s1 + $0xc8] sm:$0xf]
      %v319 = vld [vmem:[%s1 + $0xcc] sm:$0xf]
      %v320 = vld [vmem:[%s1 + $0xd0] sm:$0xf]
      %v321 = vld [vmem:[%s1 + $0xd4] sm:$0xf]
      %v322 = vld [vmem:[%s1 + $0xd8] sm:$0xf]
      %v323 = vld [vmem:[%s1 + $0xdc] sm:$0xf]
      %v324 = vld [vmem:[%s1 + $0xe0] sm:$0xf]
      %v325 = vld [vmem:[%s1 + $0xe4] sm:$0xf]
      %v326 = vld [vmem:[%s1 + $0xe8] sm:$0xf]
      %v327 = vld [vmem:[%s1 + $0xec] sm:$0xf]
      %v328 = vld [vmem:[%s1 + $0xf0] sm:$0xf]
      %v329 = vld [vmem:[%s1 + $0xf4] sm:$0xf]
      %v330 = vld [vmem:[%s1 + $0xf8] sm:$0xf]
      %v331 = vld [vmem:[%s1 + $0xfc] sm:$0xf]
      %v332 = vld [vmem:[%s2] sm:$0x1]
      %v334 = vperm.slane %v332, 0
      %v400 = vunpack.c.l.b16 %v204
      %v401 = vunpack.c.h.b16 %v204
      %v402 = vunpack.c.l.b16 %v205
      %v403 = vunpack.c.h.b16 %v205
      %v404 = vunpack.c.l.b16 %v206
      %v405 = vunpack.c.h.b16 %v206
      %v406 = vunpack.c.l.b16 %v207
      %v407 = vunpack.c.h.b16 %v207
      %v408 = vunpack.c.l.b16 %v208
      %v409 = vunpack.c.h.b16 %v208
      %v410 = vunpack.c.l.b16 %v209
      %v411 = vunpack.c.h.b16 %v209
      %v412 = vunpack.c.l.b16 %v210
      %v413 = vunpack.c.h.b16 %v210
      %v414 = vunpack.c.l.b16 %v211
      %v415 = vunpack.c.h.b16 %v211
      %v416 = vunpack.c.l.b16 %v212
      %v417 = vunpack.c.h.b16 %v212
      %v418 = vunpack.c.l.b16 %v213
      %v419 = vunpack.c.h.b16 %v213
      %v420 = vunpack.c.l.b16 %v214
      %v421 = vunpack.c.h.b16 %v214
      %v422 = vunpack.c.l.b16 %v215
      %v423 = vunpack.c.h.b16 %v215
      %v424 = vunpack.c.l.b16 %v216
      %v425 = vunpack.c.h.b16 %v216
      %v426 = vunpack.c.l.b16 %v217
      %v427 = vunpack.c.h.b16 %v217
      %v428 = vunpack.c.l.b16 %v218
      %v429 = vunpack.c.h.b16 %v218
      %v430 = vunpack.c.l.b16 %v219
      %v431 = vunpack.c.h.b16 %v219
      %v432 = vunpack.c.l.b16 %v220
      %v433 = vunpack.c.h.b16 %v220
      %v434 = vunpack.c.l.b16 %v221
      %v435 = vunpack.c.h.b16 %v221
      %v436 = vunpack.c.l.b16 %v222
      %v437 = vunpack.c.h.b16 %v222
      %v438 = vunpack.c.l.b16 %v223
      %v439 = vunpack.c.h.b16 %v223
      %v440 = vunpack.c.l.b16 %v224
      %v441 = vunpack.c.h.b16 %v224
      %v442 = vunpack.c.l.b16 %v225
      %v443 = vunpack.c.h.b16 %v225
      %v444 = vunpack.c.l.b16 %v226
      %v445 = vunpack.c.h.b16 %v226
      %v446 = vunpack.c.l.b16 %v227
      %v447 = vunpack.c.h.b16 %v227
      %v448 = vunpack.c.l.b16 %v228
      %v449 = vunpack.c.h.b16 %v228
      %v450 = vunpack.c.l.b16 %v229
      %v451 = vunpack.c.h.b16 %v229
      %v452 = vunpack.c.l.b16 %v230
      %v453 = vunpack.c.h.b16 %v230
      %v454 = vunpack.c.l.b16 %v231
      %v455 = vunpack.c.h.b16 %v231
      %v456 = vunpack.c.l.b16 %v232
      %v457 = vunpack.c.h.b16 %v232
      %v458 = vunpack.c.l.b16 %v233
      %v459 = vunpack.c.h.b16 %v233
      %v460 = vunpack.c.l.b16 %v234
      %v461 = vunpack.c.h.b16 %v234
      %v462 = vunpack.c.l.b16 %v235
      %v463 = vunpack.c.h.b16 %v235
      %v464 = vunpack.c.l.b16 %v236
      %v465 = vunpack.c.h.b16 %v236
      %v466 = vunpack.c.l.b16 %v237
      %v467 = vunpack.c.h.b16 %v237
      %v468 = vunpack.c.l.b16 %v238
      %v469 = vunpack.c.h.b16 %v238
      %v470 = vunpack.c.l.b16 %v239
      %v471 = vunpack.c.h.b16 %v239
      %v472 = vunpack.c.l.b16 %v240
      %v473 = vunpack.c.h.b16 %v240
      %v474 = vunpack.c.l.b16 %v241
      %v475 = vunpack.c.h.b16 %v241
      %v476 = vunpack.c.l.b16 %v242
      %v477 = vunpack.c.h.b16 %v242
      %v478 = vunpack.c.l.b16 %v243
      %v479 = vunpack.c.h.b16 %v243
      %v480 = vunpack.c.l.b16 %v244
      %v481 = vunpack.c.h.b16 %v244
      %v482 = vunpack.c.l.b16 %v245
      %v483 = vunpack.c.h.b16 %v245
      %v484 = vunpack.c.l.b16 %v246
      %v485 = vunpack.c.h.b16 %v246
      %v486 = vunpack.c.l.b16 %v247
      %v487 = vunpack.c.h.b16 %v247
      %v488 = vunpack.c.l.b16 %v248
      %v489 = vunpack.c.h.b16 %v248
      %v490 = vunpack.c.l.b16 %v249
      %v491 = vunpack.c.h.b16 %v249
      %v492 = vunpack.c.l.b16 %v250
      %v493 = vunpack.c.h.b16 %v250
      %v494 = vunpack.c.l.b16 %v251
      %v495 = vunpack.c.h.b16 %v251
      %v496 = vunpack.c.l.b16 %v252
      %v497 = vunpack.c.h.b16 %v252
      %v498 = vunpack.c.l.b16 %v253
      %v499 = vunpack.c.h.b16 %v253
      %v500 = vunpack.c.l.b16 %v254
      %v501 = vunpack.c.h.b16 %v254
      %v502 = vunpack.c.l.b16 %v255
      %v503 = vunpack.c.h.b16 %v255
      %v504 = vunpack.c.l.b16 %v256
      %v505 = vunpack.c.h.b16 %v256
      %v506 = vunpack.c.l.b16 %v257
      %v507 = vunpack.c.h.b16 %v257
      %v508 = vunpack.c.l.b16 %v258
      %v509 = vunpack.c.h.b16 %v258
      %v510 = vunpack.c.l.b16 %v259
      %v511 = vunpack.c.h.b16 %v259
      %v512 = vunpack.c.l.b16 %v260
      %v513 = vunpack.c.h.b16 %v260
      %v514 = vunpack.c.l.b16 %v261
      %v515 = vunpack.c.h.b16 %v261
      %v516 = vunpack.c.l.b16 %v262
      %v517 = vunpack.c.h.b16 %v262
      %v518 = vunpack.c.l.b16 %v263
      %v519 = vunpack.c.h.b16 %v263
      %v520 = vunpack.c.l.b16 %v264
      %v521 = vunpack.c.h.b16 %v264
      %v522 = vunpack.c.l.b16 %v265
      %v523 = vunpack.c.h.b16 %v265
      %v524 = vunpack.c.l.b16 %v266
      %v525 = vunpack.c.h.b16 %v266
      %v526 = vunpack.c.l.b16 %v267
      %v527 = vunpack.c.h.b16 %v267
      %v528 = vpack.c.b16 %v404, %v400
      %v529 = vpack.c.b16 %v405, %v401
      %v530 = vpack.c.b16 %v406, %v402
      %v531 = vpack.c.b16 %v407, %v403
      %v532 = vpack.c.b16 %v412, %v408
      %v533 = vpack.c.b16 %v413, %v409
      %v534 = vpack.c.b16 %v414, %v410
      %v535 = vpack.c.b16 %v415, %v411
      %v536 = vpack.c.b16 %v420, %v416
      %v537 = vpack.c.b16 %v421, %v417
      %v538 = vpack.c.b16 %v422, %v418
      %v539 = vpack.c.b16 %v423, %v419
      %v540 = vpack.c.b16 %v428, %v424
      %v541 = vpack.c.b16 %v429, %v425
      %v542 = vpack.c.b16 %v430, %v426
      %v543 = vpack.c.b16 %v431, %v427
      %v544 = vpack.c.b16 %v436, %v432
      %v545 = vpack.c.b16 %v437, %v433
      %v546 = vpack.c.b16 %v438, %v434
      %v547 = vpack.c.b16 %v439, %v435
      %v548 = vpack.c.b16 %v444, %v440
      %v549 = vpack.c.b16 %v445, %v441
      %v550 = vpack.c.b16 %v446, %v442
      %v551 = vpack.c.b16 %v447, %v443
      %v552 = vpack.c.b16 %v452, %v448
      %v553 = vpack.c.b16 %v453, %v449
      %v554 = vpack.c.b16 %v454, %v450
      %v555 = vpack.c.b16 %v455, %v451
      %v556 = vpack.c.b16 %v460, %v456
      %v557 = vpack.c.b16 %v461, %v457
      %v558 = vpack.c.b16 %v462, %v458
      %v559 = vpack.c.b16 %v463, %v459
      %v560 = vpack.c.b16 %v468, %v464
      %v561 = vpack.c.b16 %v469, %v465
      %v562 = vpack.c.b16 %v470, %v466
      %v563 = vpack.c.b16 %v471, %v467
      %v564 = vpack.c.b16 %v476, %v472
      %v565 = vpack.c.b16 %v477, %v473
      %v566 = vpack.c.b16 %v478, %v474
      %v567 = vpack.c.b16 %v479, %v475
      %v568 = vpack.c.b16 %v484, %v480
      %v569 = vpack.c.b16 %v485, %v481
      %v570 = vpack.c.b16 %v486, %v482
      %v571 = vpack.c.b16 %v487, %v483
      %v572 = vpack.c.b16 %v492, %v488
      %v573 = vpack.c.b16 %v493, %v489
      %v574 = vpack.c.b16 %v494, %v490
      %v575 = vpack.c.b16 %v495, %v491
      %v576 = vpack.c.b16 %v500, %v496
      %v577 = vpack.c.b16 %v501, %v497
      %v578 = vpack.c.b16 %v502, %v498
      %v579 = vpack.c.b16 %v503, %v499
      %v580 = vpack.c.b16 %v508, %v504
      %v581 = vpack.c.b16 %v509, %v505
      %v582 = vpack.c.b16 %v510, %v506
      %v583 = vpack.c.b16 %v511, %v507
      %v584 = vpack.c.b16 %v516, %v512
      %v585 = vpack.c.b16 %v517, %v513
      %v586 = vpack.c.b16 %v518, %v514
      %v587 = vpack.c.b16 %v519, %v515
      %v588 = vpack.c.b16 %v524, %v520
      %v589 = vpack.c.b16 %v525, %v521
      %v590 = vpack.c.b16 %v526, %v522
      %v591 = vpack.c.b16 %v527, %v523
      %v720 = vunpack.c.l.b16 %v268
      %v721 = vunpack.c.l.b16 %v269
      %v722 = vunpack.c.l.b16 %v270
      %v723 = vunpack.c.l.b16 %v271
      %v724 = vunpack.c.l.b16 %v272
      %v725 = vunpack.c.l.b16 %v273
      %v726 = vunpack.c.l.b16 %v274
      %v727 = vunpack.c.l.b16 %v275
      %v728 = vunpack.c.l.b16 %v276
      %v729 = vunpack.c.l.b16 %v277
      %v730 = vunpack.c.l.b16 %v278
      %v731 = vunpack.c.l.b16 %v279
      %v732 = vunpack.c.l.b16 %v280
      %v733 = vunpack.c.l.b16 %v281
      %v734 = vunpack.c.l.b16 %v282
      %v735 = vunpack.c.l.b16 %v283
      %v736 = vunpack.c.l.b16 %v284
      %v737 = vunpack.c.l.b16 %v285
      %v738 = vunpack.c.l.b16 %v286
      %v739 = vunpack.c.l.b16 %v287
      %v740 = vunpack.c.l.b16 %v288
      %v741 = vunpack.c.l.b16 %v289
      %v742 = vunpack.c.l.b16 %v290
      %v743 = vunpack.c.l.b16 %v291
      %v744 = vunpack.c.l.b16 %v292
      %v745 = vunpack.c.l.b16 %v293
      %v746 = vunpack.c.l.b16 %v294
      %v747 = vunpack.c.l.b16 %v295
      %v748 = vunpack.c.l.b16 %v296
      %v749 = vunpack.c.l.b16 %v297
      %v750 = vunpack.c.l.b16 %v298
      %v751 = vunpack.c.l.b16 %v299
      %v752 = vunpack.c.l.b16 %v300
      %v753 = vunpack.c.l.b16 %v301
      %v754 = vunpack.c.l.b16 %v302
      %v755 = vunpack.c.l.b16 %v303
      %v756 = vunpack.c.l.b16 %v304
      %v757 = vunpack.c.l.b16 %v305
      %v758 = vunpack.c.l.b16 %v306
      %v759 = vunpack.c.l.b16 %v307
      %v760 = vunpack.c.l.b16 %v308
      %v761 = vunpack.c.l.b16 %v309
      %v762 = vunpack.c.l.b16 %v310
      %v763 = vunpack.c.l.b16 %v311
      %v764 = vunpack.c.l.b16 %v312
      %v765 = vunpack.c.l.b16 %v313
      %v766 = vunpack.c.l.b16 %v314
      %v767 = vunpack.c.l.b16 %v315
      %v768 = vunpack.c.l.b16 %v316
      %v769 = vunpack.c.l.b16 %v317
      %v770 = vunpack.c.l.b16 %v318
      %v771 = vunpack.c.l.b16 %v319
      %v772 = vunpack.c.l.b16 %v320
      %v773 = vunpack.c.l.b16 %v321
      %v774 = vunpack.c.l.b16 %v322
      %v775 = vunpack.c.l.b16 %v323
      %v776 = vunpack.c.l.b16 %v324
      %v777 = vunpack.c.l.b16 %v325
      %v778 = vunpack.c.l.b16 %v326
      %v779 = vunpack.c.l.b16 %v327
      %v780 = vunpack.c.l.b16 %v328
      %v781 = vunpack.c.l.b16 %v329
      %v782 = vunpack.c.l.b16 %v330
      %v783 = vunpack.c.l.b16 %v331
      %v784 = vpack.c.b16 %v721, %v720
      %v785 = vpack.c.b16 %v723, %v722
      %v786 = vpack.c.b16 %v725, %v724
      %v787 = vpack.c.b16 %v727, %v726
      %v788 = vpack.c.b16 %v729, %v728
      %v789 = vpack.c.b16 %v731, %v730
      %v790 = vpack.c.b16 %v733, %v732
      %v791 = vpack.c.b16 %v735, %v734
      %v792 = vpack.c.b16 %v737, %v736
      %v793 = vpack.c.b16 %v739, %v738
      %v794 = vpack.c.b16 %v741, %v740
      %v795 = vpack.c.b16 %v743, %v742
      %v796 = vpack.c.b16 %v745, %v744
      %v797 = vpack.c.b16 %v747, %v746
      %v798 = vpack.c.b16 %v749, %v748
      %v799 = vpack.c.b16 %v751, %v750
      %v800 = vpack.c.b16 %v753, %v752
      %v801 = vpack.c.b16 %v755, %v754
      %v802 = vpack.c.b16 %v757, %v756
      %v803 = vpack.c.b16 %v759, %v758
      %v804 = vpack.c.b16 %v761, %v760
      %v805 = vpack.c.b16 %v763, %v762
      %v806 = vpack.c.b16 %v765, %v764
      %v807 = vpack.c.b16 %v767, %v766
      %v808 = vpack.c.b16 %v769, %v768
      %v809 = vpack.c.b16 %v771, %v770
      %v810 = vpack.c.b16 %v773, %v772
      %v811 = vpack.c.b16 %v775, %v774
      %v812 = vpack.c.b16 %v777, %v776
      %v813 = vpack.c.b16 %v779, %v778
      %v814 = vpack.c.b16 %v781, %v780
      %v815 = vpack.c.b16 %v783, %v782
      %848 = vmatpush.bf16.msra.mxu0 %v791
      %849 = vmatpush.bf16.msra.mxu0 %v790
      %850 = vmatpush.bf16.msra.mxu0 %v789
      %851 = vmatpush.bf16.msra.mxu0 %v788
      %852 = vmatpush.bf16.msra.mxu0 %v787
      %853 = vmatpush.bf16.msra.mxu0 %v786
      %854 = vmatpush.bf16.msra.mxu0 %v785
      %855 = vmatpush.bf16.msra.mxu0 %v784
      %856 = vmatmul.bf16.gmra.mxu0 %v528
      %v857 = vpop.f32.mrf.mxu0
      %v858 = vadd.f32 %v334, %v857
      %v859 = vpop.f32.mrf.mxu0
      %v860 = vadd.f32 %v334, %v859
      %861 = vmatmul.bf16.gmra.mxu0 %v532
      %v862 = vpop.f32.mrf.mxu0
      %v863 = vadd.f32 %v334, %v862
      %v864 = vpop.f32.mrf.mxu0
      %v865 = vadd.f32 %v334, %v864
      %866 = vmatmul.bf16.gmra.mxu0 %v536
      %v867 = vpop.f32.mrf.mxu0
      %v868 = vadd.f32 %v334, %v867
      %v869 = vpop.f32.mrf.mxu0
      %v870 = vadd.f32 %v334, %v869
      %871 = vmatmul.bf16.gmra.mxu0 %v540
      %v872 = vpop.f32.mrf.mxu0
      %v873 = vadd.f32 %v334, %v872
      %v874 = vpop.f32.mrf.mxu0
      %v875 = vadd.f32 %v334, %v874
      %876 = vmatmul.bf16.gmra.mxu0 %v544
      %v877 = vpop.f32.mrf.mxu0
      %v878 = vadd.f32 %v334, %v877
      %v879 = vpop.f32.mrf.mxu0
      %v880 = vadd.f32 %v334, %v879
      %881 = vmatmul.bf16.gmra.mxu0 %v548
      %v882 = vpop.f32.mrf.mxu0
      %v883 = vadd.f32 %v334, %v882
      %v884 = vpop.f32.mrf.mxu0
      %v885 = vadd.f32 %v334, %v884
      %886 = vmatmul.bf16.gmra.mxu0 %v552
      %v887 = vpop.f32.mrf.mxu0
      %v888 = vadd.f32 %v334, %v887
      %v889 = vpop.f32.mrf.mxu0
      %v890 = vadd.f32 %v334, %v889
      %891 = vmatmul.bf16.gmra.mxu0 %v556
      %v892 = vpop.f32.mrf.mxu0
      %v893 = vadd.f32 %v334, %v892
      %v894 = vpop.f32.mrf.mxu0
      %v895 = vadd.f32 %v334, %v894
      %896 = vmatmul.bf16.gmra.mxu0 %v560
      %v897 = vpop.f32.mrf.mxu0
      %v898 = vadd.f32 %v334, %v897
      %v899 = vpop.f32.mrf.mxu0
      %v900 = vadd.f32 %v334, %v899
      %901 = vmatmul.bf16.gmra.mxu0 %v564
      %v902 = vpop.f32.mrf.mxu0
      %v903 = vadd.f32 %v334, %v902
      %v904 = vpop.f32.mrf.mxu0
      %v905 = vadd.f32 %v334, %v904
      %906 = vmatmul.bf16.gmra.mxu0 %v568
      %v907 = vpop.f32.mrf.mxu0
      %v908 = vadd.f32 %v334, %v907
      %v909 = vpop.f32.mrf.mxu0
      %v910 = vadd.f32 %v334, %v909
      %911 = vmatmul.bf16.gmra.mxu0 %v572
      %v912 = vpop.f32.mrf.mxu0
      %v913 = vadd.f32 %v334, %v912
      %v914 = vpop.f32.mrf.mxu0
      %v915 = vadd.f32 %v334, %v914
      %916 = vmatmul.bf16.gmra.mxu0 %v576
      %v917 = vpop.f32.mrf.mxu0
      %v918 = vadd.f32 %v334, %v917
      %v919 = vpop.f32.mrf.mxu0
      %v920 = vadd.f32 %v334, %v919
      %921 = vmatmul.bf16.gmra.mxu0 %v580
      %v922 = vpop.f32.mrf.mxu0
      %v923 = vadd.f32 %v334, %v922
      %v924 = vpop.f32.mrf.mxu0
      %v925 = vadd.f32 %v334, %v924
      %926 = vmatmul.bf16.gmra.mxu0 %v584
      %v927 = vpop.f32.mrf.mxu0
      %v928 = vadd.f32 %v334, %v927
      %v929 = vpop.f32.mrf.mxu0
      %v930 = vadd.f32 %v334, %v929
      %931 = vmatmul.bf16.gmra.mxu0 %v588
      %v932 = vpop.f32.mrf.mxu0
      %v933 = vadd.f32 %v334, %v932
      %v934 = vpop.f32.mrf.mxu0
      %v935 = vadd.f32 %v334, %v934
      %936 = vdwg.mxu0
      %937 = vmatpush.bf16.msra.mxu0 %v799
      %938 = vmatpush.bf16.msra.mxu0 %v798
      %939 = vmatpush.bf16.msra.mxu0 %v797
      %940 = vmatpush.bf16.msra.mxu0 %v796
      %941 = vmatpush.bf16.msra.mxu0 %v795
      %942 = vmatpush.bf16.msra.mxu0 %v794
      %943 = vmatpush.bf16.msra.mxu0 %v793
      %944 = vmatpush.bf16.msra.mxu0 %v792
      %945 = vmatmul.bf16.gmra.mxu0 %v529
      %v946 = vpop.f32.mrf.mxu0
      %v947 = vadd.f32 %v858, %v946
      %v948 = vpop.f32.mrf.mxu0
      %v949 = vadd.f32 %v860, %v948
      %950 = vmatmul.bf16.gmra.mxu0 %v533
      %v951 = vpop.f32.mrf.mxu0
      %v952 = vadd.f32 %v863, %v951
      %v953 = vpop.f32.mrf.mxu0
      %v954 = vadd.f32 %v865, %v953
      %955 = vmatmul.bf16.gmra.mxu0 %v537
      %v956 = vpop.f32.mrf.mxu0
      %v957 = vadd.f32 %v868, %v956
      %v958 = vpop.f32.mrf.mxu0
      %v959 = vadd.f32 %v870, %v958
      %960 = vmatmul.bf16.gmra.mxu0 %v541
      %v961 = vpop.f32.mrf.mxu0
      %v962 = vadd.f32 %v873, %v961
      %v963 = vpop.f32.mrf.mxu0
      %v964 = vadd.f32 %v875, %v963
      %965 = vmatmul.bf16.gmra.mxu0 %v545
      %v966 = vpop.f32.mrf.mxu0
      %v967 = vadd.f32 %v878, %v966
      %v968 = vpop.f32.mrf.mxu0
      %v969 = vadd.f32 %v880, %v968
      %970 = vmatmul.bf16.gmra.mxu0 %v549
      %v971 = vpop.f32.mrf.mxu0
      %v972 = vadd.f32 %v883, %v971
      %v973 = vpop.f32.mrf.mxu0
      %v974 = vadd.f32 %v885, %v973
      %975 = vmatmul.bf16.gmra.mxu0 %v553
      %v976 = vpop.f32.mrf.mxu0
      %v977 = vadd.f32 %v888, %v976
      %v978 = vpop.f32.mrf.mxu0
      %v979 = vadd.f32 %v890, %v978
      %980 = vmatmul.bf16.gmra.mxu0 %v557
      %v981 = vpop.f32.mrf.mxu0
      %v982 = vadd.f32 %v893, %v981
      %v983 = vpop.f32.mrf.mxu0
      %v984 = vadd.f32 %v895, %v983
      %985 = vmatmul.bf16.gmra.mxu0 %v561
      %v986 = vpop.f32.mrf.mxu0
      %v987 = vadd.f32 %v898, %v986
      %v988 = vpop.f32.mrf.mxu0
      %v989 = vadd.f32 %v900, %v988
      %990 = vmatmul.bf16.gmra.mxu0 %v565
      %v991 = vpop.f32.mrf.mxu0
      %v992 = vadd.f32 %v903, %v991
      %v993 = vpop.f32.mrf.mxu0
      %v994 = vadd.f32 %v905, %v993
      %995 = vmatmul.bf16.gmra.mxu0 %v569
      %v996 = vpop.f32.mrf.mxu0
      %v997 = vadd.f32 %v908, %v996
      %v998 = vpop.f32.mrf.mxu0
      %v999 = vadd.f32 %v910, %v998
      %1000 = vmatmul.bf16.gmra.mxu0 %v573
      %v1001 = vpop.f32.mrf.mxu0
      %v1002 = vadd.f32 %v913, %v1001
      %v1003 = vpop.f32.mrf.mxu0
      %v1004 = vadd.f32 %v915, %v1003
      %1005 = vmatmul.bf16.gmra.mxu0 %v577
      %v1006 = vpop.f32.mrf.mxu0
      %v1007 = vadd.f32 %v918, %v1006
      %v1008 = vpop.f32.mrf.mxu0
      %v1009 = vadd.f32 %v920, %v1008
      %1010 = vmatmul.bf16.gmra.mxu0 %v581
      %v1011 = vpop.f32.mrf.mxu0
      %v1012 = vadd.f32 %v923, %v1011
      %v1013 = vpop.f32.mrf.mxu0
      %v1014 = vadd.f32 %v925, %v1013
      %1015 = vmatmul.bf16.gmra.mxu0 %v585
      %v1016 = vpop.f32.mrf.mxu0
      %v1017 = vadd.f32 %v928, %v1016
      %v1018 = vpop.f32.mrf.mxu0
      %v1019 = vadd.f32 %v930, %v1018
      %1020 = vmatmul.bf16.gmra.mxu0 %v589
      %v1021 = vpop.f32.mrf.mxu0
      %v1022 = vadd.f32 %v933, %v1021
      %v1023 = vpop.f32.mrf.mxu0
      %v1024 = vadd.f32 %v935, %v1023
      %1025 = vdwg.mxu0
      %1026 = vmatpush.bf16.msra.mxu0 %v807
      %1027 = vmatpush.bf16.msra.mxu0 %v806
      %1028 = vmatpush.bf16.msra.mxu0 %v805
      %1029 = vmatpush.bf16.msra.mxu0 %v804
      %1030 = vmatpush.bf16.msra.mxu0 %v803
      %1031 = vmatpush.bf16.msra.mxu0 %v802
      %1032 = vmatpush.bf16.msra.mxu0 %v801
      %1033 = vmatpush.bf16.msra.mxu0 %v800
      %1034 = vmatmul.bf16.gmra.mxu0 %v530
      %v1035 = vpop.f32.mrf.mxu0
      %v1036 = vadd.f32 %v947, %v1035
      %v1037 = vpop.f32.mrf.mxu0
      %v1038 = vadd.f32 %v949, %v1037
      %1039 = vmatmul.bf16.gmra.mxu0 %v534
      %v1040 = vpop.f32.mrf.mxu0
      %v1041 = vadd.f32 %v952, %v1040
      %v1042 = vpop.f32.mrf.mxu0
      %v1043 = vadd.f32 %v954, %v1042
      %1044 = vmatmul.bf16.gmra.mxu0 %v538
      %v1045 = vpop.f32.mrf.mxu0
      %v1046 = vadd.f32 %v957, %v1045
      %v1047 = vpop.f32.mrf.mxu0
      %v1048 = vadd.f32 %v959, %v1047
      %1049 = vmatmul.bf16.gmra.mxu0 %v542
      %v1050 = vpop.f32.mrf.mxu0
      %v1051 = vadd.f32 %v962, %v1050
      %v1052 = vpop.f32.mrf.mxu0
      %v1053 = vadd.f32 %v964, %v1052
      %1054 = vmatmul.bf16.gmra.mxu0 %v546
      %v1055 = vpop.f32.mrf.mxu0
      %v1056 = vadd.f32 %v967, %v1055
      %v1057 = vpop.f32.mrf.mxu0
      %v1058 = vadd.f32 %v969, %v1057
      %1059 = vmatmul.bf16.gmra.mxu0 %v550
      %v1060 = vpop.f32.mrf.mxu0
      %v1061 = vadd.f32 %v972, %v1060
      %v1062 = vpop.f32.mrf.mxu0
      %v1063 = vadd.f32 %v974, %v1062
      %1064 = vmatmul.bf16.gmra.mxu0 %v554
      %v1065 = vpop.f32.mrf.mxu0
      %v1066 = vadd.f32 %v977, %v1065
      %v1067 = vpop.f32.mrf.mxu0
      %v1068 = vadd.f32 %v979, %v1067
      %1069 = vmatmul.bf16.gmra.mxu0 %v558
      %v1070 = vpop.f32.mrf.mxu0
      %v1071 = vadd.f32 %v982, %v1070
      %v1072 = vpop.f32.mrf.mxu0
      %v1073 = vadd.f32 %v984, %v1072
      %1074 = vmatmul.bf16.gmra.mxu0 %v562
      %v1075 = vpop.f32.mrf.mxu0
      %v1076 = vadd.f32 %v987, %v1075
      %v1077 = vpop.f32.mrf.mxu0
      %v1078 = vadd.f32 %v989, %v1077
      %1079 = vmatmul.bf16.gmra.mxu0 %v566
      %v1080 = vpop.f32.mrf.mxu0
      %v1081 = vadd.f32 %v992, %v1080
      %v1082 = vpop.f32.mrf.mxu0
      %v1083 = vadd.f32 %v994, %v1082
      %1084 = vmatmul.bf16.gmra.mxu0 %v570
      %v1085 = vpop.f32.mrf.mxu0
      %v1086 = vadd.f32 %v997, %v1085
      %v1087 = vpop.f32.mrf.mxu0
      %v1088 = vadd.f32 %v999, %v1087
      %1089 = vmatmul.bf16.gmra.mxu0 %v574
      %v1090 = vpop.f32.mrf.mxu0
      %v1091 = vadd.f32 %v1002, %v1090
      %v1092 = vpop.f32.mrf.mxu0
      %v1093 = vadd.f32 %v1004, %v1092
      %1094 = vmatmul.bf16.gmra.mxu0 %v578
      %v1095 = vpop.f32.mrf.mxu0
      %v1096 = vadd.f32 %v1007, %v1095
      %v1097 = vpop.f32.mrf.mxu0
      %v1098 = vadd.f32 %v1009, %v1097
      %1099 = vmatmul.bf16.gmra.mxu0 %v582
      %v1100 = vpop.f32.mrf.mxu0
      %v1101 = vadd.f32 %v1012, %v1100
      %v1102 = vpop.f32.mrf.mxu0
      %v1103 = vadd.f32 %v1014, %v1102
      %1104 = vmatmul.bf16.gmra.mxu0 %v586
      %v1105 = vpop.f32.mrf.mxu0
      %v1106 = vadd.f32 %v1017, %v1105
      %v1107 = vpop.f32.mrf.mxu0
      %v1108 = vadd.f32 %v1019, %v1107
      %1109 = vmatmul.bf16.gmra.mxu0 %v590
      %v1110 = vpop.f32.mrf.mxu0
      %v1111 = vadd.f32 %v1022, %v1110
      %v1112 = vpop.f32.mrf.mxu0
      %v1113 = vadd.f32 %v1024, %v1112
      %1114 = vdwg.mxu0
      %1115 = vmatpush.bf16.msra.mxu0 %v815
      %1116 = vmatpush.bf16.msra.mxu0 %v814
      %1117 = vmatpush.bf16.msra.mxu0 %v813
      %1118 = vmatpush.bf16.msra.mxu0 %v812
      %1119 = vmatpush.bf16.msra.mxu0 %v811
      %1120 = vmatpush.bf16.msra.mxu0 %v810
      %1121 = vmatpush.bf16.msra.mxu0 %v809
      %1122 = vmatpush.bf16.msra.mxu0 %v808
      %1123 = vmatmul.bf16.gmra.mxu0 %v531
      %v1124 = vpop.f32.mrf.mxu0
      %v1125 = vadd.f32 %v1036, %v1124
      %v1126 = vpop.f32.mrf.mxu0
      %v1127 = vadd.f32 %v1038, %v1126
      %1128 = vmatmul.bf16.gmra.mxu0 %v535
      %v1129 = vpop.f32.mrf.mxu0
      %v1130 = vadd.f32 %v1041, %v1129
      %v1131 = vpop.f32.mrf.mxu0
      %v1132 = vadd.f32 %v1043, %v1131
      %1133 = vmatmul.bf16.gmra.mxu0 %v539
      %v1134 = vpop.f32.mrf.mxu0
      %v1135 = vadd.f32 %v1046, %v1134
      %v1136 = vpop.f32.mrf.mxu0
      %v1137 = vadd.f32 %v1048, %v1136
      %1138 = vmatmul.bf16.gmra.mxu0 %v543
      %v1139 = vpop.f32.mrf.mxu0
      %v1140 = vadd.f32 %v1051, %v1139
      %v1141 = vpop.f32.mrf.mxu0
      %v1142 = vadd.f32 %v1053, %v1141
      %1143 = vmatmul.bf16.gmra.mxu0 %v547
      %v1144 = vpop.f32.mrf.mxu0
      %v1145 = vadd.f32 %v1056, %v1144
      %v1146 = vpop.f32.mrf.mxu0
      %v1147 = vadd.f32 %v1058, %v1146
      %1148 = vmatmul.bf16.gmra.mxu0 %v551
      %v1149 = vpop.f32.mrf.mxu0
      %v1150 = vadd.f32 %v1061, %v1149
      %v1151 = vpop.f32.mrf.mxu0
      %v1152 = vadd.f32 %v1063, %v1151
      %1153 = vmatmul.bf16.gmra.mxu0 %v555
      %v1154 = vpop.f32.mrf.mxu0
      %v1155 = vadd.f32 %v1066, %v1154
      %v1156 = vpop.f32.mrf.mxu0
      %v1157 = vadd.f32 %v1068, %v1156
      %1158 = vmatmul.bf16.gmra.mxu0 %v559
      %v1159 = vpop.f32.mrf.mxu0
      %v1160 = vadd.f32 %v1071, %v1159
      %v1161 = vpop.f32.mrf.mxu0
      %v1162 = vadd.f32 %v1073, %v1161
      %1163 = vmatmul.bf16.gmra.mxu0 %v563
      %v1164 = vpop.f32.mrf.mxu0
      %v1165 = vadd.f32 %v1076, %v1164
      %v1166 = vpop.f32.mrf.mxu0
      %v1167 = vadd.f32 %v1078, %v1166
      %1168 = vmatmul.bf16.gmra.mxu0 %v567
      %v1169 = vpop.f32.mrf.mxu0
      %v1170 = vadd.f32 %v1081, %v1169
      %v1171 = vpop.f32.mrf.mxu0
      %v1172 = vadd.f32 %v1083, %v1171
      %1173 = vmatmul.bf16.gmra.mxu0 %v571
      %v1174 = vpop.f32.mrf.mxu0
      %v1175 = vadd.f32 %v1086, %v1174
      %v1176 = vpop.f32.mrf.mxu0
      %v1177 = vadd.f32 %v1088, %v1176
      %1178 = vmatmul.bf16.gmra.mxu0 %v575
      %v1179 = vpop.f32.mrf.mxu0
      %v1180 = vadd.f32 %v1091, %v1179
      %v1181 = vpop.f32.mrf.mxu0
      %v1182 = vadd.f32 %v1093, %v1181
      %1183 = vmatmul.bf16.gmra.mxu0 %v579
      %v1184 = vpop.f32.mrf.mxu0
      %v1185 = vadd.f32 %v1096, %v1184
      %v1186 = vpop.f32.mrf.mxu0
      %v1187 = vadd.f32 %v1098, %v1186
      %1188 = vmatmul.bf16.gmra.mxu0 %v583
      %v1189 = vpop.f32.mrf.mxu0
      %v1190 = vadd.f32 %v1101, %v1189
      %v1191 = vpop.f32.mrf.mxu0
      %v1192 = vadd.f32 %v1103, %v1191
      %1193 = vmatmul.bf16.gmra.mxu0 %v587
      %v1194 = vpop.f32.mrf.mxu0
      %v1195 = vadd.f32 %v1106, %v1194
      %v1196 = vpop.f32.mrf.mxu0
      %v1197 = vadd.f32 %v1108, %v1196
      %1198 = vmatmul.bf16.gmra.mxu0 %v591
      %v1199 = vpop.f32.mrf.mxu0
      %v1200 = vadd.f32 %v1111, %v1199
      %v1201 = vpop.f32.mrf.mxu0
      %v1202 = vadd.f32 %v1113, %v1201
      %1203 = vdwg.mxu0
      %v1204 = vmax.f32 %v1125, 0.0
      %v1205 = vmax.f32 %v1127, 0.0
      %v1206 = vmax.f32 %v1130, 0.0
      %v1207 = vmax.f32 %v1132, 0.0
      %v1208 = vmax.f32 %v1135, 0.0
      %v1209 = vmax.f32 %v1137, 0.0
      %v1210 = vmax.f32 %v1140, 0.0
      %v1211 = vmax.f32 %v1142, 0.0
      %v1212 = vmax.f32 %v1145, 0.0
      %v1213 = vmax.f32 %v1147, 0.0
      %v1214 = vmax.f32 %v1150, 0.0
      %v1215 = vmax.f32 %v1152, 0.0
      %v1216 = vmax.f32 %v1155, 0.0
      %v1217 = vmax.f32 %v1157, 0.0
      %v1218 = vmax.f32 %v1160, 0.0
      %v1219 = vmax.f32 %v1162, 0.0
      %v1220 = vmax.f32 %v1165, 0.0
      %v1221 = vmax.f32 %v1167, 0.0
      %v1222 = vmax.f32 %v1170, 0.0
      %v1223 = vmax.f32 %v1172, 0.0
      %v1224 = vmax.f32 %v1175, 0.0
      %v1225 = vmax.f32 %v1177, 0.0
      %v1226 = vmax.f32 %v1180, 0.0
      %v1227 = vmax.f32 %v1182, 0.0
      %v1228 = vmax.f32 %v1185, 0.0
      %v1229 = vmax.f32 %v1187, 0.0
      %v1230 = vmax.f32 %v1190, 0.0
      %v1231 = vmax.f32 %v1192, 0.0
      %v1232 = vmax.f32 %v1195, 0.0
      %v1233 = vmax.f32 %v1197, 0.0
      %v1234 = vmax.f32 %v1200, 0.0
      %v1235 = vmax.f32 %v1202, 0.0
      %v1236 = vpack.c.bf16 %v1205, %v1204
      %v1237 = vpack.c.bf16 %v1207, %v1206
      %v1238 = vpack.c.bf16 %v1209, %v1208
      %v1239 = vpack.c.bf16 %v1211, %v1210
      %v1240 = vpack.c.bf16 %v1213, %v1212
      %v1241 = vpack.c.bf16 %v1215, %v1214
      %v1242 = vpack.c.bf16 %v1217, %v1216
      %v1243 = vpack.c.bf16 %v1219, %v1218
      %v1244 = vpack.c.bf16 %v1221, %v1220
      %v1245 = vpack.c.bf16 %v1223, %v1222
      %v1246 = vpack.c.bf16 %v1225, %v1224
      %v1247 = vpack.c.bf16 %v1227, %v1226
      %v1248 = vpack.c.bf16 %v1229, %v1228
      %v1249 = vpack.c.bf16 %v1231, %v1230
      %v1250 = vpack.c.bf16 %v1233, %v1232
      %v1251 = vpack.c.bf16 %v1235, %v1234
      %v1252 = vld [vmem:[%s3] sm:$0xf]
      %v1253 = vld [vmem:[%s3 + $0x4] sm:$0xf]
      %v1254 = vld [vmem:[%s3 + $0x8] sm:$0xf]
      %v1255 = vld [vmem:[%s3 + $0xc] sm:$0xf]
      %v1256 = vld [vmem:[%s3 + $0x10] sm:$0xf]
      %v1257 = vld [vmem:[%s3 + $0x14] sm:$0xf]
      %v1258 = vld [vmem:[%s3 + $0x18] sm:$0xf]
      %v1259 = vld [vmem:[%s3 + $0x1c] sm:$0xf]
      %v1260 = vld [vmem:[%s3 + $0x20] sm:$0xf]
      %v1261 = vld [vmem:[%s3 + $0x24] sm:$0xf]
      %v1262 = vld [vmem:[%s3 + $0x28] sm:$0xf]
      %v1263 = vld [vmem:[%s3 + $0x2c] sm:$0xf]
      %v1264 = vld [vmem:[%s3 + $0x30] sm:$0xf]
      %v1265 = vld [vmem:[%s3 + $0x34] sm:$0xf]
      %v1266 = vld [vmem:[%s3 + $0x38] sm:$0xf]
      %v1267 = vld [vmem:[%s3 + $0x3c] sm:$0xf]
      %v1284 = vunpack.c.l.b16 %v1252
      %v1285 = vunpack.c.l.b16 %v1253
      %v1286 = vunpack.c.l.b16 %v1254
      %v1287 = vunpack.c.l.b16 %v1255
      %v1288 = vunpack.c.l.b16 %v1256
      %v1289 = vunpack.c.l.b16 %v1257
      %v1290 = vunpack.c.l.b16 %v1258
      %v1291 = vunpack.c.l.b16 %v1259
      %v1292 = vunpack.c.l.b16 %v1260
      %v1293 = vunpack.c.l.b16 %v1261
      %v1294 = vunpack.c.l.b16 %v1262
      %v1295 = vunpack.c.l.b16 %v1263
      %v1296 = vunpack.c.l.b16 %v1264
      %v1297 = vunpack.c.l.b16 %v1265
      %v1298 = vunpack.c.l.b16 %v1266
      %v1299 = vunpack.c.l.b16 %v1267
      %v1300 = vpack.c.b16 %v1285, %v1284
      %v1301 = vpack.c.b16 %v1287, %v1286
      %v1302 = vpack.c.b16 %v1289, %v1288
      %v1303 = vpack.c.b16 %v1291, %v1290
      %v1304 = vpack.c.b16 %v1293, %v1292
      %v1305 = vpack.c.b16 %v1295, %v1294
      %v1306 = vpack.c.b16 %v1297, %v1296
      %v1307 = vpack.c.b16 %v1299, %v1298
      %1316 = vmatpush.bf16.msra.mxu0 %v1307
      %1317 = vmatpush.bf16.msra.mxu0 %v1306
      %1318 = vmatpush.bf16.msra.mxu0 %v1305
      %1319 = vmatpush.bf16.msra.mxu0 %v1304
      %1320 = vmatpush.bf16.msra.mxu0 %v1303
      %1321 = vmatpush.bf16.msra.mxu0 %v1302
      %1322 = vmatpush.bf16.msra.mxu0 %v1301
      %1323 = vmatpush.bf16.msra.mxu0 %v1300
      %1324 = vmatmul.bf16.gmra.mxu0 %v1236
      %v1325 = vpop.f32.mrf.mxu0
      %v1326 = vadd.f32 0.0, %v1325
      %v1327 = vpop.f32.mrf.mxu0
      %v1328 = vadd.f32 0.0, %v1327
      %1329 = vmatmul.bf16.gmra.mxu0 %v1237
      %v1330 = vpop.f32.mrf.mxu0
      %v1331 = vadd.f32 0.0, %v1330
      %v1332 = vpop.f32.mrf.mxu0
      %v1333 = vadd.f32 0.0, %v1332
      %1334 = vmatmul.bf16.gmra.mxu0 %v1238
      %v1335 = vpop.f32.mrf.mxu0
      %v1336 = vadd.f32 0.0, %v1335
      %v1337 = vpop.f32.mrf.mxu0
      %v1338 = vadd.f32 0.0, %v1337
      %1339 = vmatmul.bf16.gmra.mxu0 %v1239
      %v1340 = vpop.f32.mrf.mxu0
      %v1341 = vadd.f32 0.0, %v1340
      %v1342 = vpop.f32.mrf.mxu0
      %v1343 = vadd.f32 0.0, %v1342
      %1344 = vmatmul.bf16.gmra.mxu0 %v1240
      %v1345 = vpop.f32.mrf.mxu0
      %v1346 = vadd.f32 0.0, %v1345
      %v1347 = vpop.f32.mrf.mxu0
      %v1348 = vadd.f32 0.0, %v1347
      %1349 = vmatmul.bf16.gmra.mxu0 %v1241
      %v1350 = vpop.f32.mrf.mxu0
      %v1351 = vadd.f32 0.0, %v1350
      %v1352 = vpop.f32.mrf.mxu0
      %v1353 = vadd.f32 0.0, %v1352
      %1354 = vmatmul.bf16.gmra.mxu0 %v1242
      %v1355 = vpop.f32.mrf.mxu0
      %v1356 = vadd.f32 0.0, %v1355
      %v1357 = vpop.f32.mrf.mxu0
      %v1358 = vadd.f32 0.0, %v1357
      %1359 = vmatmul.bf16.gmra.mxu0 %v1243
      %v1360 = vpop.f32.mrf.mxu0
      %v1361 = vadd.f32 0.0, %v1360
      %v1362 = vpop.f32.mrf.mxu0
      %v1363 = vadd.f32 0.0, %v1362
      %1364 = vmatmul.bf16.gmra.mxu0 %v1244
      %v1365 = vpop.f32.mrf.mxu0
      %v1366 = vadd.f32 0.0, %v1365
      %v1367 = vpop.f32.mrf.mxu0
      %v1368 = vadd.f32 0.0, %v1367
      %1369 = vmatmul.bf16.gmra.mxu0 %v1245
      %v1370 = vpop.f32.mrf.mxu0
      %v1371 = vadd.f32 0.0, %v1370
      %v1372 = vpop.f32.mrf.mxu0
      %v1373 = vadd.f32 0.0, %v1372
      %1374 = vmatmul.bf16.gmra.mxu0 %v1246
      %v1375 = vpop.f32.mrf.mxu0
      %v1376 = vadd.f32 0.0, %v1375
      %v1377 = vpop.f32.mrf.mxu0
      %v1378 = vadd.f32 0.0, %v1377
      %1379 = vmatmul.bf16.gmra.mxu0 %v1247
      %v1380 = vpop.f32.mrf.mxu0
      %v1381 = vadd.f32 0.0, %v1380
      %v1382 = vpop.f32.mrf.mxu0
      %v1383 = vadd.f32 0.0, %v1382
      %1384 = vmatmul.bf16.gmra.mxu0 %v1248
      %v1385 = vpop.f32.mrf.mxu0
      %v1386 = vadd.f32 0.0, %v1385
      %v1387 = vpop.f32.mrf.mxu0
      %v1388 = vadd.f32 0.0, %v1387
      %1389 = vmatmul.bf16.gmra.mxu0 %v1249
      %v1390 = vpop.f32.mrf.mxu0
      %v1391 = vadd.f32 0.0, %v1390
      %v1392 = vpop.f32.mrf.mxu0
      %v1393 = vadd.f32 0.0, %v1392
      %1394 = vmatmul.bf16.gmra.mxu0 %v1250
      %v1395 = vpop.f32.mrf.mxu0
      %v1396 = vadd.f32 0.0, %v1395
      %v1397 = vpop.f32.mrf.mxu0
      %v1398 = vadd.f32 0.0, %v1397
      %1399 = vmatmul.bf16.gmra.mxu0 %v1251
      %v1400 = vpop.f32.mrf.mxu0
      %v1401 = vadd.f32 0.0, %v1400
      %v1402 = vpop.f32.mrf.mxu0
      %v1403 = vadd.f32 0.0, %v1402
      %1404 = vdwg.mxu0
      %v1405 = vpack.c.bf16 %v1326, %v1326
      %v1406 = vpack.c.bf16 %v1328, %v1328
      %v1407 = vpack.c.bf16 %v1331, %v1331
      %v1408 = vpack.c.bf16 %v1333, %v1333
      %v1409 = vpack.c.bf16 %v1336, %v1336
      %v1410 = vpack.c.bf16 %v1338, %v1338
      %v1411 = vpack.c.bf16 %v1341, %v1341
      %v1412 = vpack.c.bf16 %v1343, %v1343
      %v1413 = vpack.c.bf16 %v1346, %v1346
      %v1414 = vpack.c.bf16 %v1348, %v1348
      %v1415 = vpack.c.bf16 %v1351, %v1351
      %v1416 = vpack.c.bf16 %v1353, %v1353
      %v1417 = vpack.c.bf16 %v1356, %v1356
      %v1418 = vpack.c.bf16 %v1358, %v1358
      %v1419 = vpack.c.bf16 %v1361, %v1361
      %v1420 = vpack.c.bf16 %v1363, %v1363
      %v1421 = vpack.c.bf16 %v1366, %v1366
      %v1422 = vpack.c.bf16 %v1368, %v1368
      %v1423 = vpack.c.bf16 %v1371, %v1371
      %v1424 = vpack.c.bf16 %v1373, %v1373
      %v1425 = vpack.c.bf16 %v1376, %v1376
      %v1426 = vpack.c.bf16 %v1378, %v1378
      %v1427 = vpack.c.bf16 %v1381, %v1381
      %v1428 = vpack.c.bf16 %v1383, %v1383
      %v1429 = vpack.c.bf16 %v1386, %v1386
      %v1430 = vpack.c.bf16 %v1388, %v1388
      %v1431 = vpack.c.bf16 %v1391, %v1391
      %v1432 = vpack.c.bf16 %v1393, %v1393
      %v1433 = vpack.c.bf16 %v1396, %v1396
      %v1434 = vpack.c.bf16 %v1398, %v1398
      %v1435 = vpack.c.bf16 %v1401, %v1401
      %v1436 = vpack.c.bf16 %v1403, %v1403
      %1437 = vst [vmem:[%s202] sm:$0xf] %v1405
      %1438 = vst [vmem:[%s202 + $0x4] sm:$0xf] %v1406
      %1439 = vst [vmem:[%s202 + $0x8] sm:$0xf] %v1407
      %1440 = vst [vmem:[%s202 + $0xc] sm:$0xf] %v1408
      %1441 = vst [vmem:[%s202 + $0x10] sm:$0xf] %v1409
      %1442 = vst [vmem:[%s202 + $0x14] sm:$0xf] %v1410
      %1443 = vst [vmem:[%s202 + $0x18] sm:$0xf] %v1411
      %1444 = vst [vmem:[%s202 + $0x1c] sm:$0xf] %v1412
      %1445 = vst [vmem:[%s202 + $0x20] sm:$0xf] %v1413
      %1446 = vst [vmem:[%s202 + $0x24] sm:$0xf] %v1414
      %1447 = vst [vmem:[%s202 + $0x28] sm:$0xf] %v1415
      %1448 = vst [vmem:[%s202 + $0x2c] sm:$0xf] %v1416
      %1449 = vst [vmem:[%s202 + $0x30] sm:$0xf] %v1417
      %1450 = vst [vmem:[%s202 + $0x34] sm:$0xf] %v1418
      %1451 = vst [vmem:[%s202 + $0x38] sm:$0xf] %v1419
      %1452 = vst [vmem:[%s202 + $0x3c] sm:$0xf] %v1420
      %1453 = vst [vmem:[%s202 + $0x40] sm:$0xf] %v1421
      %1454 = vst [vmem:[%s202 + $0x44] sm:$0xf] %v1422
      %1455 = vst [vmem:[%s202 + $0x48] sm:$0xf] %v1423
      %1456 = vst [vmem:[%s202 + $0x4c] sm:$0xf] %v1424
      %1457 = vst [vmem:[%s202 + $0x50] sm:$0xf] %v1425
      %1458 = vst [vmem:[%s202 + $0x54] sm:$0xf] %v1426
      %1459 = vst [vmem:[%s202 + $0x58] sm:$0xf] %v1427
      %1460 = vst [vmem:[%s202 + $0x5c] sm:$0xf] %v1428
      %1461 = vst [vmem:[%s202 + $0x60] sm:$0xf] %v1429
      %1462 = vst [vmem:[%s202 + $0x64] sm:$0xf] %v1430
      %1463 = vst [vmem:[%s202 + $0x68] sm:$0xf] %v1431
      %1464 = vst [vmem:[%s202 + $0x6c] sm:$0xf] %v1432
      %1465 = vst [vmem:[%s202 + $0x70] sm:$0xf] %v1433
      %1466 = vst [vmem:[%s202 + $0x74] sm:$0xf] %v1434
      %1467 = vst [vmem:[%s202 + $0x78] sm:$0xf] %v1435
      %1468 = vst [vmem:[%s202 + $0x7c] sm:$0xf] %v1436
      %s1469 = smul.u32 32, %s15
      %p1470 = scmp.lt.s32.totalorder %s1469, 63
      %s1471 = scalar_select %p1470, %s1469, 63
      %s1472 = smul.addr %s1471, 4
      %s1473 = scalar_lea.vmem %s4, %s1472
      // Predicated region
      $region37: #{supervised_graphsage.4} parent=35 // pred_check
        %p1474 = pneg %p122
      $region38: #{supervised_graphsage.4} parent=35 // pred_check_branch
        %1476 = sbr.rel (%p1474) target = $region40
      $region39: #{supervised_graphsage.4} parent=35 // pred_region
        %s1477 = smul.u32 32, %s15
      $region40: #{supervised_graphsage.4} parent=35 // pred_fallthru
        _
    $region36: #{supervised_graphsage.4} parent=5 // pred_fallthru
      _
    %p1478 = scmp.le.s32.totalorder 2, %s10
    // Predicated region
    $region41: #{supervised_graphsage.4} parent=5 // pred_check
      %p1479 = pneg %p1478
    $region42: #{supervised_graphsage.4} parent=5 // pred_check_branch
      %1481 = sbr.rel (%p1479) target = $region44
    $region43: #{supervised_graphsage.4} parent=5 // pred_region
      %s1482 = ssub.s32 %s10, 2
      // Predicated region
      $region45: #{supervised_graphsage.4} parent=43 // pred_check
        %p1483 = pneg %p128
      $region46: #{supervised_graphsage.4} parent=43 // pred_check_branch
        %1485 = sbr.rel (%p1483) target = $region48
      $region47: #{supervised_graphsage.4} parent=43 // pred_region
        %s1486 = smul.u32 32, %s16
        %p1487 = scmp.lt.s32.totalorder %s1486, 63
        %s1488 = scalar_select %p1487, %s1486, 63
        %s1489 = smul.addr %s1488, 4
        %s1490 = scalar_lea.vmem %s4, %s1489
      $region48: #{supervised_graphsage.4} parent=43 // pred_fallthru
        _
    $region44: #{supervised_graphsage.4} parent=5 // pred_fallthru
      _
  $region6: #{supervised_graphsage.4} parent=0 // loop_footer
    %s14 = sadd.s32 1, %s10
  $region7: #{supervised_graphsage.4} parent=0 // loop_footer_branch
    %9 = sbr.rel target = $region3
  $region8: #{supervised_graphsage.4} parent=0 // loop_exit
    _

// kernel: supervised_graphsage.5
$region0: #{supervised_graphsage.5}
  #allocation0 [shape = 'u32[]', space=smem, size = 0x4, offset = 0x4, fixed_abs, tag = 'smem constant byte address 0x4 - core index']
  #allocation1 [shape = 'u32[72,128]{1,0:T(1,128)}', space=vmem, size = 0x9000, scoped, tag = 'internal scratch']
  %s0 = inlined_call_operand.vmem [shape: bf16[512,512], index: 0, kind: input, shape index: {}]
  %s1 = inlined_call_operand.vmem [shape: bf16[512,128], index: 1, kind: input, shape index: {}]
  %s2 = inlined_call_operand.vmem [shape: f32[1,128], index: 2, kind: input, shape index: {}]
  %s3 = inlined_call_operand.vmem [shape: bf16[128,128], index: 3, kind: input, shape index: {}]
  %s4 = inlined_call_operand.vmem [shape: f32[1,128], index: 4, kind: input, shape index: {}]
  %s5 = inlined_call_operand.vmem [shape: f32[512,128], index: 5, kind: output, shape index: {}]
  %s6 = sld [smem:[#allocation0]]
  $region53: #{supervised_graphsage.5} parent=0
    _
  %s8 = ssub.s32 1, %s6
  %s9 = scalar_select 0, %s8, %s6
  loop: start=0, step=1, limit=4
  $region2: #{supervised_graphsage.5} parent=0 // loop_pre_header
    _
  $region3: #{supervised_graphsage.5} parent=0 // loop_header
    %s11 = sphi 0, %s15
    %p12 = scmp.ge.s32.totalorder %s11, 4
    %s21 = sphi 0, %s23
    %s24 = sphi 0, %s21
    %s25 = sphi 0, %s24
    %s41 = sphi 0, %s25
    %s45 = sphi 0, %s45
    %s47 = sphi 0, %s45
    %s48 = sphi 0, %s47
    %s62 = sphi 0, %s48
    %s66 = sphi 0, %s66
    %s68 = sphi 0, %s66
    %s69 = sphi 0, %s68
    %s83 = sphi 0, %s69
    %s87 = sphi 0, %s87
    %s89 = sphi 0, %s87
    %s90 = sphi 0, %s89
    %s104 = sphi 0, %s90
    %s108 = sphi 0, %s108
    %s110 = sphi 0, %s108
    %s111 = sphi 0, %s110
    %s125 = sphi 0, %s111
    %s131 = sphi 0, %s133
    %s134 = sphi 0, %s131
    %s135 = sphi 0, %s134
    %s151 = sphi 0, %s135
  $region4: #{supervised_graphsage.5} parent=0 // loop_header_branch
    %14 = sbr.rel (%p12) target = $region8
  $region5: #{supervised_graphsage.5} parent=0 // loop_body
    %s16 = ssub.s32 %s11, 1
    %s17 = ssub.s32 %s11, 2
    %s18 = sadd.s32 %s11, 1
    %s19 = ssub.s32 %s11, %s18
    %p20 = scmp.eq.s32.totalorder %s19, 0
    %s22 = sadd.s32 %s21, 1
    %s23 = scalar_select %p20, %s21, %s22
    %p26 = pneg %p20
    %p27 = scmp.eq.s32.totalorder %s11, 1
    %p28 = por %p26, %p27
    %p29 = scmp.ne.s32.totalorder %s21, %s24
    %p30 = scmp.eq.s32.totalorder %s11, 0
    %p31 = por %p29, %p30
    %p32 = scmp.ne.s32.totalorder %s21, %s24
    %p33 = scmp.eq.s32.totalorder %s16, 1
    %p34 = por %p32, %p33
    %p35 = scmp.ne.s32.totalorder %s24, %s25
    %p36 = scmp.eq.s32.totalorder %s16, 0
    %p37 = por %p35, %p36
    %p38 = scmp.ne.s32.totalorder %s24, %s25
    %p39 = scmp.eq.s32.totalorder %s17, 1
    %p40 = por %p38, %p39
    %p42 = scmp.ne.s32.totalorder %s25, %s41
    %p43 = scmp.eq.s32.totalorder %s17, 0
    %p44 = por %p42, %p43
    %s46 = sadd.s32 %s45, 1
    %p49 = scmp.eq.s32.totalorder %s11, 1
    %p50 = scmp.ne.s32.totalorder %s45, %s47
    %p51 = scmp.eq.s32.totalorder %s11, 0
    %p52 = por %p50, %p51
    %p53 = scmp.ne.s32.totalorder %s45, %s47
    %p54 = scmp.eq.s32.totalorder %s16, 1
    %p55 = por %p53, %p54
    %p56 = scmp.ne.s32.totalorder %s47, %s48
    %p57 = scmp.eq.s32.totalorder %s16, 0
    %p58 = por %p56, %p57
    %p59 = scmp.ne.s32.totalorder %s47, %s48
    %p60 = scmp.eq.s32.totalorder %s17, 1
    %p61 = por %p59, %p60
    %p63 = scmp.ne.s32.totalorder %s48, %s62
    %p64 = scmp.eq.s32.totalorder %s17, 0
    %p65 = por %p63, %p64
    %s67 = sadd.s32 %s66, 1
    %p70 = scmp.eq.s32.totalorder %s11, 1
    %p71 = scmp.ne.s32.totalorder %s66, %s68
    %p72 = scmp.eq.s32.totalorder %s11, 0
    %p73 = por %p71, %p72
    %p74 = scmp.ne.s32.totalorder %s66, %s68
    %p75 = scmp.eq.s32.totalorder %s16, 1
    %p76 = por %p74, %p75
    %p77 = scmp.ne.s32.totalorder %s68, %s69
    %p78 = scmp.eq.s32.totalorder %s16, 0
    %p79 = por %p77, %p78
    %p80 = scmp.ne.s32.totalorder %s68, %s69
    %p81 = scmp.eq.s32.totalorder %s17, 1
    %p82 = por %p80, %p81
    %p84 = scmp.ne.s32.totalorder %s69, %s83
    %p85 = scmp.eq.s32.totalorder %s17, 0
    %p86 = por %p84, %p85
    %s88 = sadd.s32 %s87, 1
    %p91 = scmp.eq.s32.totalorder %s11, 1
    %p92 = scmp.ne.s32.totalorder %s87, %s89
    %p93 = scmp.eq.s32.totalorder %s11, 0
    %p94 = por %p92, %p93
    %p95 = scmp.ne.s32.totalorder %s87, %s89
    %p96 = scmp.eq.s32.totalorder %s16, 1
    %p97 = por %p95, %p96
    %p98 = scmp.ne.s32.totalorder %s89, %s90
    %p99 = scmp.eq.s32.totalorder %s16, 0
    %p100 = por %p98, %p99
    %p101 = scmp.ne.s32.totalorder %s89, %s90
    %p102 = scmp.eq.s32.totalorder %s17, 1
    %p103 = por %p101, %p102
    %p105 = scmp.ne.s32.totalorder %s90, %s104
    %p106 = scmp.eq.s32.totalorder %s17, 0
    %p107 = por %p105, %p106
    %s109 = sadd.s32 %s108, 1
    %p112 = scmp.eq.s32.totalorder %s11, 1
    %p113 = scmp.ne.s32.totalorder %s108, %s110
    %p114 = scmp.eq.s32.totalorder %s11, 0
    %p115 = por %p113, %p114
    %p116 = scmp.ne.s32.totalorder %s108, %s110
    %p117 = scmp.eq.s32.totalorder %s16, 1
    %p118 = por %p116, %p117
    %p119 = scmp.ne.s32.totalorder %s110, %s111
    %p120 = scmp.eq.s32.totalorder %s16, 0
    %p121 = por %p119, %p120
    %p122 = scmp.ne.s32.totalorder %s110, %s111
    %p123 = scmp.eq.s32.totalorder %s17, 1
    %p124 = por %p122, %p123
    %p126 = scmp.ne.s32.totalorder %s111, %s125
    %p127 = scmp.eq.s32.totalorder %s17, 0
    %p128 = por %p126, %p127
    %s129 = ssub.s32 %s11, %s18
    %p130 = scmp.eq.s32.totalorder %s129, 0
    %s132 = sadd.s32 %s131, 1
    %s133 = scalar_select %p130, %s131, %s132
    %p136 = pneg %p130
    %p137 = scmp.eq.s32.totalorder %s11, 1
    %p138 = por %p136, %p137
    %p139 = scmp.ne.s32.totalorder %s131, %s134
    %p140 = scmp.eq.s32.totalorder %s11, 0
    %p141 = por %p139, %p140
    %p142 = scmp.ne.s32.totalorder %s131, %s134
    %p143 = scmp.eq.s32.totalorder %s16, 1
    %p144 = por %p142, %p143
    %p145 = scmp.ne.s32.totalorder %s134, %s135
    %p146 = scmp.eq.s32.totalorder %s16, 0
    %p147 = por %p145, %p146
    %p148 = scmp.ne.s32.totalorder %s134, %s135
    %p149 = scmp.eq.s32.totalorder %s17, 1
    %p150 = por %p148, %p149
    %p152 = scmp.ne.s32.totalorder %s135, %s151
    %p153 = scmp.eq.s32.totalorder %s17, 0
    %p154 = por %p152, %p153
    %p155 = scmp.le.s32.totalorder 1, %s11
    %p156 = scmp.lt.s32.totalorder %s11, 3
    %p157 = pnand %p155, %p156
    %p158 = pneg %p157
    // Predicated region
    $region9: #{supervised_graphsage.5} parent=5 // pred_check
      _
    $region10: #{supervised_graphsage.5} parent=5 // pred_check_branch
      %160 = sbr.rel (%p157) target = $region12
    $region11: #{supervised_graphsage.5} parent=5 // pred_region
      %s161 = ssub.s32 %s11, 1
      // Predicated region
      $region13: #{supervised_graphsage.5} parent=11 // pred_check
        %p162 = pneg %p58
      $region14: #{supervised_graphsage.5} parent=11 // pred_check_branch
        %164 = sbr.rel (%p162) target = $region16
      $region15: #{supervised_graphsage.5} parent=11 // pred_region
        _
      $region16: #{supervised_graphsage.5} parent=11 // pred_fallthru
        _
      // Predicated region
      $region17: #{supervised_graphsage.5} parent=11 // pred_check
        %p165 = pneg %p79
      $region18: #{supervised_graphsage.5} parent=11 // pred_check_branch
        %167 = sbr.rel (%p165) target = $region20
      $region19: #{supervised_graphsage.5} parent=11 // pred_region
        _
      $region20: #{supervised_graphsage.5} parent=11 // pred_fallthru
        _
      // Predicated region
      $region21: #{supervised_graphsage.5} parent=11 // pred_check
        %p168 = pneg %p100
      $region22: #{supervised_graphsage.5} parent=11 // pred_check_branch
        %170 = sbr.rel (%p168) target = $region24
      $region23: #{supervised_graphsage.5} parent=11 // pred_region
        _
      $region24: #{supervised_graphsage.5} parent=11 // pred_fallthru
        _
      // Predicated region
      $region25: #{supervised_graphsage.5} parent=11 // pred_check
        %p171 = pneg %p121
      $region26: #{supervised_graphsage.5} parent=11 // pred_check_branch
        %173 = sbr.rel (%p171) target = $region28
      $region27: #{supervised_graphsage.5} parent=11 // pred_region
        _
      $region28: #{supervised_graphsage.5} parent=11 // pred_fallthru
        _
    $region12: #{supervised_graphsage.5} parent=5 // pred_fallthru
      _
    %p174 = scmp.lt.s32.totalorder %s11, 2
    // Predicated region
    $region29: #{supervised_graphsage.5} parent=5 // pred_check
      %p175 = pneg %p174
    $region30: #{supervised_graphsage.5} parent=5 // pred_check_branch
      %177 = sbr.rel (%p175) target = $region32
    $region31: #{supervised_graphsage.5} parent=5 // pred_region
      // Predicated region
      $region33: #{supervised_graphsage.5} parent=31 // pred_check
        %p178 = pneg %p31
      $region34: #{supervised_graphsage.5} parent=31 // pred_check_branch
        %180 = sbr.rel (%p178) target = $region36
      $region35: #{supervised_graphsage.5} parent=31 // pred_region
        %s181 = smul.u32 32, %s11
        %p182 = scmp.lt.s32.totalorder %s181, 63
        %s183 = scalar_select %p182, %s181, 63
        %s184 = smul.addr %s183, 4
        %s185 = smul.addr %s184, 4
        %s186 = scalar_lea.vmem %s0, %s185
        %s187 = smul.u32 32, %s11
      $region36: #{supervised_graphsage.5} parent=31 // pred_fallthru
        _
    $region32: #{supervised_graphsage.5} parent=5 // pred_fallthru
      _
    %p188 = scmp.le.s32.totalorder 1, %s11
    %p189 = scmp.lt.s32.totalorder %s11, 3
    %p190 = pnand %p188, %p189
    %p191 = pneg %p190
    // Predicated region
    $region37: #{supervised_graphsage.5} parent=5 // pred_check
      _
    $region38: #{supervised_graphsage.5} parent=5 // pred_check_branch
      %193 = sbr.rel (%p190) target = $region40
    $region39: #{supervised_graphsage.5} parent=5 // pred_region
      %s194 = ssub.s32 %s11, 1
      %s195 = smul.u32 32, %s16
      %p196 = scmp.lt.s32.totalorder %s195, 63
      %s197 = scalar_select %p196, %s195, 63
      %s198 = smul.addr %s197, 4
      %s199 = smul.addr %s198, 4
      %s200 = scalar_lea.vmem %s0, %s199
      %p201 = pneg %p37
      %p202 = pneg %p34
      %p203 = pneg %p58
      %p204 = pneg %p55
      %p205 = pneg %p79
      %p206 = pneg %p76
      %p207 = pneg %p100
      %p208 = pneg %p97
      %p209 = pneg %p121
      %p210 = pneg %p118
      %p211 = pneg %p147
      %p212 = pneg %p144
      %s213 = smul.u32 32, %s16
      %p214 = scmp.lt.s32.totalorder %s213, 63
      %s215 = scalar_select %p214, %s213, 63
      %s216 = smul.addr %s215, 8
      %s217 = scalar_lea.vmem %s5, %s216
      %s218 = smul.u32 32, %s16
      %p219 = scmp.lt.s32.totalorder %s218, 63
      %s220 = scalar_select %p219, %s218, 63
      %s221 = smul.addr %s220, 4
      %s222 = smul.addr %s221, 4
      %s223 = scalar_lea.vmem %s0, %s222
      %s224 = smul.u32 32, %s16
      %s225 = smul.u32 32, %s16
      %p226 = scmp.lt.s32.totalorder %s225, 63
      %s227 = scalar_select %p226, %s225, 63
      %s228 = smul.addr %s227, 8
      %s229 = scalar_lea.vmem %s5, %s228
      %s230 = smul.u32 32, %s16
      %v231 = vld [vmem:[%s223] sm:$0xff]
      %v232 = vld [vmem:[%s223 + $0x8] sm:$0xff]
      %v233 = vld [vmem:[%s223 + $0x10] sm:$0xff]
      %v234 = vld [vmem:[%s223 + $0x18] sm:$0xff]
      %v235 = vld [vmem:[%s223 + $0x20] sm:$0xff]
      %v236 = vld [vmem:[%s223 + $0x28] sm:$0xff]
      %v237 = vld [vmem:[%s223 + $0x30] sm:$0xff]
      %v238 = vld [vmem:[%s223 + $0x38] sm:$0xff]
      %v239 = vld [vmem:[%s223 + $0x40] sm:$0xff]
      %v240 = vld [vmem:[%s223 + $0x48] sm:$0xff]
      %v241 = vld [vmem:[%s223 + $0x50] sm:$0xff]
      %v242 = vld [vmem:[%s223 + $0x58] sm:$0xff]
      %v243 = vld [vmem:[%s223 + $0x60] sm:$0xff]
      %v244 = vld [vmem:[%s223 + $0x68] sm:$0xff]
      %v245 = vld [vmem:[%s223 + $0x70] sm:$0xff]
      %v246 = vld [vmem:[%s223 + $0x78] sm:$0xff]
      %v247 = vld [vmem:[%s223 + $0x80] sm:$0xff]
      %v248 = vld [vmem:[%s223 + $0x88] sm:$0xff]
      %v249 = vld [vmem:[%s223 + $0x90] sm:$0xff]
      %v250 = vld [vmem:[%s223 + $0x98] sm:$0xff]
      %v251 = vld [vmem:[%s223 + $0xa0] sm:$0xff]
      %v252 = vld [vmem:[%s223 + $0xa8] sm:$0xff]
      %v253 = vld [vmem:[%s223 + $0xb0] sm:$0xff]
      %v254 = vld [vmem:[%s223 + $0xb8] sm:$0xff]
      %v255 = vld [vmem:[%s223 + $0xc0] sm:$0xff]
      %v256 = vld [vmem:[%s223 + $0xc8] sm:$0xff]
      %v257 = vld [vmem:[%s223 + $0xd0] sm:$0xff]
      %v258 = vld [vmem:[%s223 + $0xd8] sm:$0xff]
      %v259 = vld [vmem:[%s223 + $0xe0] sm:$0xff]
      %v260 = vld [vmem:[%s223 + $0xe8] sm:$0xff]
      %v261 = vld [vmem:[%s223 + $0xf0] sm:$0xff]
      %v262 = vld [vmem:[%s223 + $0xf8] sm:$0xff]
      %v263 = vld [vmem:[%s223 + $0x100] sm:$0xff]
      %v264 = vld [vmem:[%s223 + $0x108] sm:$0xff]
      %v265 = vld [vmem:[%s223 + $0x110] sm:$0xff]
      %v266 = vld [vmem:[%s223 + $0x118] sm:$0xff]
      %v267 = vld [vmem:[%s223 + $0x120] sm:$0xff]
      %v268 = vld [vmem:[%s223 + $0x128] sm:$0xff]
      %v269 = vld [vmem:[%s223 + $0x130] sm:$0xff]
      %v270 = vld [vmem:[%s223 + $0x138] sm:$0xff]
      %v271 = vld [vmem:[%s223 + $0x140] sm:$0xff]
      %v272 = vld [vmem:[%s223 + $0x148] sm:$0xff]
      %v273 = vld [vmem:[%s223 + $0x150] sm:$0xff]
      %v274 = vld [vmem:[%s223 + $0x158] sm:$0xff]
      %v275 = vld [vmem:[%s223 + $0x160] sm:$0xff]
      %v276 = vld [vmem:[%s223 + $0x168] sm:$0xff]
      %v277 = vld [vmem:[%s223 + $0x170] sm:$0xff]
      %v278 = vld [vmem:[%s223 + $0x178] sm:$0xff]
      %v279 = vld [vmem:[%s223 + $0x180] sm:$0xff]
      %v280 = vld [vmem:[%s223 + $0x188] sm:$0xff]
      %v281 = vld [vmem:[%s223 + $0x190] sm:$0xff]
      %v282 = vld [vmem:[%s223 + $0x198] sm:$0xff]
      %v283 = vld [vmem:[%s223 + $0x1a0] sm:$0xff]
      %v284 = vld [vmem:[%s223 + $0x1a8] sm:$0xff]
      %v285 = vld [vmem:[%s223 + $0x1b0] sm:$0xff]
      %v286 = vld [vmem:[%s223 + $0x1b8] sm:$0xff]
      %v287 = vld [vmem:[%s223 + $0x1c0] sm:$0xff]
      %v288 = vld [vmem:[%s223 + $0x1c8] sm:$0xff]
      %v289 = vld [vmem:[%s223 + $0x1d0] sm:$0xff]
      %v290 = vld [vmem:[%s223 + $0x1d8] sm:$0xff]
      %v291 = vld [vmem:[%s223 + $0x1e0] sm:$0xff]
      %v292 = vld [vmem:[%s223 + $0x1e8] sm:$0xff]
      %v293 = vld [vmem:[%s223 + $0x1f0] sm:$0xff]
      %v294 = vld [vmem:[%s223 + $0x1f8] sm:$0xff]
      %v295 = vld [vmem:[%s1] sm:$0xf]
      %v296 = vld [vmem:[%s1 + $0x4] sm:$0xf]
      %v297 = vld [vmem:[%s1 + $0x8] sm:$0xf]
      %v298 = vld [vmem:[%s1 + $0xc] sm:$0xf]
      %v299 = vld [vmem:[%s1 + $0x10] sm:$0xf]
      %v300 = vld [vmem:[%s1 + $0x14] sm:$0xf]
      %v301 = vld [vmem:[%s1 + $0x18] sm:$0xf]
      %v302 = vld [vmem:[%s1 + $0x1c] sm:$0xf]
      %v303 = vld [vmem:[%s1 + $0x20] sm:$0xf]
      %v304 = vld [vmem:[%s1 + $0x24] sm:$0xf]
      %v305 = vld [vmem:[%s1 + $0x28] sm:$0xf]
      %v306 = vld [vmem:[%s1 + $0x2c] sm:$0xf]
      %v307 = vld [vmem:[%s1 + $0x30] sm:$0xf]
      %v308 = vld [vmem:[%s1 + $0x34] sm:$0xf]
      %v309 = vld [vmem:[%s1 + $0x38] sm:$0xf]
      %v310 = vld [vmem:[%s1 + $0x3c] sm:$0xf]
      %v311 = vld [vmem:[%s1 + $0x40] sm:$0xf]
      %v312 = vld [vmem:[%s1 + $0x44] sm:$0xf]
      %v313 = vld [vmem:[%s1 + $0x48] sm:$0xf]
      %v314 = vld [vmem:[%s1 + $0x4c] sm:$0xf]
      %v315 = vld [vmem:[%s1 + $0x50] sm:$0xf]
      %v316 = vld [vmem:[%s1 + $0x54] sm:$0xf]
      %v317 = vld [vmem:[%s1 + $0x58] sm:$0xf]
      %v318 = vld [vmem:[%s1 + $0x5c] sm:$0xf]
      %v319 = vld [vmem:[%s1 + $0x60] sm:$0xf]
      %v320 = vld [vmem:[%s1 + $0x64] sm:$0xf]
      %v321 = vld [vmem:[%s1 + $0x68] sm:$0xf]
      %v322 = vld [vmem:[%s1 + $0x6c] sm:$0xf]
      %v323 = vld [vmem:[%s1 + $0x70] sm:$0xf]
      %v324 = vld [vmem:[%s1 + $0x74] sm:$0xf]
      %v325 = vld [vmem:[%s1 + $0x78] sm:$0xf]
      %v326 = vld [vmem:[%s1 + $0x7c] sm:$0xf]
      %v327 = vld [vmem:[%s1 + $0x80] sm:$0xf]
      %v328 = vld [vmem:[%s1 + $0x84] sm:$0xf]
      %v329 = vld [vmem:[%s1 + $0x88] sm:$0xf]
      %v330 = vld [vmem:[%s1 + $0x8c] sm:$0xf]
      %v331 = vld [vmem:[%s1 + $0x90] sm:$0xf]
      %v332 = vld [vmem:[%s1 + $0x94] sm:$0xf]
      %v333 = vld [vmem:[%s1 + $0x98] sm:$0xf]
      %v334 = vld [vmem:[%s1 + $0x9c] sm:$0xf]
      %v335 = vld [vmem:[%s1 + $0xa0] sm:$0xf]
      %v336 = vld [vmem:[%s1 + $0xa4] sm:$0xf]
      %v337 = vld [vmem:[%s1 + $0xa8] sm:$0xf]
      %v338 = vld [vmem:[%s1 + $0xac] sm:$0xf]
      %v339 = vld [vmem:[%s1 + $0xb0] sm:$0xf]
      %v340 = vld [vmem:[%s1 + $0xb4] sm:$0xf]
      %v341 = vld [vmem:[%s1 + $0xb8] sm:$0xf]
      %v342 = vld [vmem:[%s1 + $0xbc] sm:$0xf]
      %v343 = vld [vmem:[%s1 + $0xc0] sm:$0xf]
      %v344 = vld [vmem:[%s1 + $0xc4] sm:$0xf]
      %v345 = vld [vmem:[%s1 + $0xc8] sm:$0xf]
      %v346 = vld [vmem:[%s1 + $0xcc] sm:$0xf]
      %v347 = vld [vmem:[%s1 + $0xd0] sm:$0xf]
      %v348 = vld [vmem:[%s1 + $0xd4] sm:$0xf]
      %v349 = vld [vmem:[%s1 + $0xd8] sm:$0xf]
      %v350 = vld [vmem:[%s1 + $0xdc] sm:$0xf]
      %v351 = vld [vmem:[%s1 + $0xe0] sm:$0xf]
      %v352 = vld [vmem:[%s1 + $0xe4] sm:$0xf]
      %v353 = vld [vmem:[%s1 + $0xe8] sm:$0xf]
      %v354 = vld [vmem:[%s1 + $0xec] sm:$0xf]
      %v355 = vld [vmem:[%s1 + $0xf0] sm:$0xf]
      %v356 = vld [vmem:[%s1 + $0xf4] sm:$0xf]
      %v357 = vld [vmem:[%s1 + $0xf8] sm:$0xf]
      %v358 = vld [vmem:[%s1 + $0xfc] sm:$0xf]
      %v359 = vld [vmem:[%s2] sm:$0x1]
      %v361 = vperm.slane %v359, 0
      %v427 = vunpack.c.l.b16 %v231
      %v428 = vunpack.c.h.b16 %v231
      %v429 = vunpack.c.l.b16 %v232
      %v430 = vunpack.c.h.b16 %v232
      %v431 = vunpack.c.l.b16 %v233
      %v432 = vunpack.c.h.b16 %v233
      %v433 = vunpack.c.l.b16 %v234
      %v434 = vunpack.c.h.b16 %v234
      %v435 = vunpack.c.l.b16 %v235
      %v436 = vunpack.c.h.b16 %v235
      %v437 = vunpack.c.l.b16 %v236
      %v438 = vunpack.c.h.b16 %v236
      %v439 = vunpack.c.l.b16 %v237
      %v440 = vunpack.c.h.b16 %v237
      %v441 = vunpack.c.l.b16 %v238
      %v442 = vunpack.c.h.b16 %v238
      %v443 = vunpack.c.l.b16 %v239
      %v444 = vunpack.c.h.b16 %v239
      %v445 = vunpack.c.l.b16 %v240
      %v446 = vunpack.c.h.b16 %v240
      %v447 = vunpack.c.l.b16 %v241
      %v448 = vunpack.c.h.b16 %v241
      %v449 = vunpack.c.l.b16 %v242
      %v450 = vunpack.c.h.b16 %v242
      %v451 = vunpack.c.l.b16 %v243
      %v452 = vunpack.c.h.b16 %v243
      %v453 = vunpack.c.l.b16 %v244
      %v454 = vunpack.c.h.b16 %v244
      %v455 = vunpack.c.l.b16 %v245
      %v456 = vunpack.c.h.b16 %v245
      %v457 = vunpack.c.l.b16 %v246
      %v458 = vunpack.c.h.b16 %v246
      %v459 = vunpack.c.l.b16 %v247
      %v460 = vunpack.c.h.b16 %v247
      %v461 = vunpack.c.l.b16 %v248
      %v462 = vunpack.c.h.b16 %v248
      %v463 = vunpack.c.l.b16 %v249
      %v464 = vunpack.c.h.b16 %v249
      %v465 = vunpack.c.l.b16 %v250
      %v466 = vunpack.c.h.b16 %v250
      %v467 = vunpack.c.l.b16 %v251
      %v468 = vunpack.c.h.b16 %v251
      %v469 = vunpack.c.l.b16 %v252
      %v470 = vunpack.c.h.b16 %v252
      %v471 = vunpack.c.l.b16 %v253
      %v472 = vunpack.c.h.b16 %v253
      %v473 = vunpack.c.l.b16 %v254
      %v474 = vunpack.c.h.b16 %v254
      %v475 = vunpack.c.l.b16 %v255
      %v476 = vunpack.c.h.b16 %v255
      %v477 = vunpack.c.l.b16 %v256
      %v478 = vunpack.c.h.b16 %v256
      %v479 = vunpack.c.l.b16 %v257
      %v480 = vunpack.c.h.b16 %v257
      %v481 = vunpack.c.l.b16 %v258
      %v482 = vunpack.c.h.b16 %v258
      %v483 = vunpack.c.l.b16 %v259
      %v484 = vunpack.c.h.b16 %v259
      %v485 = vunpack.c.l.b16 %v260
      %v486 = vunpack.c.h.b16 %v260
      %v487 = vunpack.c.l.b16 %v261
      %v488 = vunpack.c.h.b16 %v261
      %v489 = vunpack.c.l.b16 %v262
      %v490 = vunpack.c.h.b16 %v262
      %v491 = vunpack.c.l.b16 %v263
      %v492 = vunpack.c.h.b16 %v263
      %v493 = vunpack.c.l.b16 %v264
      %v494 = vunpack.c.h.b16 %v264
      %v495 = vunpack.c.l.b16 %v265
      %v496 = vunpack.c.h.b16 %v265
      %v497 = vunpack.c.l.b16 %v266
      %v498 = vunpack.c.h.b16 %v266
      %v499 = vunpack.c.l.b16 %v267
      %v500 = vunpack.c.h.b16 %v267
      %v501 = vunpack.c.l.b16 %v268
      %v502 = vunpack.c.h.b16 %v268
      %v503 = vunpack.c.l.b16 %v269
      %v504 = vunpack.c.h.b16 %v269
      %v505 = vunpack.c.l.b16 %v270
      %v506 = vunpack.c.h.b16 %v270
      %v507 = vunpack.c.l.b16 %v271
      %v508 = vunpack.c.h.b16 %v271
      %v509 = vunpack.c.l.b16 %v272
      %v510 = vunpack.c.h.b16 %v272
      %v511 = vunpack.c.l.b16 %v273
      %v512 = vunpack.c.h.b16 %v273
      %v513 = vunpack.c.l.b16 %v274
      %v514 = vunpack.c.h.b16 %v274
      %v515 = vunpack.c.l.b16 %v275
      %v516 = vunpack.c.h.b16 %v275
      %v517 = vunpack.c.l.b16 %v276
      %v518 = vunpack.c.h.b16 %v276
      %v519 = vunpack.c.l.b16 %v277
      %v520 = vunpack.c.h.b16 %v277
      %v521 = vunpack.c.l.b16 %v278
      %v522 = vunpack.c.h.b16 %v278
      %v523 = vunpack.c.l.b16 %v279
      %v524 = vunpack.c.h.b16 %v279
      %v525 = vunpack.c.l.b16 %v280
      %v526 = vunpack.c.h.b16 %v280
      %v527 = vunpack.c.l.b16 %v281
      %v528 = vunpack.c.h.b16 %v281
      %v529 = vunpack.c.l.b16 %v282
      %v530 = vunpack.c.h.b16 %v282
      %v531 = vunpack.c.l.b16 %v283
      %v532 = vunpack.c.h.b16 %v283
      %v533 = vunpack.c.l.b16 %v284
      %v534 = vunpack.c.h.b16 %v284
      %v535 = vunpack.c.l.b16 %v285
      %v536 = vunpack.c.h.b16 %v285
      %v537 = vunpack.c.l.b16 %v286
      %v538 = vunpack.c.h.b16 %v286
      %v539 = vunpack.c.l.b16 %v287
      %v540 = vunpack.c.h.b16 %v287
      %v541 = vunpack.c.l.b16 %v288
      %v542 = vunpack.c.h.b16 %v288
      %v543 = vunpack.c.l.b16 %v289
      %v544 = vunpack.c.h.b16 %v289
      %v545 = vunpack.c.l.b16 %v290
      %v546 = vunpack.c.h.b16 %v290
      %v547 = vunpack.c.l.b16 %v291
      %v548 = vunpack.c.h.b16 %v291
      %v549 = vunpack.c.l.b16 %v292
      %v550 = vunpack.c.h.b16 %v292
      %v551 = vunpack.c.l.b16 %v293
      %v552 = vunpack.c.h.b16 %v293
      %v553 = vunpack.c.l.b16 %v294
      %v554 = vunpack.c.h.b16 %v294
      %v555 = vpack.c.b16 %v431, %v427
      %v556 = vpack.c.b16 %v432, %v428
      %v557 = vpack.c.b16 %v433, %v429
      %v558 = vpack.c.b16 %v434, %v430
      %v559 = vpack.c.b16 %v439, %v435
      %v560 = vpack.c.b16 %v440, %v436
      %v561 = vpack.c.b16 %v441, %v437
      %v562 = vpack.c.b16 %v442, %v438
      %v563 = vpack.c.b16 %v447, %v443
      %v564 = vpack.c.b16 %v448, %v444
      %v565 = vpack.c.b16 %v449, %v445
      %v566 = vpack.c.b16 %v450, %v446
      %v567 = vpack.c.b16 %v455, %v451
      %v568 = vpack.c.b16 %v456, %v452
      %v569 = vpack.c.b16 %v457, %v453
      %v570 = vpack.c.b16 %v458, %v454
      %v571 = vpack.c.b16 %v463, %v459
      %v572 = vpack.c.b16 %v464, %v460
      %v573 = vpack.c.b16 %v465, %v461
      %v574 = vpack.c.b16 %v466, %v462
      %v575 = vpack.c.b16 %v471, %v467
      %v576 = vpack.c.b16 %v472, %v468
      %v577 = vpack.c.b16 %v473, %v469
      %v578 = vpack.c.b16 %v474, %v470
      %v579 = vpack.c.b16 %v479, %v475
      %v580 = vpack.c.b16 %v480, %v476
      %v581 = vpack.c.b16 %v481, %v477
      %v582 = vpack.c.b16 %v482, %v478
      %v583 = vpack.c.b16 %v487, %v483
      %v584 = vpack.c.b16 %v488, %v484
      %v585 = vpack.c.b16 %v489, %v485
      %v586 = vpack.c.b16 %v490, %v486
      %v587 = vpack.c.b16 %v495, %v491
      %v588 = vpack.c.b16 %v496, %v492
      %v589 = vpack.c.b16 %v497, %v493
      %v590 = vpack.c.b16 %v498, %v494
      %v591 = vpack.c.b16 %v503, %v499
      %v592 = vpack.c.b16 %v504, %v500
      %v593 = vpack.c.b16 %v505, %v501
      %v594 = vpack.c.b16 %v506, %v502
      %v595 = vpack.c.b16 %v511, %v507
      %v596 = vpack.c.b16 %v512, %v508
      %v597 = vpack.c.b16 %v513, %v509
      %v598 = vpack.c.b16 %v514, %v510
      %v599 = vpack.c.b16 %v519, %v515
      %v600 = vpack.c.b16 %v520, %v516
      %v601 = vpack.c.b16 %v521, %v517
      %v602 = vpack.c.b16 %v522, %v518
      %v603 = vpack.c.b16 %v527, %v523
      %v604 = vpack.c.b16 %v528, %v524
      %v605 = vpack.c.b16 %v529, %v525
      %v606 = vpack.c.b16 %v530, %v526
      %v607 = vpack.c.b16 %v535, %v531
      %v608 = vpack.c.b16 %v536, %v532
      %v609 = vpack.c.b16 %v537, %v533
      %v610 = vpack.c.b16 %v538, %v534
      %v611 = vpack.c.b16 %v543, %v539
      %v612 = vpack.c.b16 %v544, %v540
      %v613 = vpack.c.b16 %v545, %v541
      %v614 = vpack.c.b16 %v546, %v542
      %v615 = vpack.c.b16 %v551, %v547
      %v616 = vpack.c.b16 %v552, %v548
      %v617 = vpack.c.b16 %v553, %v549
      %v618 = vpack.c.b16 %v554, %v550
      %v747 = vunpack.c.l.b16 %v295
      %v748 = vunpack.c.l.b16 %v296
      %v749 = vunpack.c.l.b16 %v297
      %v750 = vunpack.c.l.b16 %v298
      %v751 = vunpack.c.l.b16 %v299
      %v752 = vunpack.c.l.b16 %v300
      %v753 = vunpack.c.l.b16 %v301
      %v754 = vunpack.c.l.b16 %v302
      %v755 = vunpack.c.l.b16 %v303
      %v756 = vunpack.c.l.b16 %v304
      %v757 = vunpack.c.l.b16 %v305
      %v758 = vunpack.c.l.b16 %v306
      %v759 = vunpack.c.l.b16 %v307
      %v760 = vunpack.c.l.b16 %v308
      %v761 = vunpack.c.l.b16 %v309
      %v762 = vunpack.c.l.b16 %v310
      %v763 = vunpack.c.l.b16 %v311
      %v764 = vunpack.c.l.b16 %v312
      %v765 = vunpack.c.l.b16 %v313
      %v766 = vunpack.c.l.b16 %v314
      %v767 = vunpack.c.l.b16 %v315
      %v768 = vunpack.c.l.b16 %v316
      %v769 = vunpack.c.l.b16 %v317
      %v770 = vunpack.c.l.b16 %v318
      %v771 = vunpack.c.l.b16 %v319
      %v772 = vunpack.c.l.b16 %v320
      %v773 = vunpack.c.l.b16 %v321
      %v774 = vunpack.c.l.b16 %v322
      %v775 = vunpack.c.l.b16 %v323
      %v776 = vunpack.c.l.b16 %v324
      %v777 = vunpack.c.l.b16 %v325
      %v778 = vunpack.c.l.b16 %v326
      %v779 = vunpack.c.l.b16 %v327
      %v780 = vunpack.c.l.b16 %v328
      %v781 = vunpack.c.l.b16 %v329
      %v782 = vunpack.c.l.b16 %v330
      %v783 = vunpack.c.l.b16 %v331
      %v784 = vunpack.c.l.b16 %v332
      %v785 = vunpack.c.l.b16 %v333
      %v786 = vunpack.c.l.b16 %v334
      %v787 = vunpack.c.l.b16 %v335
      %v788 = vunpack.c.l.b16 %v336
      %v789 = vunpack.c.l.b16 %v337
      %v790 = vunpack.c.l.b16 %v338
      %v791 = vunpack.c.l.b16 %v339
      %v792 = vunpack.c.l.b16 %v340
      %v793 = vunpack.c.l.b16 %v341
      %v794 = vunpack.c.l.b16 %v342
      %v795 = vunpack.c.l.b16 %v343
      %v796 = vunpack.c.l.b16 %v344
      %v797 = vunpack.c.l.b16 %v345
      %v798 = vunpack.c.l.b16 %v346
      %v799 = vunpack.c.l.b16 %v347
      %v800 = vunpack.c.l.b16 %v348
      %v801 = vunpack.c.l.b16 %v349
      %v802 = vunpack.c.l.b16 %v350
      %v803 = vunpack.c.l.b16 %v351
      %v804 = vunpack.c.l.b16 %v352
      %v805 = vunpack.c.l.b16 %v353
      %v806 = vunpack.c.l.b16 %v354
      %v807 = vunpack.c.l.b16 %v355
      %v808 = vunpack.c.l.b16 %v356
      %v809 = vunpack.c.l.b16 %v357
      %v810 = vunpack.c.l.b16 %v358
      %v811 = vpack.c.b16 %v748, %v747
      %v812 = vpack.c.b16 %v750, %v749
      %v813 = vpack.c.b16 %v752, %v751
      %v814 = vpack.c.b16 %v754, %v753
      %v815 = vpack.c.b16 %v756, %v755
      %v816 = vpack.c.b16 %v758, %v757
      %v817 = vpack.c.b16 %v760, %v759
      %v818 = vpack.c.b16 %v762, %v761
      %v819 = vpack.c.b16 %v764, %v763
      %v820 = vpack.c.b16 %v766, %v765
      %v821 = vpack.c.b16 %v768, %v767
      %v822 = vpack.c.b16 %v770, %v769
      %v823 = vpack.c.b16 %v772, %v771
      %v824 = vpack.c.b16 %v774, %v773
      %v825 = vpack.c.b16 %v776, %v775
      %v826 = vpack.c.b16 %v778, %v777
      %v827 = vpack.c.b16 %v780, %v779
      %v828 = vpack.c.b16 %v782, %v781
      %v829 = vpack.c.b16 %v784, %v783
      %v830 = vpack.c.b16 %v786, %v785
      %v831 = vpack.c.b16 %v788, %v787
      %v832 = vpack.c.b16 %v790, %v789
      %v833 = vpack.c.b16 %v792, %v791
      %v834 = vpack.c.b16 %v794, %v793
      %v835 = vpack.c.b16 %v796, %v795
      %v836 = vpack.c.b16 %v798, %v797
      %v837 = vpack.c.b16 %v800, %v799
      %v838 = vpack.c.b16 %v802, %v801
      %v839 = vpack.c.b16 %v804, %v803
      %v840 = vpack.c.b16 %v806, %v805
      %v841 = vpack.c.b16 %v808, %v807
      %v842 = vpack.c.b16 %v810, %v809
      %875 = vmatpush.bf16.msra.mxu0 %v818
      %876 = vmatpush.bf16.msra.mxu0 %v817
      %877 = vmatpush.bf16.msra.mxu0 %v816
      %878 = vmatpush.bf16.msra.mxu0 %v815
      %879 = vmatpush.bf16.msra.mxu0 %v814
      %880 = vmatpush.bf16.msra.mxu0 %v813
      %881 = vmatpush.bf16.msra.mxu0 %v812
      %882 = vmatpush.bf16.msra.mxu0 %v811
      %883 = vmatmul.bf16.gmra.mxu0 %v555
      %v884 = vpop.f32.mrf.mxu0
      %v885 = vadd.f32 %v361, %v884
      %v886 = vpop.f32.mrf.mxu0
      %v887 = vadd.f32 %v361, %v886
      %888 = vmatmul.bf16.gmra.mxu0 %v559
      %v889 = vpop.f32.mrf.mxu0
      %v890 = vadd.f32 %v361, %v889
      %v891 = vpop.f32.mrf.mxu0
      %v892 = vadd.f32 %v361, %v891
      %893 = vmatmul.bf16.gmra.mxu0 %v563
      %v894 = vpop.f32.mrf.mxu0
      %v895 = vadd.f32 %v361, %v894
      %v896 = vpop.f32.mrf.mxu0
      %v897 = vadd.f32 %v361, %v896
      %898 = vmatmul.bf16.gmra.mxu0 %v567
      %v899 = vpop.f32.mrf.mxu0
      %v900 = vadd.f32 %v361, %v899
      %v901 = vpop.f32.mrf.mxu0
      %v902 = vadd.f32 %v361, %v901
      %903 = vmatmul.bf16.gmra.mxu0 %v571
      %v904 = vpop.f32.mrf.mxu0
      %v905 = vadd.f32 %v361, %v904
      %v906 = vpop.f32.mrf.mxu0
      %v907 = vadd.f32 %v361, %v906
      %908 = vmatmul.bf16.gmra.mxu0 %v575
      %v909 = vpop.f32.mrf.mxu0
      %v910 = vadd.f32 %v361, %v909
      %v911 = vpop.f32.mrf.mxu0
      %v912 = vadd.f32 %v361, %v911
      %913 = vmatmul.bf16.gmra.mxu0 %v579
      %v914 = vpop.f32.mrf.mxu0
      %v915 = vadd.f32 %v361, %v914
      %v916 = vpop.f32.mrf.mxu0
      %v917 = vadd.f32 %v361, %v916
      %918 = vmatmul.bf16.gmra.mxu0 %v583
      %v919 = vpop.f32.mrf.mxu0
      %v920 = vadd.f32 %v361, %v919
      %v921 = vpop.f32.mrf.mxu0
      %v922 = vadd.f32 %v361, %v921
      %923 = vmatmul.bf16.gmra.mxu0 %v587
      %v924 = vpop.f32.mrf.mxu0
      %v925 = vadd.f32 %v361, %v924
      %v926 = vpop.f32.mrf.mxu0
      %v927 = vadd.f32 %v361, %v926
      %928 = vmatmul.bf16.gmra.mxu0 %v591
      %v929 = vpop.f32.mrf.mxu0
      %v930 = vadd.f32 %v361, %v929
      %v931 = vpop.f32.mrf.mxu0
      %v932 = vadd.f32 %v361, %v931
      %933 = vmatmul.bf16.gmra.mxu0 %v595
      %v934 = vpop.f32.mrf.mxu0
      %v935 = vadd.f32 %v361, %v934
      %v936 = vpop.f32.mrf.mxu0
      %v937 = vadd.f32 %v361, %v936
      %938 = vmatmul.bf16.gmra.mxu0 %v599
      %v939 = vpop.f32.mrf.mxu0
      %v940 = vadd.f32 %v361, %v939
      %v941 = vpop.f32.mrf.mxu0
      %v942 = vadd.f32 %v361, %v941
      %943 = vmatmul.bf16.gmra.mxu0 %v603
      %v944 = vpop.f32.mrf.mxu0
      %v945 = vadd.f32 %v361, %v944
      %v946 = vpop.f32.mrf.mxu0
      %v947 = vadd.f32 %v361, %v946
      %948 = vmatmul.bf16.gmra.mxu0 %v607
      %v949 = vpop.f32.mrf.mxu0
      %v950 = vadd.f32 %v361, %v949
      %v951 = vpop.f32.mrf.mxu0
      %v952 = vadd.f32 %v361, %v951
      %953 = vmatmul.bf16.gmra.mxu0 %v611
      %v954 = vpop.f32.mrf.mxu0
      %v955 = vadd.f32 %v361, %v954
      %v956 = vpop.f32.mrf.mxu0
      %v957 = vadd.f32 %v361, %v956
      %958 = vmatmul.bf16.gmra.mxu0 %v615
      %v959 = vpop.f32.mrf.mxu0
      %v960 = vadd.f32 %v361, %v959
      %v961 = vpop.f32.mrf.mxu0
      %v962 = vadd.f32 %v361, %v961
      %963 = vdwg.mxu0
      %964 = vmatpush.bf16.msra.mxu0 %v826
      %965 = vmatpush.bf16.msra.mxu0 %v825
      %966 = vmatpush.bf16.msra.mxu0 %v824
      %967 = vmatpush.bf16.msra.mxu0 %v823
      %968 = vmatpush.bf16.msra.mxu0 %v822
      %969 = vmatpush.bf16.msra.mxu0 %v821
      %970 = vmatpush.bf16.msra.mxu0 %v820
      %971 = vmatpush.bf16.msra.mxu0 %v819
      %972 = vmatmul.bf16.gmra.mxu0 %v556
      %v973 = vpop.f32.mrf.mxu0
      %v974 = vadd.f32 %v885, %v973
      %v975 = vpop.f32.mrf.mxu0
      %v976 = vadd.f32 %v887, %v975
      %977 = vmatmul.bf16.gmra.mxu0 %v560
      %v978 = vpop.f32.mrf.mxu0
      %v979 = vadd.f32 %v890, %v978
      %v980 = vpop.f32.mrf.mxu0
      %v981 = vadd.f32 %v892, %v980
      %982 = vmatmul.bf16.gmra.mxu0 %v564
      %v983 = vpop.f32.mrf.mxu0
      %v984 = vadd.f32 %v895, %v983
      %v985 = vpop.f32.mrf.mxu0
      %v986 = vadd.f32 %v897, %v985
      %987 = vmatmul.bf16.gmra.mxu0 %v568
      %v988 = vpop.f32.mrf.mxu0
      %v989 = vadd.f32 %v900, %v988
      %v990 = vpop.f32.mrf.mxu0
      %v991 = vadd.f32 %v902, %v990
      %992 = vmatmul.bf16.gmra.mxu0 %v572
      %v993 = vpop.f32.mrf.mxu0
      %v994 = vadd.f32 %v905, %v993
      %v995 = vpop.f32.mrf.mxu0
      %v996 = vadd.f32 %v907, %v995
      %997 = vmatmul.bf16.gmra.mxu0 %v576
      %v998 = vpop.f32.mrf.mxu0
      %v999 = vadd.f32 %v910, %v998
      %v1000 = vpop.f32.mrf.mxu0
      %v1001 = vadd.f32 %v912, %v1000
      %1002 = vmatmul.bf16.gmra.mxu0 %v580
      %v1003 = vpop.f32.mrf.mxu0
      %v1004 = vadd.f32 %v915, %v1003
      %v1005 = vpop.f32.mrf.mxu0
      %v1006 = vadd.f32 %v917, %v1005
      %1007 = vmatmul.bf16.gmra.mxu0 %v584
      %v1008 = vpop.f32.mrf.mxu0
      %v1009 = vadd.f32 %v920, %v1008
      %v1010 = vpop.f32.mrf.mxu0
      %v1011 = vadd.f32 %v922, %v1010
      %1012 = vmatmul.bf16.gmra.mxu0 %v588
      %v1013 = vpop.f32.mrf.mxu0
      %v1014 = vadd.f32 %v925, %v1013
      %v1015 = vpop.f32.mrf.mxu0
      %v1016 = vadd.f32 %v927, %v1015
      %1017 = vmatmul.bf16.gmra.mxu0 %v592
      %v1018 = vpop.f32.mrf.mxu0
      %v1019 = vadd.f32 %v930, %v1018
      %v1020 = vpop.f32.mrf.mxu0
      %v1021 = vadd.f32 %v932, %v1020
      %1022 = vmatmul.bf16.gmra.mxu0 %v596
      %v1023 = vpop.f32.mrf.mxu0
      %v1024 = vadd.f32 %v935, %v1023
      %v1025 = vpop.f32.mrf.mxu0
      %v1026 = vadd.f32 %v937, %v1025
      %1027 = vmatmul.bf16.gmra.mxu0 %v600
      %v1028 = vpop.f32.mrf.mxu0
      %v1029 = vadd.f32 %v940, %v1028
      %v1030 = vpop.f32.mrf.mxu0
      %v1031 = vadd.f32 %v942, %v1030
      %1032 = vmatmul.bf16.gmra.mxu0 %v604
      %v1033 = vpop.f32.mrf.mxu0
      %v1034 = vadd.f32 %v945, %v1033
      %v1035 = vpop.f32.mrf.mxu0
      %v1036 = vadd.f32 %v947, %v1035
      %1037 = vmatmul.bf16.gmra.mxu0 %v608
      %v1038 = vpop.f32.mrf.mxu0
      %v1039 = vadd.f32 %v950, %v1038
      %v1040 = vpop.f32.mrf.mxu0
      %v1041 = vadd.f32 %v952, %v1040
      %1042 = vmatmul.bf16.gmra.mxu0 %v612
      %v1043 = vpop.f32.mrf.mxu0
      %v1044 = vadd.f32 %v955, %v1043
      %v1045 = vpop.f32.mrf.mxu0
      %v1046 = vadd.f32 %v957, %v1045
      %1047 = vmatmul.bf16.gmra.mxu0 %v616
      %v1048 = vpop.f32.mrf.mxu0
      %v1049 = vadd.f32 %v960, %v1048
      %v1050 = vpop.f32.mrf.mxu0
      %v1051 = vadd.f32 %v962, %v1050
      %1052 = vdwg.mxu0
      %1053 = vmatpush.bf16.msra.mxu0 %v834
      %1054 = vmatpush.bf16.msra.mxu0 %v833
      %1055 = vmatpush.bf16.msra.mxu0 %v832
      %1056 = vmatpush.bf16.msra.mxu0 %v831
      %1057 = vmatpush.bf16.msra.mxu0 %v830
      %1058 = vmatpush.bf16.msra.mxu0 %v829
      %1059 = vmatpush.bf16.msra.mxu0 %v828
      %1060 = vmatpush.bf16.msra.mxu0 %v827
      %1061 = vmatmul.bf16.gmra.mxu0 %v557
      %v1062 = vpop.f32.mrf.mxu0
      %v1063 = vadd.f32 %v974, %v1062
      %v1064 = vpop.f32.mrf.mxu0
      %v1065 = vadd.f32 %v976, %v1064
      %1066 = vmatmul.bf16.gmra.mxu0 %v561
      %v1067 = vpop.f32.mrf.mxu0
      %v1068 = vadd.f32 %v979, %v1067
      %v1069 = vpop.f32.mrf.mxu0
      %v1070 = vadd.f32 %v981, %v1069
      %1071 = vmatmul.bf16.gmra.mxu0 %v565
      %v1072 = vpop.f32.mrf.mxu0
      %v1073 = vadd.f32 %v984, %v1072
      %v1074 = vpop.f32.mrf.mxu0
      %v1075 = vadd.f32 %v986, %v1074
      %1076 = vmatmul.bf16.gmra.mxu0 %v569
      %v1077 = vpop.f32.mrf.mxu0
      %v1078 = vadd.f32 %v989, %v1077
      %v1079 = vpop.f32.mrf.mxu0
      %v1080 = vadd.f32 %v991, %v1079
      %1081 = vmatmul.bf16.gmra.mxu0 %v573
      %v1082 = vpop.f32.mrf.mxu0
      %v1083 = vadd.f32 %v994, %v1082
      %v1084 = vpop.f32.mrf.mxu0
      %v1085 = vadd.f32 %v996, %v1084
      %1086 = vmatmul.bf16.gmra.mxu0 %v577
      %v1087 = vpop.f32.mrf.mxu0
      %v1088 = vadd.f32 %v999, %v1087
      %v1089 = vpop.f32.mrf.mxu0
      %v1090 = vadd.f32 %v1001, %v1089
      %1091 = vmatmul.bf16.gmra.mxu0 %v581
      %v1092 = vpop.f32.mrf.mxu0
      %v1093 = vadd.f32 %v1004, %v1092
      %v1094 = vpop.f32.mrf.mxu0
      %v1095 = vadd.f32 %v1006, %v1094
      %1096 = vmatmul.bf16.gmra.mxu0 %v585
      %v1097 = vpop.f32.mrf.mxu0
      %v1098 = vadd.f32 %v1009, %v1097
      %v1099 = vpop.f32.mrf.mxu0
      %v1100 = vadd.f32 %v1011, %v1099
      %1101 = vmatmul.bf16.gmra.mxu0 %v589
      %v1102 = vpop.f32.mrf.mxu0
      %v1103 = vadd.f32 %v1014, %v1102
      %v1104 = vpop.f32.mrf.mxu0
      %v1105 = vadd.f32 %v1016, %v1104
      %1106 = vmatmul.bf16.gmra.mxu0 %v593
      %v1107 = vpop.f32.mrf.mxu0
      %v1108 = vadd.f32 %v1019, %v1107
      %v1109 = vpop.f32.mrf.mxu0
      %v1110 = vadd.f32 %v1021, %v1109
      %1111 = vmatmul.bf16.gmra.mxu0 %v597
      %v1112 = vpop.f32.mrf.mxu0
      %v1113 = vadd.f32 %v1024, %v1112
      %v1114 = vpop.f32.mrf.mxu0
      %v1115 = vadd.f32 %v1026, %v1114
      %1116 = vmatmul.bf16.gmra.mxu0 %v601
      %v1117 = vpop.f32.mrf.mxu0
      %v1118 = vadd.f32 %v1029, %v1117
      %v1119 = vpop.f32.mrf.mxu0
      %v1120 = vadd.f32 %v1031, %v1119
      %1121 = vmatmul.bf16.gmra.mxu0 %v605
      %v1122 = vpop.f32.mrf.mxu0
      %v1123 = vadd.f32 %v1034, %v1122
      %v1124 = vpop.f32.mrf.mxu0
      %v1125 = vadd.f32 %v1036, %v1124
      %1126 = vmatmul.bf16.gmra.mxu0 %v609
      %v1127 = vpop.f32.mrf.mxu0
      %v1128 = vadd.f32 %v1039, %v1127
      %v1129 = vpop.f32.mrf.mxu0
      %v1130 = vadd.f32 %v1041, %v1129
      %1131 = vmatmul.bf16.gmra.mxu0 %v613
      %v1132 = vpop.f32.mrf.mxu0
      %v1133 = vadd.f32 %v1044, %v1132
      %v1134 = vpop.f32.mrf.mxu0
      %v1135 = vadd.f32 %v1046, %v1134
      %1136 = vmatmul.bf16.gmra.mxu0 %v617
      %v1137 = vpop.f32.mrf.mxu0
      %v1138 = vadd.f32 %v1049, %v1137
      %v1139 = vpop.f32.mrf.mxu0
      %v1140 = vadd.f32 %v1051, %v1139
      %1141 = vdwg.mxu0
      %1142 = vmatpush.bf16.msra.mxu0 %v842
      %1143 = vmatpush.bf16.msra.mxu0 %v841
      %1144 = vmatpush.bf16.msra.mxu0 %v840
      %1145 = vmatpush.bf16.msra.mxu0 %v839
      %1146 = vmatpush.bf16.msra.mxu0 %v838
      %1147 = vmatpush.bf16.msra.mxu0 %v837
      %1148 = vmatpush.bf16.msra.mxu0 %v836
      %1149 = vmatpush.bf16.msra.mxu0 %v835
      %1150 = vmatmul.bf16.gmra.mxu0 %v558
      %v1151 = vpop.f32.mrf.mxu0
      %v1152 = vadd.f32 %v1063, %v1151
      %v1153 = vpop.f32.mrf.mxu0
      %v1154 = vadd.f32 %v1065, %v1153
      %1155 = vmatmul.bf16.gmra.mxu0 %v562
      %v1156 = vpop.f32.mrf.mxu0
      %v1157 = vadd.f32 %v1068, %v1156
      %v1158 = vpop.f32.mrf.mxu0
      %v1159 = vadd.f32 %v1070, %v1158
      %1160 = vmatmul.bf16.gmra.mxu0 %v566
      %v1161 = vpop.f32.mrf.mxu0
      %v1162 = vadd.f32 %v1073, %v1161
      %v1163 = vpop.f32.mrf.mxu0
      %v1164 = vadd.f32 %v1075, %v1163
      %1165 = vmatmul.bf16.gmra.mxu0 %v570
      %v1166 = vpop.f32.mrf.mxu0
      %v1167 = vadd.f32 %v1078, %v1166
      %v1168 = vpop.f32.mrf.mxu0
      %v1169 = vadd.f32 %v1080, %v1168
      %1170 = vmatmul.bf16.gmra.mxu0 %v574
      %v1171 = vpop.f32.mrf.mxu0
      %v1172 = vadd.f32 %v1083, %v1171
      %v1173 = vpop.f32.mrf.mxu0
      %v1174 = vadd.f32 %v1085, %v1173
      %1175 = vmatmul.bf16.gmra.mxu0 %v578
      %v1176 = vpop.f32.mrf.mxu0
      %v1177 = vadd.f32 %v1088, %v1176
      %v1178 = vpop.f32.mrf.mxu0
      %v1179 = vadd.f32 %v1090, %v1178
      %1180 = vmatmul.bf16.gmra.mxu0 %v582
      %v1181 = vpop.f32.mrf.mxu0
      %v1182 = vadd.f32 %v1093, %v1181
      %v1183 = vpop.f32.mrf.mxu0
      %v1184 = vadd.f32 %v1095, %v1183
      %1185 = vmatmul.bf16.gmra.mxu0 %v586
      %v1186 = vpop.f32.mrf.mxu0
      %v1187 = vadd.f32 %v1098, %v1186
      %v1188 = vpop.f32.mrf.mxu0
      %v1189 = vadd.f32 %v1100, %v1188
      %1190 = vmatmul.bf16.gmra.mxu0 %v590
      %v1191 = vpop.f32.mrf.mxu0
      %v1192 = vadd.f32 %v1103, %v1191
      %v1193 = vpop.f32.mrf.mxu0
      %v1194 = vadd.f32 %v1105, %v1193
      %1195 = vmatmul.bf16.gmra.mxu0 %v594
      %v1196 = vpop.f32.mrf.mxu0
      %v1197 = vadd.f32 %v1108, %v1196
      %v1198 = vpop.f32.mrf.mxu0
      %v1199 = vadd.f32 %v1110, %v1198
      %1200 = vmatmul.bf16.gmra.mxu0 %v598
      %v1201 = vpop.f32.mrf.mxu0
      %v1202 = vadd.f32 %v1113, %v1201
      %v1203 = vpop.f32.mrf.mxu0
      %v1204 = vadd.f32 %v1115, %v1203
      %1205 = vmatmul.bf16.gmra.mxu0 %v602
      %v1206 = vpop.f32.mrf.mxu0
      %v1207 = vadd.f32 %v1118, %v1206
      %v1208 = vpop.f32.mrf.mxu0
      %v1209 = vadd.f32 %v1120, %v1208
      %1210 = vmatmul.bf16.gmra.mxu0 %v606
      %v1211 = vpop.f32.mrf.mxu0
      %v1212 = vadd.f32 %v1123, %v1211
      %v1213 = vpop.f32.mrf.mxu0
      %v1214 = vadd.f32 %v1125, %v1213
      %1215 = vmatmul.bf16.gmra.mxu0 %v610
      %v1216 = vpop.f32.mrf.mxu0
      %v1217 = vadd.f32 %v1128, %v1216
      %v1218 = vpop.f32.mrf.mxu0
      %v1219 = vadd.f32 %v1130, %v1218
      %1220 = vmatmul.bf16.gmra.mxu0 %v614
      %v1221 = vpop.f32.mrf.mxu0
      %v1222 = vadd.f32 %v1133, %v1221
      %v1223 = vpop.f32.mrf.mxu0
      %v1224 = vadd.f32 %v1135, %v1223
      %1225 = vmatmul.bf16.gmra.mxu0 %v618
      %v1226 = vpop.f32.mrf.mxu0
      %v1227 = vadd.f32 %v1138, %v1226
      %v1228 = vpop.f32.mrf.mxu0
      %v1229 = vadd.f32 %v1140, %v1228
      %1230 = vdwg.mxu0
      %v1231 = vmax.f32 %v1152, 0.0
      %v1232 = vmax.f32 %v1154, 0.0
      %v1233 = vmax.f32 %v1157, 0.0
      %v1234 = vmax.f32 %v1159, 0.0
      %v1235 = vmax.f32 %v1162, 0.0
      %v1236 = vmax.f32 %v1164, 0.0
      %v1237 = vmax.f32 %v1167, 0.0
      %v1238 = vmax.f32 %v1169, 0.0
      %v1239 = vmax.f32 %v1172, 0.0
      %v1240 = vmax.f32 %v1174, 0.0
      %v1241 = vmax.f32 %v1177, 0.0
      %v1242 = vmax.f32 %v1179, 0.0
      %v1243 = vmax.f32 %v1182, 0.0
      %v1244 = vmax.f32 %v1184, 0.0
      %v1245 = vmax.f32 %v1187, 0.0
      %v1246 = vmax.f32 %v1189, 0.0
      %v1247 = vmax.f32 %v1192, 0.0
      %v1248 = vmax.f32 %v1194, 0.0
      %v1249 = vmax.f32 %v1197, 0.0
      %v1250 = vmax.f32 %v1199, 0.0
      %v1251 = vmax.f32 %v1202, 0.0
      %v1252 = vmax.f32 %v1204, 0.0
      %v1253 = vmax.f32 %v1207, 0.0
      %v1254 = vmax.f32 %v1209, 0.0
      %v1255 = vmax.f32 %v1212, 0.0
      %v1256 = vmax.f32 %v1214, 0.0
      %v1257 = vmax.f32 %v1217, 0.0
      %v1258 = vmax.f32 %v1219, 0.0
      %v1259 = vmax.f32 %v1222, 0.0
      %v1260 = vmax.f32 %v1224, 0.0
      %v1261 = vmax.f32 %v1227, 0.0
      %v1262 = vmax.f32 %v1229, 0.0
      %v1263 = vpack.c.bf16 %v1232, %v1231
      %v1264 = vpack.c.bf16 %v1234, %v1233
      %v1265 = vpack.c.bf16 %v1236, %v1235
      %v1266 = vpack.c.bf16 %v1238, %v1237
      %v1267 = vpack.c.bf16 %v1240, %v1239
      %v1268 = vpack.c.bf16 %v1242, %v1241
      %v1269 = vpack.c.bf16 %v1244, %v1243
      %v1270 = vpack.c.bf16 %v1246, %v1245
      %v1271 = vpack.c.bf16 %v1248, %v1247
      %v1272 = vpack.c.bf16 %v1250, %v1249
      %v1273 = vpack.c.bf16 %v1252, %v1251
      %v1274 = vpack.c.bf16 %v1254, %v1253
      %v1275 = vpack.c.bf16 %v1256, %v1255
      %v1276 = vpack.c.bf16 %v1258, %v1257
      %v1277 = vpack.c.bf16 %v1260, %v1259
      %v1278 = vpack.c.bf16 %v1262, %v1261
      %v1279 = vld [vmem:[%s3] sm:$0xf]
      %v1280 = vld [vmem:[%s3 + $0x4] sm:$0xf]
      %v1281 = vld [vmem:[%s3 + $0x8] sm:$0xf]
      %v1282 = vld [vmem:[%s3 + $0xc] sm:$0xf]
      %v1283 = vld [vmem:[%s3 + $0x10] sm:$0xf]
      %v1284 = vld [vmem:[%s3 + $0x14] sm:$0xf]
      %v1285 = vld [vmem:[%s3 + $0x18] sm:$0xf]
      %v1286 = vld [vmem:[%s3 + $0x1c] sm:$0xf]
      %v1287 = vld [vmem:[%s3 + $0x20] sm:$0xf]
      %v1288 = vld [vmem:[%s3 + $0x24] sm:$0xf]
      %v1289 = vld [vmem:[%s3 + $0x28] sm:$0xf]
      %v1290 = vld [vmem:[%s3 + $0x2c] sm:$0xf]
      %v1291 = vld [vmem:[%s3 + $0x30] sm:$0xf]
      %v1292 = vld [vmem:[%s3 + $0x34] sm:$0xf]
      %v1293 = vld [vmem:[%s3 + $0x38] sm:$0xf]
      %v1294 = vld [vmem:[%s3 + $0x3c] sm:$0xf]
      %v1295 = vld [vmem:[%s4] sm:$0x1]
      %v1297 = vperm.slane %v1295, 0
      %v1315 = vunpack.c.l.b16 %v1279
      %v1316 = vunpack.c.l.b16 %v1280
      %v1317 = vunpack.c.l.b16 %v1281
      %v1318 = vunpack.c.l.b16 %v1282
      %v1319 = vunpack.c.l.b16 %v1283
      %v1320 = vunpack.c.l.b16 %v1284
      %v1321 = vunpack.c.l.b16 %v1285
      %v1322 = vunpack.c.l.b16 %v1286
      %v1323 = vunpack.c.l.b16 %v1287
      %v1324 = vunpack.c.l.b16 %v1288
      %v1325 = vunpack.c.l.b16 %v1289
      %v1326 = vunpack.c.l.b16 %v1290
      %v1327 = vunpack.c.l.b16 %v1291
      %v1328 = vunpack.c.l.b16 %v1292
      %v1329 = vunpack.c.l.b16 %v1293
      %v1330 = vunpack.c.l.b16 %v1294
      %v1331 = vpack.c.b16 %v1316, %v1315
      %v1332 = vpack.c.b16 %v1318, %v1317
      %v1333 = vpack.c.b16 %v1320, %v1319
      %v1334 = vpack.c.b16 %v1322, %v1321
      %v1335 = vpack.c.b16 %v1324, %v1323
      %v1336 = vpack.c.b16 %v1326, %v1325
      %v1337 = vpack.c.b16 %v1328, %v1327
      %v1338 = vpack.c.b16 %v1330, %v1329
      %1347 = vmatpush.bf16.msra.mxu0 %v1338
      %1348 = vmatpush.bf16.msra.mxu0 %v1337
      %1349 = vmatpush.bf16.msra.mxu0 %v1336
      %1350 = vmatpush.bf16.msra.mxu0 %v1335
      %1351 = vmatpush.bf16.msra.mxu0 %v1334
      %1352 = vmatpush.bf16.msra.mxu0 %v1333
      %1353 = vmatpush.bf16.msra.mxu0 %v1332
      %1354 = vmatpush.bf16.msra.mxu0 %v1331
      %1355 = vmatmul.bf16.gmra.mxu0 %v1263
      %v1356 = vpop.f32.mrf.mxu0
      %v1357 = vadd.f32 %v1297, %v1356
      %v1358 = vpop.f32.mrf.mxu0
      %v1359 = vadd.f32 %v1297, %v1358
      %1360 = vmatmul.bf16.gmra.mxu0 %v1264
      %v1361 = vpop.f32.mrf.mxu0
      %v1362 = vadd.f32 %v1297, %v1361
      %v1363 = vpop.f32.mrf.mxu0
      %v1364 = vadd.f32 %v1297, %v1363
      %1365 = vmatmul.bf16.gmra.mxu0 %v1265
      %v1366 = vpop.f32.mrf.mxu0
      %v1367 = vadd.f32 %v1297, %v1366
      %v1368 = vpop.f32.mrf.mxu0
      %v1369 = vadd.f32 %v1297, %v1368
      %1370 = vmatmul.bf16.gmra.mxu0 %v1266
      %v1371 = vpop.f32.mrf.mxu0
      %v1372 = vadd.f32 %v1297, %v1371
      %v1373 = vpop.f32.mrf.mxu0
      %v1374 = vadd.f32 %v1297, %v1373
      %1375 = vmatmul.bf16.gmra.mxu0 %v1267
      %v1376 = vpop.f32.mrf.mxu0
      %v1377 = vadd.f32 %v1297, %v1376
      %v1378 = vpop.f32.mrf.mxu0
      %v1379 = vadd.f32 %v1297, %v1378
      %1380 = vmatmul.bf16.gmra.mxu0 %v1268
      %v1381 = vpop.f32.mrf.mxu0
      %v1382 = vadd.f32 %v1297, %v1381
      %v1383 = vpop.f32.mrf.mxu0
      %v1384 = vadd.f32 %v1297, %v1383
      %1385 = vmatmul.bf16.gmra.mxu0 %v1269
      %v1386 = vpop.f32.mrf.mxu0
      %v1387 = vadd.f32 %v1297, %v1386
      %v1388 = vpop.f32.mrf.mxu0
      %v1389 = vadd.f32 %v1297, %v1388
      %1390 = vmatmul.bf16.gmra.mxu0 %v1270
      %v1391 = vpop.f32.mrf.mxu0
      %v1392 = vadd.f32 %v1297, %v1391
      %v1393 = vpop.f32.mrf.mxu0
      %v1394 = vadd.f32 %v1297, %v1393
      %1395 = vmatmul.bf16.gmra.mxu0 %v1271
      %v1396 = vpop.f32.mrf.mxu0
      %v1397 = vadd.f32 %v1297, %v1396
      %v1398 = vpop.f32.mrf.mxu0
      %v1399 = vadd.f32 %v1297, %v1398
      %1400 = vmatmul.bf16.gmra.mxu0 %v1272
      %v1401 = vpop.f32.mrf.mxu0
      %v1402 = vadd.f32 %v1297, %v1401
      %v1403 = vpop.f32.mrf.mxu0
      %v1404 = vadd.f32 %v1297, %v1403
      %1405 = vmatmul.bf16.gmra.mxu0 %v1273
      %v1406 = vpop.f32.mrf.mxu0
      %v1407 = vadd.f32 %v1297, %v1406
      %v1408 = vpop.f32.mrf.mxu0
      %v1409 = vadd.f32 %v1297, %v1408
      %1410 = vmatmul.bf16.gmra.mxu0 %v1274
      %v1411 = vpop.f32.mrf.mxu0
      %v1412 = vadd.f32 %v1297, %v1411
      %v1413 = vpop.f32.mrf.mxu0
      %v1414 = vadd.f32 %v1297, %v1413
      %1415 = vmatmul.bf16.gmra.mxu0 %v1275
      %v1416 = vpop.f32.mrf.mxu0
      %v1417 = vadd.f32 %v1297, %v1416
      %v1418 = vpop.f32.mrf.mxu0
      %v1419 = vadd.f32 %v1297, %v1418
      %1420 = vmatmul.bf16.gmra.mxu0 %v1276
      %v1421 = vpop.f32.mrf.mxu0
      %v1422 = vadd.f32 %v1297, %v1421
      %v1423 = vpop.f32.mrf.mxu0
      %v1424 = vadd.f32 %v1297, %v1423
      %1425 = vmatmul.bf16.gmra.mxu0 %v1277
      %v1426 = vpop.f32.mrf.mxu0
      %v1427 = vadd.f32 %v1297, %v1426
      %v1428 = vpop.f32.mrf.mxu0
      %v1429 = vadd.f32 %v1297, %v1428
      %1430 = vmatmul.bf16.gmra.mxu0 %v1278
      %v1431 = vpop.f32.mrf.mxu0
      %v1432 = vadd.f32 %v1297, %v1431
      %v1433 = vpop.f32.mrf.mxu0
      %v1434 = vadd.f32 %v1297, %v1433
      %1435 = vdwg.mxu0
      %1436 = vmax.xlane.f32.xlu0 %v1357
      %v1437 = vpop.xlane.xlu0 %1436
      %1438 = vmax.xlane.f32.xlu0 %v1359
      %v1439 = vpop.xlane.xlu0 %1438
      %1440 = vmax.xlane.f32.xlu0 %v1362
      %v1441 = vpop.xlane.xlu0 %1440
      %1442 = vmax.xlane.f32.xlu0 %v1364
      %v1443 = vpop.xlane.xlu0 %1442
      %1444 = vmax.xlane.f32.xlu0 %v1367
      %v1445 = vpop.xlane.xlu0 %1444
      %1446 = vmax.xlane.f32.xlu0 %v1369
      %v1447 = vpop.xlane.xlu0 %1446
      %1448 = vmax.xlane.f32.xlu0 %v1372
      %v1449 = vpop.xlane.xlu0 %1448
      %1450 = vmax.xlane.f32.xlu0 %v1374
      %v1451 = vpop.xlane.xlu0 %1450
      %1452 = vmax.xlane.f32.xlu0 %v1377
      %v1453 = vpop.xlane.xlu0 %1452
      %1454 = vmax.xlane.f32.xlu0 %v1379
      %v1455 = vpop.xlane.xlu0 %1454
      %1456 = vmax.xlane.f32.xlu0 %v1382
      %v1457 = vpop.xlane.xlu0 %1456
      %1458 = vmax.xlane.f32.xlu0 %v1384
      %v1459 = vpop.xlane.xlu0 %1458
      %1460 = vmax.xlane.f32.xlu0 %v1387
      %v1461 = vpop.xlane.xlu0 %1460
      %1462 = vmax.xlane.f32.xlu0 %v1389
      %v1463 = vpop.xlane.xlu0 %1462
      %1464 = vmax.xlane.f32.xlu0 %v1392
      %v1465 = vpop.xlane.xlu0 %1464
      %1466 = vmax.xlane.f32.xlu0 %v1394
      %v1467 = vpop.xlane.xlu0 %1466
      %1468 = vmax.xlane.f32.xlu0 %v1397
      %v1469 = vpop.xlane.xlu0 %1468
      %1470 = vmax.xlane.f32.xlu0 %v1399
      %v1471 = vpop.xlane.xlu0 %1470
      %1472 = vmax.xlane.f32.xlu0 %v1402
      %v1473 = vpop.xlane.xlu0 %1472
      %1474 = vmax.xlane.f32.xlu0 %v1404
      %v1475 = vpop.xlane.xlu0 %1474
      %1476 = vmax.xlane.f32.xlu0 %v1407
      %v1477 = vpop.xlane.xlu0 %1476
      %1478 = vmax.xlane.f32.xlu0 %v1409
      %v1479 = vpop.xlane.xlu0 %1478
      %1480 = vmax.xlane.f32.xlu0 %v1412
      %v1481 = vpop.xlane.xlu0 %1480
      %1482 = vmax.xlane.f32.xlu0 %v1414
      %v1483 = vpop.xlane.xlu0 %1482
      %1484 = vmax.xlane.f32.xlu0 %v1417
      %v1485 = vpop.xlane.xlu0 %1484
      %1486 = vmax.xlane.f32.xlu0 %v1419
      %v1487 = vpop.xlane.xlu0 %1486
      %1488 = vmax.xlane.f32.xlu0 %v1422
      %v1489 = vpop.xlane.xlu0 %1488
      %1490 = vmax.xlane.f32.xlu0 %v1424
      %v1491 = vpop.xlane.xlu0 %1490
      %1492 = vmax.xlane.f32.xlu0 %v1427
      %v1493 = vpop.xlane.xlu0 %1492
      %1494 = vmax.xlane.f32.xlu0 %v1429
      %v1495 = vpop.xlane.xlu0 %1494
      %1496 = vmax.xlane.f32.xlu0 %v1432
      %v1497 = vpop.xlane.xlu0 %1496
      %1498 = vmax.xlane.f32.xlu0 %v1434
      %v1499 = vpop.xlane.xlu0 %1498
      %v1500 = vsub.f32 %v1357, %v1437
      %v1501 = vsub.f32 %v1359, %v1439
      %v1502 = vsub.f32 %v1362, %v1441
      %v1503 = vsub.f32 %v1364, %v1443
      %v1504 = vsub.f32 %v1367, %v1445
      %v1505 = vsub.f32 %v1369, %v1447
      %v1506 = vsub.f32 %v1372, %v1449
      %v1507 = vsub.f32 %v1374, %v1451
      %v1508 = vsub.f32 %v1377, %v1453
      %v1509 = vsub.f32 %v1379, %v1455
      %v1510 = vsub.f32 %v1382, %v1457
      %v1511 = vsub.f32 %v1384, %v1459
      %v1512 = vsub.f32 %v1387, %v1461
      %v1513 = vsub.f32 %v1389, %v1463
      %v1514 = vsub.f32 %v1392, %v1465
      %v1515 = vsub.f32 %v1394, %v1467
      %v1516 = vsub.f32 %v1397, %v1469
      %v1517 = vsub.f32 %v1399, %v1471
      %v1518 = vsub.f32 %v1402, %v1473
      %v1519 = vsub.f32 %v1404, %v1475
      %v1520 = vsub.f32 %v1407, %v1477
      %v1521 = vsub.f32 %v1409, %v1479
      %v1522 = vsub.f32 %v1412, %v1481
      %v1523 = vsub.f32 %v1414, %v1483
      %v1524 = vsub.f32 %v1417, %v1485
      %v1525 = vsub.f32 %v1419, %v1487
      %v1526 = vsub.f32 %v1422, %v1489
      %v1527 = vsub.f32 %v1424, %v1491
      %v1528 = vsub.f32 %v1427, %v1493
      %v1529 = vsub.f32 %v1429, %v1495
      %v1530 = vsub.f32 %v1432, %v1497
      %v1531 = vsub.f32 %v1434, %v1499
      %v1532 = vmul.f32 %v1500, 1.442695
      %v1533 = vpow.pop %v1532
      %v1534 = vmul.f32 %v1501, 1.442695
      %v1535 = vpow.pop %v1534
      %v1536 = vmul.f32 %v1502, 1.442695
      %v1537 = vpow.pop %v1536
      %v1538 = vmul.f32 %v1503, 1.442695
      %v1539 = vpow.pop %v1538
      %v1540 = vmul.f32 %v1504, 1.442695
      %v1541 = vpow.pop %v1540
      %v1542 = vmul.f32 %v1505, 1.442695
      %v1543 = vpow.pop %v1542
      %v1544 = vmul.f32 %v1506, 1.442695
      %v1545 = vpow.pop %v1544
      %v1546 = vmul.f32 %v1507, 1.442695
      %v1547 = vpow.pop %v1546
      %v1548 = vmul.f32 %v1508, 1.442695
      %v1549 = vpow.pop %v1548
      %v1550 = vmul.f32 %v1509, 1.442695
      %v1551 = vpow.pop %v1550
      %v1552 = vmul.f32 %v1510, 1.442695
      %v1553 = vpow.pop %v1552
      %v1554 = vmul.f32 %v1511, 1.442695
      %v1555 = vpow.pop %v1554
      %v1556 = vmul.f32 %v1512, 1.442695
      %v1557 = vpow.pop %v1556
      %v1558 = vmul.f32 %v1513, 1.442695
      %v1559 = vpow.pop %v1558
      %v1560 = vmul.f32 %v1514, 1.442695
      %v1561 = vpow.pop %v1560
      %v1562 = vmul.f32 %v1515, 1.442695
      %v1563 = vpow.pop %v1562
      %v1564 = vmul.f32 %v1516, 1.442695
      %v1565 = vpow.pop %v1564
      %v1566 = vmul.f32 %v1517, 1.442695
      %v1567 = vpow.pop %v1566
      %v1568 = vmul.f32 %v1518, 1.442695
      %v1569 = vpow.pop %v1568
      %v1570 = vmul.f32 %v1519, 1.442695
      %v1571 = vpow.pop %v1570
      %v1572 = vmul.f32 %v1520, 1.442695
      %v1573 = vpow.pop %v1572
      %v1574 = vmul.f32 %v1521, 1.442695
      %v1575 = vpow.pop %v1574
      %v1576 = vmul.f32 %v1522, 1.442695
      %v1577 = vpow.pop %v1576
      %v1578 = vmul.f32 %v1523, 1.442695
      %v1579 = vpow.pop %v1578
      %v1580 = vmul.f32 %v1524, 1.442695
      %v1581 = vpow.pop %v1580
      %v1582 = vmul.f32 %v1525, 1.442695
      %v1583 = vpow.pop %v1582
      %v1584 = vmul.f32 %v1526, 1.442695
      %v1585 = vpow.pop %v1584
      %v1586 = vmul.f32 %v1527, 1.442695
      %v1587 = vpow.pop %v1586
      %v1588 = vmul.f32 %v1528, 1.442695
      %v1589 = vpow.pop %v1588
      %v1590 = vmul.f32 %v1529, 1.442695
      %v1591 = vpow.pop %v1590
      %v1592 = vmul.f32 %v1530, 1.442695
      %v1593 = vpow.pop %v1592
      %v1594 = vmul.f32 %v1531, 1.442695
      %v1595 = vpow.pop %v1594
      %1596 = vadd.xlane.f32.xlu0 %v1533
      %v1597 = vpop.xlane.xlu0 %1596
      %1598 = vadd.xlane.f32.xlu0 %v1535
      %v1599 = vpop.xlane.xlu0 %1598
      %1600 = vadd.xlane.f32.xlu0 %v1537
      %v1601 = vpop.xlane.xlu0 %1600
      %1602 = vadd.xlane.f32.xlu0 %v1539
      %v1603 = vpop.xlane.xlu0 %1602
      %1604 = vadd.xlane.f32.xlu0 %v1541
      %v1605 = vpop.xlane.xlu0 %1604
      %1606 = vadd.xlane.f32.xlu0 %v1543
      %v1607 = vpop.xlane.xlu0 %1606
      %1608 = vadd.xlane.f32.xlu0 %v1545
      %v1609 = vpop.xlane.xlu0 %1608
      %1610 = vadd.xlane.f32.xlu0 %v1547
      %v1611 = vpop.xlane.xlu0 %1610
      %1612 = vadd.xlane.f32.xlu0 %v1549
      %v1613 = vpop.xlane.xlu0 %1612
      %1614 = vadd.xlane.f32.xlu0 %v1551
      %v1615 = vpop.xlane.xlu0 %1614
      %1616 = vadd.xlane.f32.xlu0 %v1553
      %v1617 = vpop.xlane.xlu0 %1616
      %1618 = vadd.xlane.f32.xlu0 %v1555
      %v1619 = vpop.xlane.xlu0 %1618
      %1620 = vadd.xlane.f32.xlu0 %v1557
      %v1621 = vpop.xlane.xlu0 %1620
      %1622 = vadd.xlane.f32.xlu0 %v1559
      %v1623 = vpop.xlane.xlu0 %1622
      %1624 = vadd.xlane.f32.xlu0 %v1561
      %v1625 = vpop.xlane.xlu0 %1624
      %1626 = vadd.xlane.f32.xlu0 %v1563
      %v1627 = vpop.xlane.xlu0 %1626
      %1628 = vadd.xlane.f32.xlu0 %v1565
      %v1629 = vpop.xlane.xlu0 %1628
      %1630 = vadd.xlane.f32.xlu0 %v1567
      %v1631 = vpop.xlane.xlu0 %1630
      %1632 = vadd.xlane.f32.xlu0 %v1569
      %v1633 = vpop.xlane.xlu0 %1632
      %1634 = vadd.xlane.f32.xlu0 %v1571
      %v1635 = vpop.xlane.xlu0 %1634
      %1636 = vadd.xlane.f32.xlu0 %v1573
      %v1637 = vpop.xlane.xlu0 %1636
      %1638 = vadd.xlane.f32.xlu0 %v1575
      %v1639 = vpop.xlane.xlu0 %1638
      %1640 = vadd.xlane.f32.xlu0 %v1577
      %v1641 = vpop.xlane.xlu0 %1640
      %1642 = vadd.xlane.f32.xlu0 %v1579
      %v1643 = vpop.xlane.xlu0 %1642
      %1644 = vadd.xlane.f32.xlu0 %v1581
      %v1645 = vpop.xlane.xlu0 %1644
      %1646 = vadd.xlane.f32.xlu0 %v1583
      %v1647 = vpop.xlane.xlu0 %1646
      %1648 = vadd.xlane.f32.xlu0 %v1585
      %v1649 = vpop.xlane.xlu0 %1648
      %1650 = vadd.xlane.f32.xlu0 %v1587
      %v1651 = vpop.xlane.xlu0 %1650
      %1652 = vadd.xlane.f32.xlu0 %v1589
      %v1653 = vpop.xlane.xlu0 %1652
      %1654 = vadd.xlane.f32.xlu0 %v1591
      %v1655 = vpop.xlane.xlu0 %1654
      %1656 = vadd.xlane.f32.xlu0 %v1593
      %v1657 = vpop.xlane.xlu0 %1656
      %1658 = vadd.xlane.f32.xlu0 %v1595
      %v1659 = vpop.xlane.xlu0 %1658
      %v1660 = vlog2.pop %v1597
      %v1661 = vmul.f32 %v1660, 0.6931472
      %v1662 = vlog2.pop %v1599
      %v1663 = vmul.f32 %v1662, 0.6931472
      %v1664 = vlog2.pop %v1601
      %v1665 = vmul.f32 %v1664, 0.6931472
      %v1666 = vlog2.pop %v1603
      %v1667 = vmul.f32 %v1666, 0.6931472
      %v1668 = vlog2.pop %v1605
      %v1669 = vmul.f32 %v1668, 0.6931472
      %v1670 = vlog2.pop %v1607
      %v1671 = vmul.f32 %v1670, 0.6931472
      %v1672 = vlog2.pop %v1609
      %v1673 = vmul.f32 %v1672, 0.6931472
      %v1674 = vlog2.pop %v1611
      %v1675 = vmul.f32 %v1674, 0.6931472
      %v1676 = vlog2.pop %v1613
      %v1677 = vmul.f32 %v1676, 0.6931472
      %v1678 = vlog2.pop %v1615
      %v1679 = vmul.f32 %v1678, 0.6931472
      %v1680 = vlog2.pop %v1617
      %v1681 = vmul.f32 %v1680, 0.6931472
      %v1682 = vlog2.pop %v1619
      %v1683 = vmul.f32 %v1682, 0.6931472
      %v1684 = vlog2.pop %v1621
      %v1685 = vmul.f32 %v1684, 0.6931472
      %v1686 = vlog2.pop %v1623
      %v1687 = vmul.f32 %v1686, 0.6931472
      %v1688 = vlog2.pop %v1625
      %v1689 = vmul.f32 %v1688, 0.6931472
      %v1690 = vlog2.pop %v1627
      %v1691 = vmul.f32 %v1690, 0.6931472
      %v1692 = vlog2.pop %v1629
      %v1693 = vmul.f32 %v1692, 0.6931472
      %v1694 = vlog2.pop %v1631
      %v1695 = vmul.f32 %v1694, 0.6931472
      %v1696 = vlog2.pop %v1633
      %v1697 = vmul.f32 %v1696, 0.6931472
      %v1698 = vlog2.pop %v1635
      %v1699 = vmul.f32 %v1698, 0.6931472
      %v1700 = vlog2.pop %v1637
      %v1701 = vmul.f32 %v1700, 0.6931472
      %v1702 = vlog2.pop %v1639
      %v1703 = vmul.f32 %v1702, 0.6931472
      %v1704 = vlog2.pop %v1641
      %v1705 = vmul.f32 %v1704, 0.6931472
      %v1706 = vlog2.pop %v1643
      %v1707 = vmul.f32 %v1706, 0.6931472
      %v1708 = vlog2.pop %v1645
      %v1709 = vmul.f32 %v1708, 0.6931472
      %v1710 = vlog2.pop %v1647
      %v1711 = vmul.f32 %v1710, 0.6931472
      %v1712 = vlog2.pop %v1649
      %v1713 = vmul.f32 %v1712, 0.6931472
      %v1714 = vlog2.pop %v1651
      %v1715 = vmul.f32 %v1714, 0.6931472
      %v1716 = vlog2.pop %v1653
      %v1717 = vmul.f32 %v1716, 0.6931472
      %v1718 = vlog2.pop %v1655
      %v1719 = vmul.f32 %v1718, 0.6931472
      %v1720 = vlog2.pop %v1657
      %v1721 = vmul.f32 %v1720, 0.6931472
      %v1722 = vlog2.pop %v1659
      %v1723 = vmul.f32 %v1722, 0.6931472
      %v1724 = vsub.f32 %v1500, %v1661
      %v1725 = vsub.f32 %v1501, %v1663
      %v1726 = vsub.f32 %v1502, %v1665
      %v1727 = vsub.f32 %v1503, %v1667
      %v1728 = vsub.f32 %v1504, %v1669
      %v1729 = vsub.f32 %v1505, %v1671
      %v1730 = vsub.f32 %v1506, %v1673
      %v1731 = vsub.f32 %v1507, %v1675
      %v1732 = vsub.f32 %v1508, %v1677
      %v1733 = vsub.f32 %v1509, %v1679
      %v1734 = vsub.f32 %v1510, %v1681
      %v1735 = vsub.f32 %v1511, %v1683
      %v1736 = vsub.f32 %v1512, %v1685
      %v1737 = vsub.f32 %v1513, %v1687
      %v1738 = vsub.f32 %v1514, %v1689
      %v1739 = vsub.f32 %v1515, %v1691
      %v1740 = vsub.f32 %v1516, %v1693
      %v1741 = vsub.f32 %v1517, %v1695
      %v1742 = vsub.f32 %v1518, %v1697
      %v1743 = vsub.f32 %v1519, %v1699
      %v1744 = vsub.f32 %v1520, %v1701
      %v1745 = vsub.f32 %v1521, %v1703
      %v1746 = vsub.f32 %v1522, %v1705
      %v1747 = vsub.f32 %v1523, %v1707
      %v1748 = vsub.f32 %v1524, %v1709
      %v1749 = vsub.f32 %v1525, %v1711
      %v1750 = vsub.f32 %v1526, %v1713
      %v1751 = vsub.f32 %v1527, %v1715
      %v1752 = vsub.f32 %v1528, %v1717
      %v1753 = vsub.f32 %v1529, %v1719
      %v1754 = vsub.f32 %v1530, %v1721
      %v1755 = vsub.f32 %v1531, %v1723
      %1756 = vst [vmem:[%s229] sm:$0xff] %v1724
      %1757 = vst [vmem:[%s229 + $0x8] sm:$0xff] %v1725
      %1758 = vst [vmem:[%s229 + $0x10] sm:$0xff] %v1726
      %1759 = vst [vmem:[%s229 + $0x18] sm:$0xff] %v1727
      %1760 = vst [vmem:[%s229 + $0x20] sm:$0xff] %v1728
      %1761 = vst [vmem:[%s229 + $0x28] sm:$0xff] %v1729
      %1762 = vst [vmem:[%s229 + $0x30] sm:$0xff] %v1730
      %1763 = vst [vmem:[%s229 + $0x38] sm:$0xff] %v1731
      %1764 = vst [vmem:[%s229 + $0x40] sm:$0xff] %v1732
      %1765 = vst [vmem:[%s229 + $0x48] sm:$0xff] %v1733
      %1766 = vst [vmem:[%s229 + $0x50] sm:$0xff] %v1734
      %1767 = vst [vmem:[%s229 + $0x58] sm:$0xff] %v1735
      %1768 = vst [vmem:[%s229 + $0x60] sm:$0xff] %v1736
      %1769 = vst [vmem:[%s229 + $0x68] sm:$0xff] %v1737
      %1770 = vst [vmem:[%s229 + $0x70] sm:$0xff] %v1738
      %1771 = vst [vmem:[%s229 + $0x78] sm:$0xff] %v1739
      %1772 = vst [vmem:[%s229 + $0x80] sm:$0xff] %v1740
      %1773 = vst [vmem:[%s229 + $0x88] sm:$0xff] %v1741
      %1774 = vst [vmem:[%s229 + $0x90] sm:$0xff] %v1742
      %1775 = vst [vmem:[%s229 + $0x98] sm:$0xff] %v1743
      %1776 = vst [vmem:[%s229 + $0xa0] sm:$0xff] %v1744
      %1777 = vst [vmem:[%s229 + $0xa8] sm:$0xff] %v1745
      %1778 = vst [vmem:[%s229 + $0xb0] sm:$0xff] %v1746
      %1779 = vst [vmem:[%s229 + $0xb8] sm:$0xff] %v1747
      %1780 = vst [vmem:[%s229 + $0xc0] sm:$0xff] %v1748
      %1781 = vst [vmem:[%s229 + $0xc8] sm:$0xff] %v1749
      %1782 = vst [vmem:[%s229 + $0xd0] sm:$0xff] %v1750
      %1783 = vst [vmem:[%s229 + $0xd8] sm:$0xff] %v1751
      %1784 = vst [vmem:[%s229 + $0xe0] sm:$0xff] %v1752
      %1785 = vst [vmem:[%s229 + $0xe8] sm:$0xff] %v1753
      %1786 = vst [vmem:[%s229 + $0xf0] sm:$0xff] %v1754
      %1787 = vst [vmem:[%s229 + $0xf8] sm:$0xff] %v1755
      %s1788 = smul.u32 32, %s16
      %p1789 = scmp.lt.s32.totalorder %s1788, 63
      %s1790 = scalar_select %p1789, %s1788, 63
      %s1791 = smul.addr %s1790, 8
      %s1792 = scalar_lea.vmem %s5, %s1791
      // Predicated region
      $region41: #{supervised_graphsage.5} parent=39 // pred_check
        %p1793 = pneg %p144
      $region42: #{supervised_graphsage.5} parent=39 // pred_check_branch
        %1795 = sbr.rel (%p1793) target = $region44
      $region43: #{supervised_graphsage.5} parent=39 // pred_region
        %s1796 = smul.u32 32, %s16
      $region44: #{supervised_graphsage.5} parent=39 // pred_fallthru
        _
    $region40: #{supervised_graphsage.5} parent=5 // pred_fallthru
      _
    %p1797 = scmp.le.s32.totalorder 2, %s11
    // Predicated region
    $region45: #{supervised_graphsage.5} parent=5 // pred_check
      %p1798 = pneg %p1797
    $region46: #{supervised_graphsage.5} parent=5 // pred_check_branch
      %1800 = sbr.rel (%p1798) target = $region48
    $region47: #{supervised_graphsage.5} parent=5 // pred_region
      %s1801 = ssub.s32 %s11, 2
      // Predicated region
      $region49: #{supervised_graphsage.5} parent=47 // pred_check
        %p1802 = pneg %p150
      $region50: #{supervised_graphsage.5} parent=47 // pred_check_branch
        %1804 = sbr.rel (%p1802) target = $region52
      $region51: #{supervised_graphsage.5} parent=47 // pred_region
        %s1805 = smul.u32 32, %s17
        %p1806 = scmp.lt.s32.totalorder %s1805, 63
        %s1807 = scalar_select %p1806, %s1805, 63
        %s1808 = smul.addr %s1807, 8
        %s1809 = scalar_lea.vmem %s5, %s1808
      $region52: #{supervised_graphsage.5} parent=47 // pred_fallthru
        _
    $region48: #{supervised_graphsage.5} parent=5 // pred_fallthru
      _
  $region6: #{supervised_graphsage.5} parent=0 // loop_footer
    %s15 = sadd.s32 1, %s11
  $region7: #{supervised_graphsage.5} parent=0 // loop_footer_branch
    %10 = sbr.rel target = $region3
  $region8: #{supervised_graphsage.5} parent=0 // loop_exit
    _

</llo_original>
